<compile_context>
chip_gen: v7x
topology: tpu7x:2x2x1
jax: 0.10.0
libtpu: 0.0.40
codegen_flags: <defaults>
</compile_context>

<pallas_src>
import jax
import jax.numpy as jnp
from jax.experimental import pallas as pl
from jax.experimental.pallas import tpu as pltpu


# ----------------------------- Pallas kernels ------------------------------ #

def _conv_pool_kernel(p_ref, w_ref, b_ref, o_ref):
    """Fused conv (as im2col matmul) + bias + ReLU + 2x2/stride-2 max-pool.

    p_ref: (4, bm, K) bf16 -- corner-blocked im2col patches (one patch matrix
           per position inside the 2x2 pool window); rows = pooled pixels.
    w_ref: (K, N) bf16    b_ref: (1, N) f32    o_ref: (bm, N) bf16
    """
    m = jnp.dot(p_ref[0], w_ref[...], preferred_element_type=jnp.float32)
    for c in range(1, 4):
        m = jnp.maximum(
            m, jnp.dot(p_ref[c], w_ref[...], preferred_element_type=jnp.float32))
    # max_c(relu(dot_c + b)) == relu(max_c(dot_c) + b): bias/ReLU once, in f32.
    o_ref[...] = jnp.maximum(m + b_ref[...], 0.0).astype(o_ref.dtype)


def _conv_pool_fc_kernel(p_ref, w2_ref, b2_ref, fc1w_ref, fc1b_ref,
                         fc2w_ref, fc2b_ref, fc3w_ref, fc3b_ref,
                         o_ref, a2_ref):
    """conv2 + bias + ReLU + pool + fc1 + ReLU + fc2 + ReLU + fc3, fully fused.

    p_ref: (4, P*B, K2) bf16 corner-blocked patches, rows ordered (p, b) with
           p = ph*PW + pw so fc1 can consume contiguous static row slices.
    fc1w_ref: (P*C2, 120) bf16, rows pre-permuted to (p, c) order (the PyTorch
           (c,h,w) flatten is folded into this weight permutation).
    o_ref: (B, 10) f32.   a2_ref: (P*B, C2) bf16 VMEM scratch.
    """
    # ---- conv2 (im2col matmul) + 2x2 max-pool + bias + ReLU ----
    m = jnp.dot(p_ref[0], w2_ref[...], preferred_element_type=jnp.float32)
    for c in range(1, 4):
        m = jnp.maximum(
            m, jnp.dot(p_ref[c], w2_ref[...], preferred_element_type=jnp.float32))
    a2_ref[...] = jnp.maximum(m + b2_ref[...], 0.0).astype(a2_ref.dtype)

    # ---- fc1: accumulate over the P=25 spatial positions (flatten folded in) ----
    B = o_ref.shape[0]
    C2 = a2_ref.shape[1]
    P = a2_ref.shape[0] // B
    acc = jnp.zeros((B, fc1w_ref.shape[1]), jnp.float32)
    for p in range(P):
        lhs = a2_ref[p * B:(p + 1) * B, :]            # (B, C2) bf16
        rhs = fc1w_ref[p * C2:(p + 1) * C2, :]        # (C2, 120) bf16
        acc = acc + jnp.dot(lhs, rhs, preferred_element_type=jnp.float32)
    a3 = jnp.maximum(acc + fc1b_ref[...], 0.0)        # (B, 120) f32

    # ---- fc2 + ReLU ----
    a4 = jnp.dot(a3.astype(jnp.bfloat16), fc2w_ref[...],
                 preferred_element_type=jnp.float32) + fc2b_ref[...]
    a4 = jnp.maximum(a4, 0.0)                         # (B, 84) f32

    # ---- fc3 (logits) ----
    o_ref[...] = (jnp.dot(a4.astype(jnp.bfloat16), fc3w_ref[...],
                          preferred_element_type=jnp.float32)
                  + fc3b_ref[...]).astype(o_ref.dtype)


# ---------------------------- Kernel wrappers ------------------------------- #

_VMEM = pl.BlockSpec(memory_space=pltpu.MemorySpace.VMEM)


def _pick_block_rows(m, target=1024):
    """Largest row-block <= target that divides m and is a multiple of 8
    (or the full extent when m is small / awkward)."""
    if m <= target or m % 8:
        return m
    bm = target - (target % 8)
    while bm > 0 and m % bm:
        bm -= 8
    return bm if bm > 0 else m


def conv_pool(patches, w, b):
    _, M, K = patches.shape
    N = w.shape[1]
    bm = _pick_block_rows(M)
    return pl.pallas_call(
        _conv_pool_kernel,
        out_shape=jax.ShapeDtypeStruct((M, N), jnp.bfloat16),
        grid_spec=pltpu.PrefetchScalarGridSpec(
            num_scalar_prefetch=0,
            grid=(M // bm,),
            in_specs=[pl.BlockSpec((4, bm, K), lambda i: (0, i, 0)),
                      pl.BlockSpec((K, N), lambda i: (0, 0)),
                      pl.BlockSpec((1, N), lambda i: (0, 0))],
            out_specs=pl.BlockSpec((bm, N), lambda i: (i, 0))),
        compiler_params=pltpu.CompilerParams(
            dimension_semantics=("parallel",)),
    )(patches, w, b)


def conv_pool_fc(patches, kp, batch):
    n_out = kp["fc3_w"].shape[1]
    return pl.pallas_call(
        _conv_pool_fc_kernel,
        out_shape=jax.ShapeDtypeStruct((batch, n_out), jnp.float32),
        in_specs=[_VMEM] * 9,
        out_specs=_VMEM,
        scratch_shapes=[pltpu.VMEM((patches.shape[1], kp["w2"].shape[1]),
                                   jnp.bfloat16)],
    )(patches, kp["w2"], kp["b2"], kp["fc1_w"], kp["fc1_b"],
      kp["fc2_w"], kp["fc2_b"], kp["fc3_w"], kp["fc3_b"])


# ------------------------------ XLA glue ------------------------------------ #

def corner_patches(x, kh, kw, row_order):
    """Corner-blocked im2col for a valid (kh,kw)/stride-1 conv followed by a
    2x2/stride-2 max pool.  x: (B, H, W, C) -> (4, M, kh*kw*C), features in
    (kh, kw, cin) order.  Rows ordered (b, ph, pw) for "bhw", (ph, pw, b) for
    "hwb".  Pure layout plumbing; XLA fuses the slices/concat."""
    B, H, W, C = x.shape
    OH, OW = H - kh + 1, W - kw + 1
    PH, PW = OH // 2, OW // 2
    K = kh * kw * C
    taps = [x[:, i:i + OH, j:j + OW, :] for i in range(kh) for j in range(kw)]
    cols = jnp.concatenate(taps, axis=-1)                          # (B, OH, OW, K)
    corners = jnp.stack([cols[:, dh::2, dw::2, :]
                         for dh in range(2) for dw in range(2)], axis=0)
    if row_order == "bhw":
        return corners.reshape(4, B * PH * PW, K)
    assert row_order == "hwb"
    return jnp.transpose(corners, (0, 2, 3, 1, 4)).reshape(4, PH * PW * B, K)


def net_forward(x_nchw, kp):
    B = x_nchw.shape[0]
    x = jnp.transpose(x_nchw, (0, 2, 3, 1)).astype(jnp.bfloat16)   # NCHW -> NHWC
    # Stage 1: conv1 + ReLU + pool (one kernel, gridded over pooled rows).
    p1 = corner_patches(x, 5, 5, row_order="bhw")                  # (4, B*14*14, 75)
    y1 = conv_pool(p1, kp["w1"], kp["b1"])                         # (B*196, 6) bf16
    H1 = (x.shape[1] - 5 + 1) // 2
    W1 = (x.shape[2] - 5 + 1) // 2
    y1 = y1.reshape(B, H1, W1, kp["w1"].shape[1])                  # (B, 14, 14, 6)
    # Stage 2: conv2 + ReLU + pool + fc1 + fc2 + fc3 (one kernel).
    p2 = corner_patches(y1, 5, 5, row_order="hwb")                 # (4, 25*B, 150)
    return conv_pool_fc(p2, kp, B)                                 # (B, 10) f32


# ------------------------- Deterministic parameters ------------------------- #

def init_params(key):
    """PyTorch-default-style uniform(-1/sqrt(fan_in), 1/sqrt(fan_in)) init.
    Conv weights stored HWIO (== PyTorch OIHW transposed); fc weights (in, out)
    with fc1 input features in PyTorch's (c, h, w) flatten order."""
    def u(k, shape, fan_in):
        bound = 1.0 / float(fan_in) ** 0.5
        return jax.random.uniform(k, shape, jnp.float32, -bound, bound)

    ks = jax.random.split(key, 10)
    return {
        "conv1_w": u(ks[0], (5, 5, 3, 6), 3 * 5 * 5),
        "conv1_b": u(ks[1], (6,), 3 * 5 * 5),
        "conv2_w": u(ks[2], (5, 5, 6, 16), 6 * 5 * 5),
        "conv2_b": u(ks[3], (16,), 6 * 5 * 5),
        "fc1_w": u(ks[4], (16 * 5 * 5, 120), 16 * 5 * 5),
        "fc1_b": u(ks[5], (120,), 16 * 5 * 5),
        "fc2_w": u(ks[6], (120, 84), 120),
        "fc2_b": u(ks[7], (84,), 120),
        "fc3_w": u(ks[8], (84, 10), 84),
        "fc3_b": u(ks[9], (10,), 84),
    }


def prepare_params(p):
    """One-time repack: flatten conv weights to (K, Cout) im2col layout, cast
    matmul weights to bf16, keep biases f32 (1, N), and permute fc1_w rows from
    PyTorch (c, h, w) order to the kernel's (p=h*5+w, c) order so the flatten
    transpose disappears from the runtime path."""
    bf16, f32 = jnp.bfloat16, jnp.float32
    cout2 = p["conv2_w"].shape[-1]                       # 16
    fc1_hwc = (p["fc1_w"].reshape(cout2, 25, -1)         # rows (c, p)
               .transpose(1, 0, 2)                       # -> (p, c)
               .reshape(25 * cout2, -1))
    return {
        "w1": p["conv1_w"].reshape(-1, p["conv1_w"].shape[-1]).astype(bf16),
        "b1": p["conv1_b"].reshape(1, -1).astype(f32),
        "w2": p["conv2_w"].reshape(-1, cout2).astype(bf16),
        "b2": p["conv2_b"].reshape(1, -1).astype(f32),
        "fc1_w": fc1_hwc.astype(bf16),
        "fc1_b": p["fc1_b"].reshape(1, -1).astype(f32),
        "fc2_w": p["fc2_w"].astype(bf16),
        "fc2_b": p["fc2_b"].reshape(1, -1).astype(f32),
        "fc3_w": p["fc3_w"].astype(bf16),
        "fc3_b": p["fc3_b"].reshape(1, -1).astype(f32),
    }


# --------------------------------- Main -------------------------------------- #

if __name__ == "__main__":
    key = jax.random.PRNGKey(0)
    k_x, k_p = jax.random.split(key)
    x = jax.random.normal(k_x, (2, 3, 32, 32), dtype=jnp.float32)  # NCHW, CIFAR-sized
    params = init_params(k_p)
    kp = prepare_params(params)          # one-time weight repack (tiny)

    fwd = jax.jit(net_forward)
    out = jax.block_until_ready(fwd(x, kp))

    assert out.shape == (2, 10), out.shape
    assert out.dtype == jnp.float32
    assert bool(jnp.all(jnp.isfinite(out)))
    print("KERNEL_OK")
</pallas_src>

<mosaic_0001>
module attributes {stable_mosaic.version = 11 : i64} {
  func.func @_conv_pool_kernel(%arg0: i32, %arg1: memref<4x392x75xbf16, #tpu.memory_space<vmem>>, %arg2: memref<75x6xbf16, #tpu.memory_space<vmem>>, %arg3: memref<1x6xf32, #tpu.memory_space<vmem>>, %arg4: memref<392x6xbf16, #tpu.memory_space<vmem>>) attributes {dimension_semantics = [#tpu.dimension_semantics<parallel>], iteration_bounds = array<i64: 1>, scalar_prefetch = 0 : i64, scratch_operands = 0 : i64, tpu.core_type = #tpu.core_type<tc>, window_params = [{transform_indices = @transform_0, window_bounds = array<i64: 4, 392, 75>}, {pipeline_mode = #tpu.pipeline_mode<synchronous>, transform_indices = @transform_1, window_bounds = array<i64: 75, 6>}, {pipeline_mode = #tpu.pipeline_mode<synchronous>, transform_indices = @transform_2, window_bounds = array<i64: 1, 6>}, {transform_indices = @transform_3, window_bounds = array<i64: 392, 6>}]} {
    %c0 = arith.constant 0 : index
    %c0_0 = arith.constant 0 : index
    %c0_1 = arith.constant 0 : index
    %0 = vector.load %arg1[%c0, %c0_0, %c0_1] : memref<4x392x75xbf16, #tpu.memory_space<vmem>>, vector<1x392x75xbf16>
    %1 = vector.shape_cast %0 : vector<1x392x75xbf16> to vector<392x75xbf16>
    %c0_2 = arith.constant 0 : index
    %c0_3 = arith.constant 0 : index
    %2 = vector.load %arg2[%c0_2, %c0_3] : memref<75x6xbf16, #tpu.memory_space<vmem>>, vector<75x6xbf16>
    %cst = arith.constant dense<0.000000e+00> : vector<392x6xf32>
    %3 = tpu.matmul %1, %2, %cst {dimension_numbers = #tpu.dot_dimension_numbers<[1], [0], [0], [1], [0, 0, 1, 1], [], []>} : vector<392x75xbf16>, vector<75x6xbf16>, vector<392x6xf32> -> vector<392x6xf32>
    %c1 = arith.constant 1 : index
    %c0_4 = arith.constant 0 : index
    %c0_5 = arith.constant 0 : index
    %4 = vector.load %arg1[%c1, %c0_4, %c0_5] : memref<4x392x75xbf16, #tpu.memory_space<vmem>>, vector<1x392x75xbf16>
    %5 = vector.shape_cast %4 : vector<1x392x75xbf16> to vector<392x75xbf16>
    %c0_6 = arith.constant 0 : index
    %c0_7 = arith.constant 0 : index
    %6 = vector.load %arg2[%c0_6, %c0_7] : memref<75x6xbf16, #tpu.memory_space<vmem>>, vector<75x6xbf16>
    %cst_8 = arith.constant dense<0.000000e+00> : vector<392x6xf32>
    %7 = tpu.matmul %5, %6, %cst_8 {dimension_numbers = #tpu.dot_dimension_numbers<[1], [0], [0], [1], [0, 0, 1, 1], [], []>} : vector<392x75xbf16>, vector<75x6xbf16>, vector<392x6xf32> -> vector<392x6xf32>
    %8 = arith.maximumf %3, %7 : vector<392x6xf32>
    %c2 = arith.constant 2 : index
    %c0_9 = arith.constant 0 : index
    %c0_10 = arith.constant 0 : index
    %9 = vector.load %arg1[%c2, %c0_9, %c0_10] : memref<4x392x75xbf16, #tpu.memory_space<vmem>>, vector<1x392x75xbf16>
    %10 = vector.shape_cast %9 : vector<1x392x75xbf16> to vector<392x75xbf16>
    %c0_11 = arith.constant 0 : index
    %c0_12 = arith.constant 0 : index
    %11 = vector.load %arg2[%c0_11, %c0_12] : memref<75x6xbf16, #tpu.memory_space<vmem>>, vector<75x6xbf16>
    %cst_13 = arith.constant dense<0.000000e+00> : vector<392x6xf32>
    %12 = tpu.matmul %10, %11, %cst_13 {dimension_numbers = #tpu.dot_dimension_numbers<[1], [0], [0], [1], [0, 0, 1, 1], [], []>} : vector<392x75xbf16>, vector<75x6xbf16>, vector<392x6xf32> -> vector<392x6xf32>
    %13 = arith.maximumf %8, %12 : vector<392x6xf32>
    %c3 = arith.constant 3 : index
    %c0_14 = arith.constant 0 : index
    %c0_15 = arith.constant 0 : index
    %14 = vector.load %arg1[%c3, %c0_14, %c0_15] : memref<4x392x75xbf16, #tpu.memory_space<vmem>>, vector<1x392x75xbf16>
    %15 = vector.shape_cast %14 : vector<1x392x75xbf16> to vector<392x75xbf16>
    %c0_16 = arith.constant 0 : index
    %c0_17 = arith.constant 0 : index
    %16 = vector.load %arg2[%c0_16, %c0_17] : memref<75x6xbf16, #tpu.memory_space<vmem>>, vector<75x6xbf16>
    %cst_18 = arith.constant dense<0.000000e+00> : vector<392x6xf32>
    %17 = tpu.matmul %15, %16, %cst_18 {dimension_numbers = #tpu.dot_dimension_numbers<[1], [0], [0], [1], [0, 0, 1, 1], [], []>} : vector<392x75xbf16>, vector<75x6xbf16>, vector<392x6xf32> -> vector<392x6xf32>
    %18 = arith.maximumf %13, %17 : vector<392x6xf32>
    %c0_19 = arith.constant 0 : index
    %c0_20 = arith.constant 0 : index
    %19 = vector.load %arg3[%c0_19, %c0_20] : memref<1x6xf32, #tpu.memory_space<vmem>>, vector<1x6xf32>
    %20 = vector.broadcast %19 : vector<1x6xf32> to vector<392x6xf32>
    %21 = arith.addf %18, %20 : vector<392x6xf32>
    %cst_21 = arith.constant 0.000000e+00 : f32
    %22 = vector.broadcast %cst_21 : f32 to vector<392x6xf32>
    %23 = arith.maximumf %21, %22 : vector<392x6xf32>
    %24 = arith.truncf %23 : vector<392x6xf32> to vector<392x6xbf16>
    %c0_22 = arith.constant 0 : index
    %c0_23 = arith.constant 0 : index
    %25 = vector.load %arg4[%c0_22, %c0_23] : memref<392x6xbf16, #tpu.memory_space<vmem>>, vector<392x6xbf16>
    tpu.vector_store %arg4[%c0_22, %c0_23], %24 {strides = array<i32>} : memref<392x6xbf16, #tpu.memory_space<vmem>>, vector<392x6xbf16>,
    return
  }
  func.func @transform_0(%arg0: i32) -> (i32, i32, i32) {
    %c0_i32 = arith.constant 0 : i32
    %c0_i32_0 = arith.constant 0 : i32
    %c0_i32_1 = arith.constant 0 : i32
    return %c0_i32, %arg0, %c0_i32_0 : i32, i32, i32
  }
  func.func @transform_1(%arg0: i32) -> (i32, i32) {
    %c0_i32 = arith.constant 0 : i32
    %c0_i32_0 = arith.constant 0 : i32
    %c0_i32_1 = arith.constant 0 : i32
    return %c0_i32, %c0_i32_0 : i32, i32
  }
  func.func @transform_2(%arg0: i32) -> (i32, i32) {
    %c0_i32 = arith.constant 0 : i32
    %c0_i32_0 = arith.constant 0 : i32
    %c0_i32_1 = arith.constant 0 : i32
    return %c0_i32, %c0_i32_0 : i32, i32
  }
  func.func @transform_3(%arg0: i32) -> (i32, i32) {
    %c0_i32 = arith.constant 0 : i32
    %c0_i32_0 = arith.constant 0 : i32
    return %arg0, %c0_i32 : i32, i32
  }
}

module attributes {stable_mosaic.version = 11 : i64} {
  func.func @_conv_pool_fc_kernel(%arg0: memref<4x50x150xbf16, #tpu.memory_space<vmem>>, %arg1: memref<150x16xbf16, #tpu.memory_space<vmem>>, %arg2: memref<1x16xf32, #tpu.memory_space<vmem>>, %arg3: memref<400x120xbf16, #tpu.memory_space<vmem>>, %arg4: memref<1x120xf32, #tpu.memory_space<vmem>>, %arg5: memref<120x84xbf16, #tpu.memory_space<vmem>>, %arg6: memref<1x84xf32, #tpu.memory_space<vmem>>, %arg7: memref<84x10xbf16, #tpu.memory_space<vmem>>, %arg8: memref<1x10xf32, #tpu.memory_space<vmem>>, %arg9: memref<2x10xf32, #tpu.memory_space<vmem>>, %arg10: memref<50x16xbf16, #tpu.memory_space<vmem>>) attributes {dimension_semantics = [], scalar_prefetch = 0 : i64, scratch_operands = 1 : i64, tpu.core_type = #tpu.core_type<tc>} {
    %c0 = arith.constant 0 : index
    %c0_0 = arith.constant 0 : index
    %c0_1 = arith.constant 0 : index
    %0 = vector.load %arg0[%c0, %c0_0, %c0_1] : memref<4x50x150xbf16, #tpu.memory_space<vmem>>, vector<1x50x150xbf16>
    %1 = vector.shape_cast %0 : vector<1x50x150xbf16> to vector<50x150xbf16>
    %c0_2 = arith.constant 0 : index
    %c0_3 = arith.constant 0 : index
    %2 = vector.load %arg1[%c0_2, %c0_3] : memref<150x16xbf16, #tpu.memory_space<vmem>>, vector<150x16xbf16>
    %cst = arith.constant dense<0.000000e+00> : vector<50x16xf32>
    %3 = tpu.matmul %1, %2, %cst {dimension_numbers = #tpu.dot_dimension_numbers<[1], [0], [0], [1], [0, 0, 1, 1], [], []>} : vector<50x150xbf16>, vector<150x16xbf16>, vector<50x16xf32> -> vector<50x16xf32>
    %c1 = arith.constant 1 : index
    %c0_4 = arith.constant 0 : index
    %c0_5 = arith.constant 0 : index
    %4 = vector.load %arg0[%c1, %c0_4, %c0_5] : memref<4x50x150xbf16, #tpu.memory_space<vmem>>, vector<1x50x150xbf16>
    %5 = vector.shape_cast %4 : vector<1x50x150xbf16> to vector<50x150xbf16>
    %c0_6 = arith.constant 0 : index
    %c0_7 = arith.constant 0 : index
    %6 = vector.load %arg1[%c0_6, %c0_7] : memref<150x16xbf16, #tpu.memory_space<vmem>>, vector<150x16xbf16>
    %cst_8 = arith.constant dense<0.000000e+00> : vector<50x16xf32>
    %7 = tpu.matmul %5, %6, %cst_8 {dimension_numbers = #tpu.dot_dimension_numbers<[1], [0], [0], [1], [0, 0, 1, 1], [], []>} : vector<50x150xbf16>, vector<150x16xbf16>, vector<50x16xf32> -> vector<50x16xf32>
    %8 = arith.maximumf %3, %7 : vector<50x16xf32>
    %c2 = arith.constant 2 : index
    %c0_9 = arith.constant 0 : index
    %c0_10 = arith.constant 0 : index
    %9 = vector.load %arg0[%c2, %c0_9, %c0_10] : memref<4x50x150xbf16, #tpu.memory_space<vmem>>, vector<1x50x150xbf16>
    %10 = vector.shape_cast %9 : vector<1x50x150xbf16> to vector<50x150xbf16>
    %c0_11 = arith.constant 0 : index
    %c0_12 = arith.constant 0 : index
    %11 = vector.load %arg1[%c0_11, %c0_12] : memref<150x16xbf16, #tpu.memory_space<vmem>>, vector<150x16xbf16>
    %cst_13 = arith.constant dense<0.000000e+00> : vector<50x16xf32>
    %12 = tpu.matmul %10, %11, %cst_13 {dimension_numbers = #tpu.dot_dimension_numbers<[1], [0], [0], [1], [0, 0, 1, 1], [], []>} : vector<50x150xbf16>, vector<150x16xbf16>, vector<50x16xf32> -> vector<50x16xf32>
    %13 = arith.maximumf %8, %12 : vector<50x16xf32>
    %c3 = arith.constant 3 : index
    %c0_14 = arith.constant 0 : index
    %c0_15 = arith.constant 0 : index
    %14 = vector.load %arg0[%c3, %c0_14, %c0_15] : memref<4x50x150xbf16, #tpu.memory_space<vmem>>, vector<1x50x150xbf16>
    %15 = vector.shape_cast %14 : vector<1x50x150xbf16> to vector<50x150xbf16>
    %c0_16 = arith.constant 0 : index
    %c0_17 = arith.constant 0 : index
    %16 = vector.load %arg1[%c0_16, %c0_17] : memref<150x16xbf16, #tpu.memory_space<vmem>>, vector<150x16xbf16>
    %cst_18 = arith.constant dense<0.000000e+00> : vector<50x16xf32>
    %17 = tpu.matmul %15, %16, %cst_18 {dimension_numbers = #tpu.dot_dimension_numbers<[1], [0], [0], [1], [0, 0, 1, 1], [], []>} : vector<50x150xbf16>, vector<150x16xbf16>, vector<50x16xf32> -> vector<50x16xf32>
    %18 = arith.maximumf %13, %17 : vector<50x16xf32>
    %c0_19 = arith.constant 0 : index
    %c0_20 = arith.constant 0 : index
    %19 = vector.load %arg2[%c0_19, %c0_20] : memref<1x16xf32, #tpu.memory_space<vmem>>, vector<1x16xf32>
    %20 = vector.broadcast %19 : vector<1x16xf32> to vector<50x16xf32>
    %21 = arith.addf %18, %20 : vector<50x16xf32>
    %cst_21 = arith.constant 0.000000e+00 : f32
    %22 = vector.broadcast %cst_21 : f32 to vector<50x16xf32>
    %23 = arith.maximumf %21, %22 : vector<50x16xf32>
    %24 = arith.truncf %23 : vector<50x16xf32> to vector<50x16xbf16>
    %c0_22 = arith.constant 0 : index
    %c0_23 = arith.constant 0 : index
    %25 = vector.load %arg10[%c0_22, %c0_23] : memref<50x16xbf16, #tpu.memory_space<vmem>>, vector<50x16xbf16>
    tpu.vector_store %arg10[%c0_22, %c0_23], %24 {strides = array<i32>} : memref<50x16xbf16, #tpu.memory_space<vmem>>, vector<50x16xbf16>,
    %cst_24 = arith.constant 0.000000e+00 : f32
    %26 = vector.broadcast %cst_24 : f32 to vector<2x120xf32>
    %c0_25 = arith.constant 0 : index
    %c0_26 = arith.constant 0 : index
    %27 = vector.load %arg10[%c0_25, %c0_26] : memref<50x16xbf16, #tpu.memory_space<vmem>>, vector<2x16xbf16>
    %c0_27 = arith.constant 0 : index
    %c0_28 = arith.constant 0 : index
    %28 = vector.load %arg3[%c0_27, %c0_28] : memref<400x120xbf16, #tpu.memory_space<vmem>>, vector<16x120xbf16>
    %cst_29 = arith.constant dense<0.000000e+00> : vector<2x120xf32>
    %29 = tpu.matmul %27, %28, %cst_29 {dimension_numbers = #tpu.dot_dimension_numbers<[1], [0], [0], [1], [0, 0, 1, 1], [], []>} : vector<2x16xbf16>, vector<16x120xbf16>, vector<2x120xf32> -> vector<2x120xf32>
    %30 = arith.addf %26, %29 : vector<2x120xf32>
    %c2_30 = arith.constant 2 : index
    %c0_31 = arith.constant 0 : index
    %31 = vector.load %arg10[%c2_30, %c0_31] : memref<50x16xbf16, #tpu.memory_space<vmem>>, vector<2x16xbf16>
    %c16 = arith.constant 16 : index
    %c0_32 = arith.constant 0 : index
    %32 = vector.load %arg3[%c16, %c0_32] : memref<400x120xbf16, #tpu.memory_space<vmem>>, vector<16x120xbf16>
    %cst_33 = arith.constant dense<0.000000e+00> : vector<2x120xf32>
    %33 = tpu.matmul %31, %32, %cst_33 {dimension_numbers = #tpu.dot_dimension_numbers<[1], [0], [0], [1], [0, 0, 1, 1], [], []>} : vector<2x16xbf16>, vector<16x120xbf16>, vector<2x120xf32> -> vector<2x120xf32>
    %34 = arith.addf %30, %33 : vector<2x120xf32>
    %c4 = arith.constant 4 : index
    %c0_34 = arith.constant 0 : index
    %35 = vector.load %arg10[%c4, %c0_34] : memref<50x16xbf16, #tpu.memory_space<vmem>>, vector<2x16xbf16>
    %c32 = arith.constant 32 : index
    %c0_35 = arith.constant 0 : index
    %36 = vector.load %arg3[%c32, %c0_35] : memref<400x120xbf16, #tpu.memory_space<vmem>>, vector<16x120xbf16>
    %cst_36 = arith.constant dense<0.000000e+00> : vector<2x120xf32>
    %37 = tpu.matmul %35, %36, %cst_36 {dimension_numbers = #tpu.dot_dimension_numbers<[1], [0], [0], [1], [0, 0, 1, 1], [], []>} : vector<2x16xbf16>, vector<16x120xbf16>, vector<2x120xf32> -> vector<2x120xf32>
    %38 = arith.addf %34, %37 : vector<2x120xf32>
    %c6 = arith.constant 6 : index
    %c0_37 = arith.constant 0 : index
    %39 = vector.load %arg10[%c6, %c0_37] : memref<50x16xbf16, #tpu.memory_space<vmem>>, vector<2x16xbf16>
    %c48 = arith.constant 48 : index
    %c0_38 = arith.constant 0 : index
    %40 = vector.load %arg3[%c48, %c0_38] : memref<400x120xbf16, #tpu.memory_space<vmem>>, vector<16x120xbf16>
    %cst_39 = arith.constant dense<0.000000e+00> : vector<2x120xf32>
    %41 = tpu.matmul %39, %40, %cst_39 {dimension_numbers = #tpu.dot_dimension_numbers<[1], [0], [0], [1], [0, 0, 1, 1], [], []>} : vector<2x16xbf16>, vector<16x120xbf16>, vector<2x120xf32> -> vector<2x120xf32>
    %42 = arith.addf %38, %41 : vector<2x120xf32>
    %c8 = arith.constant 8 : index
    %c0_40 = arith.constant 0 : index
    %43 = vector.load %arg10[%c8, %c0_40] : memref<50x16xbf16, #tpu.memory_space<vmem>>, vector<2x16xbf16>
    %c64 = arith.constant 64 : index
    %c0_41 = arith.constant 0 : index
    %44 = vector.load %arg3[%c64, %c0_41] : memref<400x120xbf16, #tpu.memory_space<vmem>>, vector<16x120xbf16>
    %cst_42 = arith.constant dense<0.000000e+00> : vector<2x120xf32>
    %45 = tpu.matmul %43, %44, %cst_42 {dimension_numbers = #tpu.dot_dimension_numbers<[1], [0], [0], [1], [0, 0, 1, 1], [], []>} : vector<2x16xbf16>, vector<16x120xbf16>, vector<2x120xf32> -> vector<2x120xf32>
    %46 = arith.addf %42, %45 : vector<2x120xf32>
    %c10 = arith.constant 10 : index
    %c0_43 = arith.constant 0 : index
    %47 = vector.load %arg10[%c10, %c0_43] : memref<50x16xbf16, #tpu.memory_space<vmem>>, vector<2x16xbf16>
    %c80 = arith.constant 80 : index
    %c0_44 = arith.constant 0 : index
    %48 = vector.load %arg3[%c80, %c0_44] : memref<400x120xbf16, #tpu.memory_space<vmem>>, vector<16x120xbf16>
    %cst_45 = arith.constant dense<0.000000e+00> : vector<2x120xf32>
    %49 = tpu.matmul %47, %48, %cst_45 {dimension_numbers = #tpu.dot_dimension_numbers<[1], [0], [0], [1], [0, 0, 1, 1], [], []>} : vector<2x16xbf16>, vector<16x120xbf16>, vector<2x120xf32> -> vector<2x120xf32>
    %50 = arith.addf %46, %49 : vector<2x120xf32>
    %c12 = arith.constant 12 : index
    %c0_46 = arith.constant 0 : index
    %51 = vector.load %arg10[%c12, %c0_46] : memref<50x16xbf16, #tpu.memory_space<vmem>>, vector<2x16xbf16>
    %c96 = arith.constant 96 : index
    %c0_47 = arith.constant 0 : index
    %52 = vector.load %arg3[%c96, %c0_47] : memref<400x120xbf16, #tpu.memory_space<vmem>>, vector<16x120xbf16>
    %cst_48 = arith.constant dense<0.000000e+00> : vector<2x120xf32>
    %53 = tpu.matmul %51, %52, %cst_48 {dimension_numbers = #tpu.dot_dimension_numbers<[1], [0], [0], [1], [0, 0, 1, 1], [], []>} : vector<2x16xbf16>, vector<16x120xbf16>, vector<2x120xf32> -> vector<2x120xf32>
    %54 = arith.addf %50, %53 : vector<2x120xf32>
    %c14 = arith.constant 14 : index
    %c0_49 = arith.constant 0 : index
    %55 = vector.load %arg10[%c14, %c0_49] : memref<50x16xbf16, #tpu.memory_space<vmem>>, vector<2x16xbf16>
    %c112 = arith.constant 112 : index
    %c0_50 = arith.constant 0 : index
    %56 = vector.load %arg3[%c112, %c0_50] : memref<400x120xbf16, #tpu.memory_space<vmem>>, vector<16x120xbf16>
    %cst_51 = arith.constant dense<0.000000e+00> : vector<2x120xf32>
    %57 = tpu.matmul %55, %56, %cst_51 {dimension_numbers = #tpu.dot_dimension_numbers<[1], [0], [0], [1], [0, 0, 1, 1], [], []>} : vector<2x16xbf16>, vector<16x120xbf16>, vector<2x120xf32> -> vector<2x120xf32>
    %58 = arith.addf %54, %57 : vector<2x120xf32>
    %c16_52 = arith.constant 16 : index
    %c0_53 = arith.constant 0 : index
    %59 = vector.load %arg10[%c16_52, %c0_53] : memref<50x16xbf16, #tpu.memory_space<vmem>>, vector<2x16xbf16>
    %c128 = arith.constant 128 : index
    %c0_54 = arith.constant 0 : index
    %60 = vector.load %arg3[%c128, %c0_54] : memref<400x120xbf16, #tpu.memory_space<vmem>>, vector<16x120xbf16>
    %cst_55 = arith.constant dense<0.000000e+00> : vector<2x120xf32>
    %61 = tpu.matmul %59, %60, %cst_55 {dimension_numbers = #tpu.dot_dimension_numbers<[1], [0], [0], [1], [0, 0, 1, 1], [], []>} : vector<2x16xbf16>, vector<16x120xbf16>, vector<2x120xf32> -> vector<2x120xf32>
    %62 = arith.addf %58, %61 : vector<2x120xf32>
    %c18 = arith.constant 18 : index
    %c0_56 = arith.constant 0 : index
    %63 = vector.load %arg10[%c18, %c0_56] : memref<50x16xbf16, #tpu.memory_space<vmem>>, vector<2x16xbf16>
    %c144 = arith.constant 144 : index
    %c0_57 = arith.constant 0 : index
    %64 = vector.load %arg3[%c144, %c0_57] : memref<400x120xbf16, #tpu.memory_space<vmem>>, vector<16x120xbf16>
    %cst_58 = arith.constant dense<0.000000e+00> : vector<2x120xf32>
    %65 = tpu.matmul %63, %64, %cst_58 {dimension_numbers = #tpu.dot_dimension_numbers<[1], [0], [0], [1], [0, 0, 1, 1], [], []>} : vector<2x16xbf16>, vector<16x120xbf16>, vector<2x120xf32> -> vector<2x120xf32>
    %66 = arith.addf %62, %65 : vector<2x120xf32>
    %c20 = arith.constant 20 : index
    %c0_59 = arith.constant 0 : index
    %67 = vector.load %arg10[%c20, %c0_59] : memref<50x16xbf16, #tpu.memory_space<vmem>>, vector<2x16xbf16>
    %c160 = arith.constant 160 : index
    %c0_60 = arith.constant 0 : index
    %68 = vector.load %arg3[%c160, %c0_60] : memref<400x120xbf16, #tpu.memory_space<vmem>>, vector<16x120xbf16>
    %cst_61 = arith.constant dense<0.000000e+00> : vector<2x120xf32>
    %69 = tpu.matmul %67, %68, %cst_61 {dimension_numbers = #tpu.dot_dimension_numbers<[1], [0], [0], [1], [0, 0, 1, 1], [], []>} : vector<2x16xbf16>, vector<16x120xbf16>, vector<2x120xf32> -> vector<2x120xf32>
    %70 = arith.addf %66, %69 : vector<2x120xf32>
    %c22 = arith.constant 22 : index
    %c0_62 = arith.constant 0 : index
    %71 = vector.load %arg10[%c22, %c0_62] : memref<50x16xbf16, #tpu.memory_space<vmem>>, vector<2x16xbf16>
    %c176 = arith.constant 176 : index
    %c0_63 = arith.constant 0 : index
    %72 = vector.load %arg3[%c176, %c0_63] : memref<400x120xbf16, #tpu.memory_space<vmem>>, vector<16x120xbf16>
    %cst_64 = arith.constant dense<0.000000e+00> : vector<2x120xf32>
    %73 = tpu.matmul %71, %72, %cst_64 {dimension_numbers = #tpu.dot_dimension_numbers<[1], [0], [0], [1], [0, 0, 1, 1], [], []>} : vector<2x16xbf16>, vector<16x120xbf16>, vector<2x120xf32> -> vector<2x120xf32>
    %74 = arith.addf %70, %73 : vector<2x120xf32>
    %c24 = arith.constant 24 : index
    %c0_65 = arith.constant 0 : index
    %75 = vector.load %arg10[%c24, %c0_65] : memref<50x16xbf16, #tpu.memory_space<vmem>>, vector<2x16xbf16>
    %c192 = arith.constant 192 : index
    %c0_66 = arith.constant 0 : index
    %76 = vector.load %arg3[%c192, %c0_66] : memref<400x120xbf16, #tpu.memory_space<vmem>>, vector<16x120xbf16>
    %cst_67 = arith.constant dense<0.000000e+00> : vector<2x120xf32>
    %77 = tpu.matmul %75, %76, %cst_67 {dimension_numbers = #tpu.dot_dimension_numbers<[1], [0], [0], [1], [0, 0, 1, 1], [], []>} : vector<2x16xbf16>, vector<16x120xbf16>, vector<2x120xf32> -> vector<2x120xf32>
    %78 = arith.addf %74, %77 : vector<2x120xf32>
    %c26 = arith.constant 26 : index
    %c0_68 = arith.constant 0 : index
    %79 = vector.load %arg10[%c26, %c0_68] : memref<50x16xbf16, #tpu.memory_space<vmem>>, vector<2x16xbf16>
    %c208 = arith.constant 208 : index
    %c0_69 = arith.constant 0 : index
    %80 = vector.load %arg3[%c208, %c0_69] : memref<400x120xbf16, #tpu.memory_space<vmem>>, vector<16x120xbf16>
    %cst_70 = arith.constant dense<0.000000e+00> : vector<2x120xf32>
    %81 = tpu.matmul %79, %80, %cst_70 {dimension_numbers = #tpu.dot_dimension_numbers<[1], [0], [0], [1], [0, 0, 1, 1], [], []>} : vector<2x16xbf16>, vector<16x120xbf16>, vector<2x120xf32> -> vector<2x120xf32>
    %82 = arith.addf %78, %81 : vector<2x120xf32>
    %c28 = arith.constant 28 : index
    %c0_71 = arith.constant 0 : index
    %83 = vector.load %arg10[%c28, %c0_71] : memref<50x16xbf16, #tpu.memory_space<vmem>>, vector<2x16xbf16>
    %c224 = arith.constant 224 : index
    %c0_72 = arith.constant 0 : index
    %84 = vector.load %arg3[%c224, %c0_72] : memref<400x120xbf16, #tpu.memory_space<vmem>>, vector<16x120xbf16>
    %cst_73 = arith.constant dense<0.000000e+00> : vector<2x120xf32>
    %85 = tpu.matmul %83, %84, %cst_73 {dimension_numbers = #tpu.dot_dimension_numbers<[1], [0], [0], [1], [0, 0, 1, 1], [], []>} : vector<2x16xbf16>, vector<16x120xbf16>, vector<2x120xf32> -> vector<2x120xf32>
    %86 = arith.addf %82, %85 : vector<2x120xf32>
    %c30 = arith.constant 30 : index
    %c0_74 = arith.constant 0 : index
    %87 = vector.load %arg10[%c30, %c0_74] : memref<50x16xbf16, #tpu.memory_space<vmem>>, vector<2x16xbf16>
    %c240 = arith.constant 240 : index
    %c0_75 = arith.constant 0 : index
    %88 = vector.load %arg3[%c240, %c0_75] : memref<400x120xbf16, #tpu.memory_space<vmem>>, vector<16x120xbf16>
    %cst_76 = arith.constant dense<0.000000e+00> : vector<2x120xf32>
    %89 = tpu.matmul %87, %88, %cst_76 {dimension_numbers = #tpu.dot_dimension_numbers<[1], [0], [0], [1], [0, 0, 1, 1], [], []>} : vector<2x16xbf16>, vector<16x120xbf16>, vector<2x120xf32> -> vector<2x120xf32>
    %90 = arith.addf %86, %89 : vector<2x120xf32>
    %c32_77 = arith.constant 32 : index
    %c0_78 = arith.constant 0 : index
    %91 = vector.load %arg10[%c32_77, %c0_78] : memref<50x16xbf16, #tpu.memory_space<vmem>>, vector<2x16xbf16>
    %c256 = arith.constant 256 : index
    %c0_79 = arith.constant 0 : index
    %92 = vector.load %arg3[%c256, %c0_79] : memref<400x120xbf16, #tpu.memory_space<vmem>>, vector<16x120xbf16>
    %cst_80 = arith.constant dense<0.000000e+00> : vector<2x120xf32>
    %93 = tpu.matmul %91, %92, %cst_80 {dimension_numbers = #tpu.dot_dimension_numbers<[1], [0], [0], [1], [0, 0, 1, 1], [], []>} : vector<2x16xbf16>, vector<16x120xbf16>, vector<2x120xf32> -> vector<2x120xf32>
    %94 = arith.addf %90, %93 : vector<2x120xf32>
    %c34 = arith.constant 34 : index
    %c0_81 = arith.constant 0 : index
    %95 = vector.load %arg10[%c34, %c0_81] : memref<50x16xbf16, #tpu.memory_space<vmem>>, vector<2x16xbf16>
    %c272 = arith.constant 272 : index
    %c0_82 = arith.constant 0 : index
    %96 = vector.load %arg3[%c272, %c0_82] : memref<400x120xbf16, #tpu.memory_space<vmem>>, vector<16x120xbf16>
    %cst_83 = arith.constant dense<0.000000e+00> : vector<2x120xf32>
    %97 = tpu.matmul %95, %96, %cst_83 {dimension_numbers = #tpu.dot_dimension_numbers<[1], [0], [0], [1], [0, 0, 1, 1], [], []>} : vector<2x16xbf16>, vector<16x120xbf16>, vector<2x120xf32> -> vector<2x120xf32>
    %98 = arith.addf %94, %97 : vector<2x120xf32>
    %c36 = arith.constant 36 : index
    %c0_84 = arith.constant 0 : index
    %99 = vector.load %arg10[%c36, %c0_84] : memref<50x16xbf16, #tpu.memory_space<vmem>>, vector<2x16xbf16>
    %c288 = arith.constant 288 : index
    %c0_85 = arith.constant 0 : index
    %100 = vector.load %arg3[%c288, %c0_85] : memref<400x120xbf16, #tpu.memory_space<vmem>>, vector<16x120xbf16>
    %cst_86 = arith.constant dense<0.000000e+00> : vector<2x120xf32>
    %101 = tpu.matmul %99, %100, %cst_86 {dimension_numbers = #tpu.dot_dimension_numbers<[1], [0], [0], [1], [0, 0, 1, 1], [], []>} : vector<2x16xbf16>, vector<16x120xbf16>, vector<2x120xf32> -> vector<2x120xf32>
    %102 = arith.addf %98, %101 : vector<2x120xf32>
    %c38 = arith.constant 38 : index
    %c0_87 = arith.constant 0 : index
    %103 = vector.load %arg10[%c38, %c0_87] : memref<50x16xbf16, #tpu.memory_space<vmem>>, vector<2x16xbf16>
    %c304 = arith.constant 304 : index
    %c0_88 = arith.constant 0 : index
    %104 = vector.load %arg3[%c304, %c0_88] : memref<400x120xbf16, #tpu.memory_space<vmem>>, vector<16x120xbf16>
    %cst_89 = arith.constant dense<0.000000e+00> : vector<2x120xf32>
    %105 = tpu.matmul %103, %104, %cst_89 {dimension_numbers = #tpu.dot_dimension_numbers<[1], [0], [0], [1], [0, 0, 1, 1], [], []>} : vector<2x16xbf16>, vector<16x120xbf16>, vector<2x120xf32> -> vector<2x120xf32>
    %106 = arith.addf %102, %105 : vector<2x120xf32>
    %c40 = arith.constant 40 : index
    %c0_90 = arith.constant 0 : index
    %107 = vector.load %arg10[%c40, %c0_90] : memref<50x16xbf16, #tpu.memory_space<vmem>>, vector<2x16xbf16>
    %c320 = arith.constant 320 : index
    %c0_91 = arith.constant 0 : index
    %108 = vector.load %arg3[%c320, %c0_91] : memref<400x120xbf16, #tpu.memory_space<vmem>>, vector<16x120xbf16>
    %cst_92 = arith.constant dense<0.000000e+00> : vector<2x120xf32>
    %109 = tpu.matmul %107, %108, %cst_92 {dimension_numbers = #tpu.dot_dimension_numbers<[1], [0], [0], [1], [0, 0, 1, 1], [], []>} : vector<2x16xbf16>, vector<16x120xbf16>, vector<2x120xf32> -> vector<2x120xf32>
    %110 = arith.addf %106, %109 : vector<2x120xf32>
    %c42 = arith.constant 42 : index
    %c0_93 = arith.constant 0 : index
    %111 = vector.load %arg10[%c42, %c0_93] : memref<50x16xbf16, #tpu.memory_space<vmem>>, vector<2x16xbf16>
    %c336 = arith.constant 336 : index
    %c0_94 = arith.constant 0 : index
    %112 = vector.load %arg3[%c336, %c0_94] : memref<400x120xbf16, #tpu.memory_space<vmem>>, vector<16x120xbf16>
    %cst_95 = arith.constant dense<0.000000e+00> : vector<2x120xf32>
    %113 = tpu.matmul %111, %112, %cst_95 {dimension_numbers = #tpu.dot_dimension_numbers<[1], [0], [0], [1], [0, 0, 1, 1], [], []>} : vector<2x16xbf16>, vector<16x120xbf16>, vector<2x120xf32> -> vector<2x120xf32>
    %114 = arith.addf %110, %113 : vector<2x120xf32>
    %c44 = arith.constant 44 : index
    %c0_96 = arith.constant 0 : index
    %115 = vector.load %arg10[%c44, %c0_96] : memref<50x16xbf16, #tpu.memory_space<vmem>>, vector<2x16xbf16>
    %c352 = arith.constant 352 : index
    %c0_97 = arith.constant 0 : index
    %116 = vector.load %arg3[%c352, %c0_97] : memref<400x120xbf16, #tpu.memory_space<vmem>>, vector<16x120xbf16>
    %cst_98 = arith.constant dense<0.000000e+00> : vector<2x120xf32>
    %117 = tpu.matmul %115, %116, %cst_98 {dimension_numbers = #tpu.dot_dimension_numbers<[1], [0], [0], [1], [0, 0, 1, 1], [], []>} : vector<2x16xbf16>, vector<16x120xbf16>, vector<2x120xf32> -> vector<2x120xf32>
    %118 = arith.addf %114, %117 : vector<2x120xf32>
    %c46 = arith.constant 46 : index
    %c0_99 = arith.constant 0 : index
    %119 = vector.load %arg10[%c46, %c0_99] : memref<50x16xbf16, #tpu.memory_space<vmem>>, vector<2x16xbf16>
    %c368 = arith.constant 368 : index
    %c0_100 = arith.constant 0 : index
    %120 = vector.load %arg3[%c368, %c0_100] : memref<400x120xbf16, #tpu.memory_space<vmem>>, vector<16x120xbf16>
    %cst_101 = arith.constant dense<0.000000e+00> : vector<2x120xf32>
    %121 = tpu.matmul %119, %120, %cst_101 {dimension_numbers = #tpu.dot_dimension_numbers<[1], [0], [0], [1], [0, 0, 1, 1], [], []>} : vector<2x16xbf16>, vector<16x120xbf16>, vector<2x120xf32> -> vector<2x120xf32>
    %122 = arith.addf %118, %121 : vector<2x120xf32>
    %c48_102 = arith.constant 48 : index
    %c0_103 = arith.constant 0 : index
    %123 = vector.load %arg10[%c48_102, %c0_103] : memref<50x16xbf16, #tpu.memory_space<vmem>>, vector<2x16xbf16>
    %c384 = arith.constant 384 : index
    %c0_104 = arith.constant 0 : index
    %124 = vector.load %arg3[%c384, %c0_104] : memref<400x120xbf16, #tpu.memory_space<vmem>>, vector<16x120xbf16>
    %cst_105 = arith.constant dense<0.000000e+00> : vector<2x120xf32>
    %125 = tpu.matmul %123, %124, %cst_105 {dimension_numbers = #tpu.dot_dimension_numbers<[1], [0], [0], [1], [0, 0, 1, 1], [], []>} : vector<2x16xbf16>, vector<16x120xbf16>, vector<2x120xf32> -> vector<2x120xf32>
    %126 = arith.addf %122, %125 : vector<2x120xf32>
    %c0_106 = arith.constant 0 : index
    %c0_107 = arith.constant 0 : index
    %127 = vector.load %arg4[%c0_106, %c0_107] : memref<1x120xf32, #tpu.memory_space<vmem>>, vector<1x120xf32>
    %128 = vector.broadcast %127 : vector<1x120xf32> to vector<2x120xf32>
    %129 = arith.addf %126, %128 : vector<2x120xf32>
    %cst_108 = arith.constant 0.000000e+00 : f32
    %130 = vector.broadcast %cst_108 : f32 to vector<2x120xf32>
    %131 = arith.maximumf %129, %130 : vector<2x120xf32>
    %132 = arith.truncf %131 : vector<2x120xf32> to vector<2x120xbf16>
    %c0_109 = arith.constant 0 : index
    %c0_110 = arith.constant 0 : index
    %133 = vector.load %arg5[%c0_109, %c0_110] : memref<120x84xbf16, #tpu.memory_space<vmem>>, vector<120x84xbf16>
    %cst_111 = arith.constant dense<0.000000e+00> : vector<2x84xf32>
    %134 = tpu.matmul %132, %133, %cst_111 {dimension_numbers = #tpu.dot_dimension_numbers<[1], [0], [0], [1], [0, 0, 1, 1], [], []>} : vector<2x120xbf16>, vector<120x84xbf16>, vector<2x84xf32> -> vector<2x84xf32>
    %c0_112 = arith.constant 0 : index
    %c0_113 = arith.constant 0 : index
    %135 = vector.load %arg6[%c0_112, %c0_113] : memref<1x84xf32, #tpu.memory_space<vmem>>, vector<1x84xf32>
    %136 = vector.broadcast %135 : vector<1x84xf32> to vector<2x84xf32>
    %137 = arith.addf %134, %136 : vector<2x84xf32>
    %cst_114 = arith.constant 0.000000e+00 : f32
    %138 = vector.broadcast %cst_114 : f32 to vector<2x84xf32>
    %139 = arith.maximumf %137, %138 : vector<2x84xf32>
    %140 = arith.truncf %139 : vector<2x84xf32> to vector<2x84xbf16>
    %c0_115 = arith.constant 0 : index
    %c0_116 = arith.constant 0 : index
    %141 = vector.load %arg7[%c0_115, %c0_116] : memref<84x10xbf16, #tpu.memory_space<vmem>>, vector<84x10xbf16>
    %cst_117 = arith.constant dense<0.000000e+00> : vector<2x10xf32>
    %142 = tpu.matmul %140, %141, %cst_117 {dimension_numbers = #tpu.dot_dimension_numbers<[1], [0], [0], [1], [0, 0, 1, 1], [], []>} : vector<2x84xbf16>, vector<84x10xbf16>, vector<2x10xf32> -> vector<2x10xf32>
    %c0_118 = arith.constant 0 : index
    %c0_119 = arith.constant 0 : index
    %143 = vector.load %arg8[%c0_118, %c0_119] : memref<1x10xf32, #tpu.memory_space<vmem>>, vector<1x10xf32>
    %144 = vector.broadcast %143 : vector<1x10xf32> to vector<2x10xf32>
    %145 = arith.addf %142, %144 : vector<2x10xf32>
    %c0_120 = arith.constant 0 : index
    %c0_121 = arith.constant 0 : index
    %146 = vector.load %arg9[%c0_120, %c0_121] : memref<2x10xf32, #tpu.memory_space<vmem>>, vector<2x10xf32>
    tpu.vector_store %arg9[%c0_120, %c0_121], %145 {strides = array<i32>} : memref<2x10xf32, #tpu.memory_space<vmem>>, vector<2x10xf32>,
    return
  }
}

</mosaic_0001>

<llo_original>
// kernel: net_forward.2
$region0: #{net_forward.2}
  #allocation0 [shape = 'u32[]', space=smem, size = 0x4, offset = 0x4, fixed_abs, tag = 'smem constant byte address 0x4 - core index']
  #allocation1 [shape = 'u32[144,128]{1,0:T(1,128)}', space=vmem, size = 0x12000, scoped, tag = 'internal scratch']
  %s0 = inlined_call_operand.vmem [shape: bf16[4,392,75], index: 0, kind: input, shape index: {}]
  %s1 = inlined_call_operand.vmem [shape: bf16[75,6], index: 1, kind: input, shape index: {}]
  %s2 = inlined_call_operand.vmem [shape: f32[1,6], index: 2, kind: input, shape index: {}]
  %s3 = inlined_call_operand.vmem [shape: bf16[392,6], index: 3, kind: output, shape index: {}]
  %s4 = sld [smem:[#allocation0]]
  $region22: #{net_forward.2} parent=0
    _
  %s6 = ssub.s32 1, %s4
  %s7 = scalar_select 0, %s6, %s4
  // Predicated region
  $region2: #{net_forward.2} parent=0 // pred_check
    _
  $region3: #{net_forward.2} parent=0 // pred_check_branch
    %9 = sbr.rel (0) target = $region5
  $region4: #{net_forward.2} parent=0 // pred_region
    _
  $region5: #{net_forward.2} parent=0 // pred_fallthru
    _
  // Predicated region
  $region6: #{net_forward.2} parent=0 // pred_check
    _
  $region7: #{net_forward.2} parent=0 // pred_check_branch
    %11 = sbr.rel (0) target = $region9
  $region8: #{net_forward.2} parent=0 // pred_region
    _
  $region9: #{net_forward.2} parent=0 // pred_fallthru
    _
  // Predicated region
  $region10: #{net_forward.2} parent=0 // pred_check
    _
  $region11: #{net_forward.2} parent=0 // pred_check_branch
    %13 = sbr.rel (0) target = $region13
  $region12: #{net_forward.2} parent=0 // pred_region
    _
  $region13: #{net_forward.2} parent=0 // pred_fallthru
    _
  %v15 = vld [vmem:[%s0] sm:$0xf]
  %v16 = vld [vmem:[%s0 + $0x4] sm:$0xf]
  %v17 = vld [vmem:[%s0 + $0x8] sm:$0xf]
  %v18 = vld [vmem:[%s0 + $0xc] sm:$0xf]
  %v19 = vld [vmem:[%s0 + $0x10] sm:$0xf]
  %v20 = vld [vmem:[%s0 + $0x14] sm:$0xf]
  %v21 = vld [vmem:[%s0 + $0x18] sm:$0xf]
  %v22 = vld [vmem:[%s0 + $0x1c] sm:$0xf]
  %v23 = vld [vmem:[%s0 + $0x20] sm:$0xf]
  %v24 = vld [vmem:[%s0 + $0x24] sm:$0xf]
  %v25 = vld [vmem:[%s0 + $0x28] sm:$0xf]
  %v26 = vld [vmem:[%s0 + $0x2c] sm:$0xf]
  %v27 = vld [vmem:[%s0 + $0x30] sm:$0xf]
  %v28 = vld [vmem:[%s0 + $0x34] sm:$0xf]
  %v29 = vld [vmem:[%s0 + $0x38] sm:$0xf]
  %v30 = vld [vmem:[%s0 + $0x3c] sm:$0xf]
  %v31 = vld [vmem:[%s0 + $0x40] sm:$0xf]
  %v32 = vld [vmem:[%s0 + $0x44] sm:$0xf]
  %v33 = vld [vmem:[%s0 + $0x48] sm:$0xf]
  %v34 = vld [vmem:[%s0 + $0x4c] sm:$0xf]
  %v35 = vld [vmem:[%s0 + $0x50] sm:$0xf]
  %v36 = vld [vmem:[%s0 + $0x54] sm:$0xf]
  %v37 = vld [vmem:[%s0 + $0x58] sm:$0xf]
  %v38 = vld [vmem:[%s0 + $0x5c] sm:$0xf]
  %v39 = vld [vmem:[%s0 + $0x60] sm:$0xf]
  %v40 = vld [vmem:[%s0 + $0x64] sm:$0xf]
  %v41 = vld [vmem:[%s0 + $0x68] sm:$0xf]
  %v42 = vld [vmem:[%s0 + $0x6c] sm:$0xf]
  %v43 = vld [vmem:[%s0 + $0x70] sm:$0xf]
  %v44 = vld [vmem:[%s0 + $0x74] sm:$0xf]
  %v45 = vld [vmem:[%s0 + $0x78] sm:$0xf]
  %v46 = vld [vmem:[%s0 + $0x7c] sm:$0xf]
  %v47 = vld [vmem:[%s0 + $0x80] sm:$0xf]
  %v48 = vld [vmem:[%s0 + $0x84] sm:$0xf]
  %v49 = vld [vmem:[%s0 + $0x88] sm:$0xf]
  %v50 = vld [vmem:[%s0 + $0x8c] sm:$0xf]
  %v51 = vld [vmem:[%s0 + $0x90] sm:$0xf]
  %v52 = vld [vmem:[%s0 + $0x94] sm:$0xf]
  %v53 = vld [vmem:[%s0 + $0x98] sm:$0xf]
  %v54 = vld [vmem:[%s0 + $0x9c] sm:$0xf]
  %v55 = vld [vmem:[%s0 + $0xa0] sm:$0xf]
  %v56 = vld [vmem:[%s0 + $0xa4] sm:$0xf]
  %v57 = vld [vmem:[%s0 + $0xa8] sm:$0xf]
  %v58 = vld [vmem:[%s0 + $0xac] sm:$0xf]
  %v59 = vld [vmem:[%s0 + $0xb0] sm:$0xf]
  %v60 = vld [vmem:[%s0 + $0xb4] sm:$0xf]
  %v61 = vld [vmem:[%s0 + $0xb8] sm:$0xf]
  %v62 = vld [vmem:[%s0 + $0xbc] sm:$0xf]
  %v63 = vld [vmem:[%s0 + $0xc0] sm:$0xf]
  %v64 = vld [vmem:[%s1] sm:$0xf]
  %v65 = vld [vmem:[%s1 + $0x4] sm:$0xf]
  %v66 = vld [vmem:[%s1 + $0x8] sm:$0xf]
  %v67 = vld [vmem:[%s1 + $0xc] sm:$0xf]
  %v68 = vld [vmem:[%s1 + $0x10] sm:$0xf]
  %v69 = vld [vmem:[%s1 + $0x14] sm:$0xf]
  %v70 = vld [vmem:[%s1 + $0x18] sm:$0xf]
  %v71 = vld [vmem:[%s1 + $0x1c] sm:$0xf]
  %v72 = vld [vmem:[%s1 + $0x20] sm:$0xf]
  %v73 = vld [vmem:[%s1 + $0x24] sm:$0x3]
  %v123 = vunpack.c.l.b16 %v15
  %v124 = vunpack.c.l.b16 %v16
  %v125 = vunpack.c.l.b16 %v17
  %v126 = vunpack.c.l.b16 %v18
  %v127 = vunpack.c.l.b16 %v19
  %v128 = vunpack.c.l.b16 %v20
  %v129 = vunpack.c.l.b16 %v21
  %v130 = vunpack.c.l.b16 %v22
  %v131 = vunpack.c.l.b16 %v23
  %v132 = vunpack.c.l.b16 %v24
  %v133 = vunpack.c.l.b16 %v25
  %v134 = vunpack.c.l.b16 %v26
  %v135 = vunpack.c.l.b16 %v27
  %v136 = vunpack.c.l.b16 %v28
  %v137 = vunpack.c.l.b16 %v29
  %v138 = vunpack.c.l.b16 %v30
  %v139 = vunpack.c.l.b16 %v31
  %v140 = vunpack.c.l.b16 %v32
  %v141 = vunpack.c.l.b16 %v33
  %v142 = vunpack.c.l.b16 %v34
  %v143 = vunpack.c.l.b16 %v35
  %v144 = vunpack.c.l.b16 %v36
  %v145 = vunpack.c.l.b16 %v37
  %v146 = vunpack.c.l.b16 %v38
  %v147 = vunpack.c.l.b16 %v39
  %v148 = vunpack.c.l.b16 %v40
  %v149 = vunpack.c.l.b16 %v41
  %v150 = vunpack.c.l.b16 %v42
  %v151 = vunpack.c.l.b16 %v43
  %v152 = vunpack.c.l.b16 %v44
  %v153 = vunpack.c.l.b16 %v45
  %v154 = vunpack.c.l.b16 %v46
  %v155 = vunpack.c.l.b16 %v47
  %v156 = vunpack.c.l.b16 %v48
  %v157 = vunpack.c.l.b16 %v49
  %v158 = vunpack.c.l.b16 %v50
  %v159 = vunpack.c.l.b16 %v51
  %v160 = vunpack.c.l.b16 %v52
  %v161 = vunpack.c.l.b16 %v53
  %v162 = vunpack.c.l.b16 %v54
  %v163 = vunpack.c.l.b16 %v55
  %v164 = vunpack.c.l.b16 %v56
  %v165 = vunpack.c.l.b16 %v57
  %v166 = vunpack.c.l.b16 %v58
  %v167 = vunpack.c.l.b16 %v59
  %v168 = vunpack.c.l.b16 %v60
  %v169 = vunpack.c.l.b16 %v61
  %v170 = vunpack.c.l.b16 %v62
  %v171 = vunpack.c.l.b16 %v63
  %v172 = vpack.c.b16 %v124, %v123
  %v173 = vpack.c.b16 %v126, %v125
  %v174 = vpack.c.b16 %v128, %v127
  %v175 = vpack.c.b16 %v130, %v129
  %v176 = vpack.c.b16 %v132, %v131
  %v177 = vpack.c.b16 %v134, %v133
  %v178 = vpack.c.b16 %v136, %v135
  %v179 = vpack.c.b16 %v138, %v137
  %v180 = vpack.c.b16 %v140, %v139
  %v181 = vpack.c.b16 %v142, %v141
  %v182 = vpack.c.b16 %v144, %v143
  %v183 = vpack.c.b16 %v146, %v145
  %v184 = vpack.c.b16 %v148, %v147
  %v185 = vpack.c.b16 %v150, %v149
  %v186 = vpack.c.b16 %v152, %v151
  %v187 = vpack.c.b16 %v154, %v153
  %v188 = vpack.c.b16 %v156, %v155
  %v189 = vpack.c.b16 %v158, %v157
  %v190 = vpack.c.b16 %v160, %v159
  %v191 = vpack.c.b16 %v162, %v161
  %v192 = vpack.c.b16 %v164, %v163
  %v193 = vpack.c.b16 %v166, %v165
  %v194 = vpack.c.b16 %v168, %v167
  %v195 = vpack.c.b16 %v170, %v169
  %v196 = vpack.c.b16 %v171, %v171
  %v207 = vunpack.c.l.b16 %v64
  %v208 = vunpack.c.l.b16 %v65
  %v209 = vunpack.c.l.b16 %v66
  %v210 = vunpack.c.l.b16 %v67
  %v211 = vunpack.c.l.b16 %v68
  %v212 = vunpack.c.l.b16 %v69
  %v213 = vunpack.c.l.b16 %v70
  %v214 = vunpack.c.l.b16 %v71
  %v215 = vunpack.c.l.b16 %v72
  %v216 = vunpack.c.l.b16 %v73
  %v217 = vpack.c.b16 %v208, %v207
  %v218 = vpack.c.b16 %v210, %v209
  %v219 = vpack.c.b16 %v212, %v211
  %v220 = vpack.c.b16 %v214, %v213
  %v221 = vpack.c.b16 %v216, %v215
  %vm226 = vcmask 613376
  %v228 = vsel %vm226, %v172, 0
  %v231 = vsel %vm226, %v173, 0
  %v234 = vsel %vm226, %v174, 0
  %v237 = vsel %vm226, %v175, 0
  %v240 = vsel %vm226, %v176, 0
  %v243 = vsel %vm226, %v177, 0
  %v246 = vsel %vm226, %v178, 0
  %v249 = vsel %vm226, %v179, 0
  %v252 = vsel %vm226, %v180, 0
  %v255 = vsel %vm226, %v181, 0
  %v258 = vsel %vm226, %v182, 0
  %v261 = vsel %vm226, %v183, 0
  %v264 = vsel %vm226, %v184, 0
  %v267 = vsel %vm226, %v185, 0
  %v270 = vsel %vm226, %v186, 0
  %v273 = vsel %vm226, %v187, 0
  %v276 = vsel %vm226, %v188, 0
  %v279 = vsel %vm226, %v189, 0
  %v282 = vsel %vm226, %v190, 0
  %v285 = vsel %vm226, %v191, 0
  %v288 = vsel %vm226, %v192, 0
  %v291 = vsel %vm226, %v193, 0
  %v294 = vsel %vm226, %v194, 0
  %v297 = vsel %vm226, %v195, 0
  %v300 = vsel %vm226, %v196, 0
  %vm302 = vcmask 1044480
  %vm303 = vcmask 1045504
  %v304 = vsel %vm302, 4294967295, 65535
  %v305 = vsel %vm303, %v304, 0
  %v307 = vand.u32 %v221, %v305
  %309 = vmatprep.subr.bf16.mxu0 0
  %310 = vmatpush1.bf16.msra.mxu0 %v217
  %311 = vmatprep.subr.bf16.mxu0 0
  %312 = vmatpush1.bf16.msra.mxu0 %v218
  %313 = vmatprep.subr.bf16.mxu0 0
  %314 = vmatpush1.bf16.msra.mxu0 %v219
  %315 = vmatprep.subr.bf16.mxu0 0
  %316 = vmatpush1.bf16.msra.mxu0 %v220
  %317 = vmatprep.subr.bf16.mxu0 0
  %318 = vmatpush1.bf16.msra.mxu0 %v307
  %319 = vmatprep.subr.bf16.mxu0 0
  %320 = vmatpush1.bf16.msra.mxu0 0
  %321 = vmatprep.subr.bf16.mxu0 0
  %322 = vmatpush1.bf16.msra.mxu0 0
  %323 = vmatprep.subr.bf16.mxu0 0
  %324 = vmatpush1.bf16.msra.mxu0 0
  %325 = vmatprep.subr.bf16.mxu0 0
  %326 = vmatpush1.bf16.msra.mxu0 0
  %327 = vmatprep.subr.bf16.mxu0 0
  %328 = vmatpush1.bf16.msra.mxu0 0
  %329 = vmatprep.subr.bf16.mxu0 0
  %330 = vmatpush1.bf16.msra.mxu0 0
  %331 = vmatprep.subr.bf16.mxu0 0
  %332 = vmatpush1.bf16.msra.mxu0 0
  %333 = vmatprep.subr.bf16.mxu0 0
  %334 = vmatpush1.bf16.msra.mxu0 0
  %335 = vmatprep.subr.bf16.mxu0 0
  %336 = vmatpush1.bf16.msra.mxu0 0
  %337 = vmatprep.subr.bf16.mxu0 0
  %338 = vmatpush1.bf16.msra.mxu0 0
  %339 = vmatprep.subr.bf16.mxu0 0
  %340 = vmatpush1.bf16.msra.mxu0 0
  %341 = vmatprep.mubr.bf16.mxu0 0
  %342 = vmatmul.mubr.bf16.gmra.mrb[0].mxu0 %v228
  %v343 = vpop.f32.mrb[0].mxu0
  %v344 = vadd.f32 0.0, %v343
  %v345 = vpop.f32.mrb[0].mxu0
  %v346 = vpop.f32.mrb[0].mxu0
  %v347 = vadd.f32 0.0, %v346
  %v348 = vpop.f32.mrb[0].mxu0
  %349 = vmatprep.mubr.bf16.mxu0 0
  %350 = vmatmul.mubr.bf16.gmra.mrb[0].mxu0 %v231
  %v351 = vpop.f32.mrb[0].mxu0
  %v352 = vadd.f32 0.0, %v351
  %v353 = vpop.f32.mrb[0].mxu0
  %v354 = vpop.f32.mrb[0].mxu0
  %v355 = vadd.f32 0.0, %v354
  %v356 = vpop.f32.mrb[0].mxu0
  %357 = vmatprep.mubr.bf16.mxu0 0
  %358 = vmatmul.mubr.bf16.gmra.mrb[0].mxu0 %v234
  %v359 = vpop.f32.mrb[0].mxu0
  %v360 = vadd.f32 0.0, %v359
  %v361 = vpop.f32.mrb[0].mxu0
  %v362 = vpop.f32.mrb[0].mxu0
  %v363 = vadd.f32 0.0, %v362
  %v364 = vpop.f32.mrb[0].mxu0
  %365 = vmatprep.mubr.bf16.mxu0 0
  %366 = vmatmul.mubr.bf16.gmra.mrb[0].mxu0 %v237
  %v367 = vpop.f32.mrb[0].mxu0
  %v368 = vadd.f32 0.0, %v367
  %v369 = vpop.f32.mrb[0].mxu0
  %v370 = vpop.f32.mrb[0].mxu0
  %v371 = vadd.f32 0.0, %v370
  %v372 = vpop.f32.mrb[0].mxu0
  %373 = vmatprep.mubr.bf16.mxu0 0
  %374 = vmatmul.mubr.bf16.gmra.mrb[0].mxu0 %v240
  %v375 = vpop.f32.mrb[0].mxu0
  %v376 = vadd.f32 0.0, %v375
  %v377 = vpop.f32.mrb[0].mxu0
  %v378 = vpop.f32.mrb[0].mxu0
  %v379 = vadd.f32 0.0, %v378
  %v380 = vpop.f32.mrb[0].mxu0
  %381 = vmatprep.mubr.bf16.mxu0 0
  %382 = vmatmul.mubr.bf16.gmra.mrb[0].mxu0 %v243
  %v383 = vpop.f32.mrb[0].mxu0
  %v384 = vadd.f32 0.0, %v383
  %v385 = vpop.f32.mrb[0].mxu0
  %v386 = vpop.f32.mrb[0].mxu0
  %v387 = vadd.f32 0.0, %v386
  %v388 = vpop.f32.mrb[0].mxu0
  %389 = vmatprep.mubr.bf16.mxu0 0
  %390 = vmatmul.mubr.bf16.gmra.mrb[0].mxu0 %v246
  %v391 = vpop.f32.mrb[0].mxu0
  %v392 = vadd.f32 0.0, %v391
  %v393 = vpop.f32.mrb[0].mxu0
  %v394 = vpop.f32.mrb[0].mxu0
  %v395 = vadd.f32 0.0, %v394
  %v396 = vpop.f32.mrb[0].mxu0
  %397 = vmatprep.mubr.bf16.mxu0 0
  %398 = vmatmul.mubr.bf16.gmra.mrb[0].mxu0 %v249
  %v399 = vpop.f32.mrb[0].mxu0
  %v400 = vadd.f32 0.0, %v399
  %v401 = vpop.f32.mrb[0].mxu0
  %v402 = vpop.f32.mrb[0].mxu0
  %v403 = vadd.f32 0.0, %v402
  %v404 = vpop.f32.mrb[0].mxu0
  %405 = vmatprep.mubr.bf16.mxu0 0
  %406 = vmatmul.mubr.bf16.gmra.mrb[0].mxu0 %v252
  %v407 = vpop.f32.mrb[0].mxu0
  %v408 = vadd.f32 0.0, %v407
  %v409 = vpop.f32.mrb[0].mxu0
  %v410 = vpop.f32.mrb[0].mxu0
  %v411 = vadd.f32 0.0, %v410
  %v412 = vpop.f32.mrb[0].mxu0
  %413 = vmatprep.mubr.bf16.mxu0 0
  %414 = vmatmul.mubr.bf16.gmra.mrb[0].mxu0 %v255
  %v415 = vpop.f32.mrb[0].mxu0
  %v416 = vadd.f32 0.0, %v415
  %v417 = vpop.f32.mrb[0].mxu0
  %v418 = vpop.f32.mrb[0].mxu0
  %v419 = vadd.f32 0.0, %v418
  %v420 = vpop.f32.mrb[0].mxu0
  %421 = vmatprep.mubr.bf16.mxu0 0
  %422 = vmatmul.mubr.bf16.gmra.mrb[0].mxu0 %v258
  %v423 = vpop.f32.mrb[0].mxu0
  %v424 = vadd.f32 0.0, %v423
  %v425 = vpop.f32.mrb[0].mxu0
  %v426 = vpop.f32.mrb[0].mxu0
  %v427 = vadd.f32 0.0, %v426
  %v428 = vpop.f32.mrb[0].mxu0
  %429 = vmatprep.mubr.bf16.mxu0 0
  %430 = vmatmul.mubr.bf16.gmra.mrb[0].mxu0 %v261
  %v431 = vpop.f32.mrb[0].mxu0
  %v432 = vadd.f32 0.0, %v431
  %v433 = vpop.f32.mrb[0].mxu0
  %v434 = vpop.f32.mrb[0].mxu0
  %v435 = vadd.f32 0.0, %v434
  %v436 = vpop.f32.mrb[0].mxu0
  %437 = vmatprep.mubr.bf16.mxu0 0
  %438 = vmatmul.mubr.bf16.gmra.mrb[0].mxu0 %v264
  %v439 = vpop.f32.mrb[0].mxu0
  %v440 = vadd.f32 0.0, %v439
  %v441 = vpop.f32.mrb[0].mxu0
  %v442 = vpop.f32.mrb[0].mxu0
  %v443 = vadd.f32 0.0, %v442
  %v444 = vpop.f32.mrb[0].mxu0
  %445 = vmatprep.mubr.bf16.mxu0 0
  %446 = vmatmul.mubr.bf16.gmra.mrb[0].mxu0 %v267
  %v447 = vpop.f32.mrb[0].mxu0
  %v448 = vadd.f32 0.0, %v447
  %v449 = vpop.f32.mrb[0].mxu0
  %v450 = vpop.f32.mrb[0].mxu0
  %v451 = vadd.f32 0.0, %v450
  %v452 = vpop.f32.mrb[0].mxu0
  %453 = vmatprep.mubr.bf16.mxu0 0
  %454 = vmatmul.mubr.bf16.gmra.mrb[0].mxu0 %v270
  %v455 = vpop.f32.mrb[0].mxu0
  %v456 = vadd.f32 0.0, %v455
  %v457 = vpop.f32.mrb[0].mxu0
  %v458 = vpop.f32.mrb[0].mxu0
  %v459 = vadd.f32 0.0, %v458
  %v460 = vpop.f32.mrb[0].mxu0
  %461 = vmatprep.mubr.bf16.mxu0 0
  %462 = vmatmul.mubr.bf16.gmra.mrb[0].mxu0 %v273
  %v463 = vpop.f32.mrb[0].mxu0
  %v464 = vadd.f32 0.0, %v463
  %v465 = vpop.f32.mrb[0].mxu0
  %v466 = vpop.f32.mrb[0].mxu0
  %v467 = vadd.f32 0.0, %v466
  %v468 = vpop.f32.mrb[0].mxu0
  %469 = vmatprep.mubr.bf16.mxu0 0
  %470 = vmatmul.mubr.bf16.gmra.mrb[0].mxu0 %v276
  %v471 = vpop.f32.mrb[0].mxu0
  %v472 = vadd.f32 0.0, %v471
  %v473 = vpop.f32.mrb[0].mxu0
  %v474 = vpop.f32.mrb[0].mxu0
  %v475 = vadd.f32 0.0, %v474
  %v476 = vpop.f32.mrb[0].mxu0
  %477 = vmatprep.mubr.bf16.mxu0 0
  %478 = vmatmul.mubr.bf16.gmra.mrb[0].mxu0 %v279
  %v479 = vpop.f32.mrb[0].mxu0
  %v480 = vadd.f32 0.0, %v479
  %v481 = vpop.f32.mrb[0].mxu0
  %v482 = vpop.f32.mrb[0].mxu0
  %v483 = vadd.f32 0.0, %v482
  %v484 = vpop.f32.mrb[0].mxu0
  %485 = vmatprep.mubr.bf16.mxu0 0
  %486 = vmatmul.mubr.bf16.gmra.mrb[0].mxu0 %v282
  %v487 = vpop.f32.mrb[0].mxu0
  %v488 = vadd.f32 0.0, %v487
  %v489 = vpop.f32.mrb[0].mxu0
  %v490 = vpop.f32.mrb[0].mxu0
  %v491 = vadd.f32 0.0, %v490
  %v492 = vpop.f32.mrb[0].mxu0
  %493 = vmatprep.mubr.bf16.mxu0 0
  %494 = vmatmul.mubr.bf16.gmra.mrb[0].mxu0 %v285
  %v495 = vpop.f32.mrb[0].mxu0
  %v496 = vadd.f32 0.0, %v495
  %v497 = vpop.f32.mrb[0].mxu0
  %v498 = vpop.f32.mrb[0].mxu0
  %v499 = vadd.f32 0.0, %v498
  %v500 = vpop.f32.mrb[0].mxu0
  %501 = vmatprep.mubr.bf16.mxu0 0
  %502 = vmatmul.mubr.bf16.gmra.mrb[0].mxu0 %v288
  %v503 = vpop.f32.mrb[0].mxu0
  %v504 = vadd.f32 0.0, %v503
  %v505 = vpop.f32.mrb[0].mxu0
  %v506 = vpop.f32.mrb[0].mxu0
  %v507 = vadd.f32 0.0, %v506
  %v508 = vpop.f32.mrb[0].mxu0
  %509 = vmatprep.mubr.bf16.mxu0 0
  %510 = vmatmul.mubr.bf16.gmra.mrb[0].mxu0 %v291
  %v511 = vpop.f32.mrb[0].mxu0
  %v512 = vadd.f32 0.0, %v511
  %v513 = vpop.f32.mrb[0].mxu0
  %v514 = vpop.f32.mrb[0].mxu0
  %v515 = vadd.f32 0.0, %v514
  %v516 = vpop.f32.mrb[0].mxu0
  %517 = vmatprep.mubr.bf16.mxu0 0
  %518 = vmatmul.mubr.bf16.gmra.mrb[0].mxu0 %v294
  %v519 = vpop.f32.mrb[0].mxu0
  %v520 = vadd.f32 0.0, %v519
  %v521 = vpop.f32.mrb[0].mxu0
  %v522 = vpop.f32.mrb[0].mxu0
  %v523 = vadd.f32 0.0, %v522
  %v524 = vpop.f32.mrb[0].mxu0
  %525 = vmatprep.mubr.bf16.mxu0 0
  %526 = vmatmul.mubr.bf16.gmra.mrb[0].mxu0 %v297
  %v527 = vpop.f32.mrb[0].mxu0
  %v528 = vadd.f32 0.0, %v527
  %v529 = vpop.f32.mrb[0].mxu0
  %v530 = vpop.f32.mrb[0].mxu0
  %v531 = vadd.f32 0.0, %v530
  %v532 = vpop.f32.mrb[0].mxu0
  %533 = vmatprep.mubr.bf16.mxu0 0
  %534 = vmatmul.mubr.bf16.gmra.mrb[0].mxu0 %v300
  %v535 = vpop.f32.mrb[0].mxu0
  %v536 = vadd.f32 0.0, %v535
  %v537 = vpop.f32.mrb[0].mxu0
  %v538 = vpop.f32.mrb[0].mxu0
  %v539 = vpop.f32.mrb[0].mxu0
  %540 = vdwg.mxu0
  %s541 = scalar_lea.vmem %s0, 196
  %v542 = vld [vmem:[%s541] sm:$0xf]
  %v543 = vld [vmem:[%s541 + $0x4] sm:$0xf]
  %v544 = vld [vmem:[%s541 + $0x8] sm:$0xf]
  %v545 = vld [vmem:[%s541 + $0xc] sm:$0xf]
  %v546 = vld [vmem:[%s541 + $0x10] sm:$0xf]
  %v547 = vld [vmem:[%s541 + $0x14] sm:$0xf]
  %v548 = vld [vmem:[%s541 + $0x18] sm:$0xf]
  %v549 = vld [vmem:[%s541 + $0x1c] sm:$0xf]
  %v550 = vld [vmem:[%s541 + $0x20] sm:$0xf]
  %v551 = vld [vmem:[%s541 + $0x24] sm:$0xf]
  %v552 = vld [vmem:[%s541 + $0x28] sm:$0xf]
  %v553 = vld [vmem:[%s541 + $0x2c] sm:$0xf]
  %v554 = vld [vmem:[%s541 + $0x30] sm:$0xf]
  %v555 = vld [vmem:[%s541 + $0x34] sm:$0xf]
  %v556 = vld [vmem:[%s541 + $0x38] sm:$0xf]
  %v557 = vld [vmem:[%s541 + $0x3c] sm:$0xf]
  %v558 = vld [vmem:[%s541 + $0x40] sm:$0xf]
  %v559 = vld [vmem:[%s541 + $0x44] sm:$0xf]
  %v560 = vld [vmem:[%s541 + $0x48] sm:$0xf]
  %v561 = vld [vmem:[%s541 + $0x4c] sm:$0xf]
  %v562 = vld [vmem:[%s541 + $0x50] sm:$0xf]
  %v563 = vld [vmem:[%s541 + $0x54] sm:$0xf]
  %v564 = vld [vmem:[%s541 + $0x58] sm:$0xf]
  %v565 = vld [vmem:[%s541 + $0x5c] sm:$0xf]
  %v566 = vld [vmem:[%s541 + $0x60] sm:$0xf]
  %v567 = vld [vmem:[%s541 + $0x64] sm:$0xf]
  %v568 = vld [vmem:[%s541 + $0x68] sm:$0xf]
  %v569 = vld [vmem:[%s541 + $0x6c] sm:$0xf]
  %v570 = vld [vmem:[%s541 + $0x70] sm:$0xf]
  %v571 = vld [vmem:[%s541 + $0x74] sm:$0xf]
  %v572 = vld [vmem:[%s541 + $0x78] sm:$0xf]
  %v573 = vld [vmem:[%s541 + $0x7c] sm:$0xf]
  %v574 = vld [vmem:[%s541 + $0x80] sm:$0xf]
  %v575 = vld [vmem:[%s541 + $0x84] sm:$0xf]
  %v576 = vld [vmem:[%s541 + $0x88] sm:$0xf]
  %v577 = vld [vmem:[%s541 + $0x8c] sm:$0xf]
  %v578 = vld [vmem:[%s541 + $0x90] sm:$0xf]
  %v579 = vld [vmem:[%s541 + $0x94] sm:$0xf]
  %v580 = vld [vmem:[%s541 + $0x98] sm:$0xf]
  %v581 = vld [vmem:[%s541 + $0x9c] sm:$0xf]
  %v582 = vld [vmem:[%s541 + $0xa0] sm:$0xf]
  %v583 = vld [vmem:[%s541 + $0xa4] sm:$0xf]
  %v584 = vld [vmem:[%s541 + $0xa8] sm:$0xf]
  %v585 = vld [vmem:[%s541 + $0xac] sm:$0xf]
  %v586 = vld [vmem:[%s541 + $0xb0] sm:$0xf]
  %v587 = vld [vmem:[%s541 + $0xb4] sm:$0xf]
  %v588 = vld [vmem:[%s541 + $0xb8] sm:$0xf]
  %v589 = vld [vmem:[%s541 + $0xbc] sm:$0xf]
  %v590 = vld [vmem:[%s541 + $0xc0] sm:$0xf]
  %v640 = vunpack.c.l.b16 %v542
  %v641 = vunpack.c.l.b16 %v543
  %v642 = vunpack.c.l.b16 %v544
  %v643 = vunpack.c.l.b16 %v545
  %v644 = vunpack.c.l.b16 %v546
  %v645 = vunpack.c.l.b16 %v547
  %v646 = vunpack.c.l.b16 %v548
  %v647 = vunpack.c.l.b16 %v549
  %v648 = vunpack.c.l.b16 %v550
  %v649 = vunpack.c.l.b16 %v551
  %v650 = vunpack.c.l.b16 %v552
  %v651 = vunpack.c.l.b16 %v553
  %v652 = vunpack.c.l.b16 %v554
  %v653 = vunpack.c.l.b16 %v555
  %v654 = vunpack.c.l.b16 %v556
  %v655 = vunpack.c.l.b16 %v557
  %v656 = vunpack.c.l.b16 %v558
  %v657 = vunpack.c.l.b16 %v559
  %v658 = vunpack.c.l.b16 %v560
  %v659 = vunpack.c.l.b16 %v561
  %v660 = vunpack.c.l.b16 %v562
  %v661 = vunpack.c.l.b16 %v563
  %v662 = vunpack.c.l.b16 %v564
  %v663 = vunpack.c.l.b16 %v565
  %v664 = vunpack.c.l.b16 %v566
  %v665 = vunpack.c.l.b16 %v567
  %v666 = vunpack.c.l.b16 %v568
  %v667 = vunpack.c.l.b16 %v569
  %v668 = vunpack.c.l.b16 %v570
  %v669 = vunpack.c.l.b16 %v571
  %v670 = vunpack.c.l.b16 %v572
  %v671 = vunpack.c.l.b16 %v573
  %v672 = vunpack.c.l.b16 %v574
  %v673 = vunpack.c.l.b16 %v575
  %v674 = vunpack.c.l.b16 %v576
  %v675 = vunpack.c.l.b16 %v577
  %v676 = vunpack.c.l.b16 %v578
  %v677 = vunpack.c.l.b16 %v579
  %v678 = vunpack.c.l.b16 %v580
  %v679 = vunpack.c.l.b16 %v581
  %v680 = vunpack.c.l.b16 %v582
  %v681 = vunpack.c.l.b16 %v583
  %v682 = vunpack.c.l.b16 %v584
  %v683 = vunpack.c.l.b16 %v585
  %v684 = vunpack.c.l.b16 %v586
  %v685 = vunpack.c.l.b16 %v587
  %v686 = vunpack.c.l.b16 %v588
  %v687 = vunpack.c.l.b16 %v589
  %v688 = vunpack.c.l.b16 %v590
  %v689 = vpack.c.b16 %v641, %v640
  %v690 = vpack.c.b16 %v643, %v642
  %v691 = vpack.c.b16 %v645, %v644
  %v692 = vpack.c.b16 %v647, %v646
  %v693 = vpack.c.b16 %v649, %v648
  %v694 = vpack.c.b16 %v651, %v650
  %v695 = vpack.c.b16 %v653, %v652
  %v696 = vpack.c.b16 %v655, %v654
  %v697 = vpack.c.b16 %v657, %v656
  %v698 = vpack.c.b16 %v659, %v658
  %v699 = vpack.c.b16 %v661, %v660
  %v700 = vpack.c.b16 %v663, %v662
  %v701 = vpack.c.b16 %v665, %v664
  %v702 = vpack.c.b16 %v667, %v666
  %v703 = vpack.c.b16 %v669, %v668
  %v704 = vpack.c.b16 %v671, %v670
  %v705 = vpack.c.b16 %v673, %v672
  %v706 = vpack.c.b16 %v675, %v674
  %v707 = vpack.c.b16 %v677, %v676
  %v708 = vpack.c.b16 %v679, %v678
  %v709 = vpack.c.b16 %v681, %v680
  %v710 = vpack.c.b16 %v683, %v682
  %v711 = vpack.c.b16 %v685, %v684
  %v712 = vpack.c.b16 %v687, %v686
  %v713 = vpack.c.b16 %v688, %v688
  %v715 = vsel %vm226, %v689, 0
  %v718 = vsel %vm226, %v690, 0
  %v721 = vsel %vm226, %v691, 0
  %v724 = vsel %vm226, %v692, 0
  %v727 = vsel %vm226, %v693, 0
  %v730 = vsel %vm226, %v694, 0
  %v733 = vsel %vm226, %v695, 0
  %v736 = vsel %vm226, %v696, 0
  %v739 = vsel %vm226, %v697, 0
  %v742 = vsel %vm226, %v698, 0
  %v745 = vsel %vm226, %v699, 0
  %v748 = vsel %vm226, %v700, 0
  %v751 = vsel %vm226, %v701, 0
  %v754 = vsel %vm226, %v702, 0
  %v757 = vsel %vm226, %v703, 0
  %v760 = vsel %vm226, %v704, 0
  %v763 = vsel %vm226, %v705, 0
  %v766 = vsel %vm226, %v706, 0
  %v769 = vsel %vm226, %v707, 0
  %v772 = vsel %vm226, %v708, 0
  %v775 = vsel %vm226, %v709, 0
  %v778 = vsel %vm226, %v710, 0
  %v781 = vsel %vm226, %v711, 0
  %v784 = vsel %vm226, %v712, 0
  %v787 = vsel %vm226, %v713, 0
  %789 = vmatprep.subr.bf16.mxu0 0
  %790 = vmatpush1.bf16.msra.mxu0 %v217
  %791 = vmatprep.subr.bf16.mxu0 0
  %792 = vmatpush1.bf16.msra.mxu0 %v218
  %793 = vmatprep.subr.bf16.mxu0 0
  %794 = vmatpush1.bf16.msra.mxu0 %v219
  %795 = vmatprep.subr.bf16.mxu0 0
  %796 = vmatpush1.bf16.msra.mxu0 %v220
  %797 = vmatprep.subr.bf16.mxu0 0
  %798 = vmatpush1.bf16.msra.mxu0 %v307
  %799 = vmatprep.subr.bf16.mxu0 0
  %800 = vmatpush1.bf16.msra.mxu0 0
  %801 = vmatprep.subr.bf16.mxu0 0
  %802 = vmatpush1.bf16.msra.mxu0 0
  %803 = vmatprep.subr.bf16.mxu0 0
  %804 = vmatpush1.bf16.msra.mxu0 0
  %805 = vmatprep.subr.bf16.mxu0 0
  %806 = vmatpush1.bf16.msra.mxu0 0
  %807 = vmatprep.subr.bf16.mxu0 0
  %808 = vmatpush1.bf16.msra.mxu0 0
  %809 = vmatprep.subr.bf16.mxu0 0
  %810 = vmatpush1.bf16.msra.mxu0 0
  %811 = vmatprep.subr.bf16.mxu0 0
  %812 = vmatpush1.bf16.msra.mxu0 0
  %813 = vmatprep.subr.bf16.mxu0 0
  %814 = vmatpush1.bf16.msra.mxu0 0
  %815 = vmatprep.subr.bf16.mxu0 0
  %816 = vmatpush1.bf16.msra.mxu0 0
  %817 = vmatprep.subr.bf16.mxu0 0
  %818 = vmatpush1.bf16.msra.mxu0 0
  %819 = vmatprep.subr.bf16.mxu0 0
  %820 = vmatpush1.bf16.msra.mxu0 0
  %821 = vmatprep.mubr.bf16.mxu0 0
  %822 = vmatmul.mubr.bf16.gmra.mrb[0].mxu0 %v715
  %v823 = vpop.f32.mrb[0].mxu0
  %v824 = vadd.f32 0.0, %v823
  %v825 = vpop.f32.mrb[0].mxu0
  %v826 = vpop.f32.mrb[0].mxu0
  %v827 = vadd.f32 0.0, %v826
  %v828 = vpop.f32.mrb[0].mxu0
  %829 = vmatprep.mubr.bf16.mxu0 0
  %830 = vmatmul.mubr.bf16.gmra.mrb[0].mxu0 %v718
  %v831 = vpop.f32.mrb[0].mxu0
  %v832 = vadd.f32 0.0, %v831
  %v833 = vpop.f32.mrb[0].mxu0
  %v834 = vpop.f32.mrb[0].mxu0
  %v835 = vadd.f32 0.0, %v834
  %v836 = vpop.f32.mrb[0].mxu0
  %837 = vmatprep.mubr.bf16.mxu0 0
  %838 = vmatmul.mubr.bf16.gmra.mrb[0].mxu0 %v721
  %v839 = vpop.f32.mrb[0].mxu0
  %v840 = vadd.f32 0.0, %v839
  %v841 = vpop.f32.mrb[0].mxu0
  %v842 = vpop.f32.mrb[0].mxu0
  %v843 = vadd.f32 0.0, %v842
  %v844 = vpop.f32.mrb[0].mxu0
  %845 = vmatprep.mubr.bf16.mxu0 0
  %846 = vmatmul.mubr.bf16.gmra.mrb[0].mxu0 %v724
  %v847 = vpop.f32.mrb[0].mxu0
  %v848 = vadd.f32 0.0, %v847
  %v849 = vpop.f32.mrb[0].mxu0
  %v850 = vpop.f32.mrb[0].mxu0
  %v851 = vadd.f32 0.0, %v850
  %v852 = vpop.f32.mrb[0].mxu0
  %853 = vmatprep.mubr.bf16.mxu0 0
  %854 = vmatmul.mubr.bf16.gmra.mrb[0].mxu0 %v727
  %v855 = vpop.f32.mrb[0].mxu0
  %v856 = vadd.f32 0.0, %v855
  %v857 = vpop.f32.mrb[0].mxu0
  %v858 = vpop.f32.mrb[0].mxu0
  %v859 = vadd.f32 0.0, %v858
  %v860 = vpop.f32.mrb[0].mxu0
  %861 = vmatprep.mubr.bf16.mxu0 0
  %862 = vmatmul.mubr.bf16.gmra.mrb[0].mxu0 %v730
  %v863 = vpop.f32.mrb[0].mxu0
  %v864 = vadd.f32 0.0, %v863
  %v865 = vpop.f32.mrb[0].mxu0
  %v866 = vpop.f32.mrb[0].mxu0
  %v867 = vadd.f32 0.0, %v866
  %v868 = vpop.f32.mrb[0].mxu0
  %869 = vmatprep.mubr.bf16.mxu0 0
  %870 = vmatmul.mubr.bf16.gmra.mrb[0].mxu0 %v733
  %v871 = vpop.f32.mrb[0].mxu0
  %v872 = vadd.f32 0.0, %v871
  %v873 = vpop.f32.mrb[0].mxu0
  %v874 = vpop.f32.mrb[0].mxu0
  %v875 = vadd.f32 0.0, %v874
  %v876 = vpop.f32.mrb[0].mxu0
  %877 = vmatprep.mubr.bf16.mxu0 0
  %878 = vmatmul.mubr.bf16.gmra.mrb[0].mxu0 %v736
  %v879 = vpop.f32.mrb[0].mxu0
  %v880 = vadd.f32 0.0, %v879
  %v881 = vpop.f32.mrb[0].mxu0
  %v882 = vpop.f32.mrb[0].mxu0
  %v883 = vadd.f32 0.0, %v882
  %v884 = vpop.f32.mrb[0].mxu0
  %885 = vmatprep.mubr.bf16.mxu0 0
  %886 = vmatmul.mubr.bf16.gmra.mrb[0].mxu0 %v739
  %v887 = vpop.f32.mrb[0].mxu0
  %v888 = vadd.f32 0.0, %v887
  %v889 = vpop.f32.mrb[0].mxu0
  %v890 = vpop.f32.mrb[0].mxu0
  %v891 = vadd.f32 0.0, %v890
  %v892 = vpop.f32.mrb[0].mxu0
  %893 = vmatprep.mubr.bf16.mxu0 0
  %894 = vmatmul.mubr.bf16.gmra.mrb[0].mxu0 %v742
  %v895 = vpop.f32.mrb[0].mxu0
  %v896 = vadd.f32 0.0, %v895
  %v897 = vpop.f32.mrb[0].mxu0
  %v898 = vpop.f32.mrb[0].mxu0
  %v899 = vadd.f32 0.0, %v898
  %v900 = vpop.f32.mrb[0].mxu0
  %901 = vmatprep.mubr.bf16.mxu0 0
  %902 = vmatmul.mubr.bf16.gmra.mrb[0].mxu0 %v745
  %v903 = vpop.f32.mrb[0].mxu0
  %v904 = vadd.f32 0.0, %v903
  %v905 = vpop.f32.mrb[0].mxu0
  %v906 = vpop.f32.mrb[0].mxu0
  %v907 = vadd.f32 0.0, %v906
  %v908 = vpop.f32.mrb[0].mxu0
  %909 = vmatprep.mubr.bf16.mxu0 0
  %910 = vmatmul.mubr.bf16.gmra.mrb[0].mxu0 %v748
  %v911 = vpop.f32.mrb[0].mxu0
  %v912 = vadd.f32 0.0, %v911
  %v913 = vpop.f32.mrb[0].mxu0
  %v914 = vpop.f32.mrb[0].mxu0
  %v915 = vadd.f32 0.0, %v914
  %v916 = vpop.f32.mrb[0].mxu0
  %917 = vmatprep.mubr.bf16.mxu0 0
  %918 = vmatmul.mubr.bf16.gmra.mrb[0].mxu0 %v751
  %v919 = vpop.f32.mrb[0].mxu0
  %v920 = vadd.f32 0.0, %v919
  %v921 = vpop.f32.mrb[0].mxu0
  %v922 = vpop.f32.mrb[0].mxu0
  %v923 = vadd.f32 0.0, %v922
  %v924 = vpop.f32.mrb[0].mxu0
  %925 = vmatprep.mubr.bf16.mxu0 0
  %926 = vmatmul.mubr.bf16.gmra.mrb[0].mxu0 %v754
  %v927 = vpop.f32.mrb[0].mxu0
  %v928 = vadd.f32 0.0, %v927
  %v929 = vpop.f32.mrb[0].mxu0
  %v930 = vpop.f32.mrb[0].mxu0
  %v931 = vadd.f32 0.0, %v930
  %v932 = vpop.f32.mrb[0].mxu0
  %933 = vmatprep.mubr.bf16.mxu0 0
  %934 = vmatmul.mubr.bf16.gmra.mrb[0].mxu0 %v757
  %v935 = vpop.f32.mrb[0].mxu0
  %v936 = vadd.f32 0.0, %v935
  %v937 = vpop.f32.mrb[0].mxu0
  %v938 = vpop.f32.mrb[0].mxu0
  %v939 = vadd.f32 0.0, %v938
  %v940 = vpop.f32.mrb[0].mxu0
  %941 = vmatprep.mubr.bf16.mxu0 0
  %942 = vmatmul.mubr.bf16.gmra.mrb[0].mxu0 %v760
  %v943 = vpop.f32.mrb[0].mxu0
  %v944 = vadd.f32 0.0, %v943
  %v945 = vpop.f32.mrb[0].mxu0
  %v946 = vpop.f32.mrb[0].mxu0
  %v947 = vadd.f32 0.0, %v946
  %v948 = vpop.f32.mrb[0].mxu0
  %949 = vmatprep.mubr.bf16.mxu0 0
  %950 = vmatmul.mubr.bf16.gmra.mrb[0].mxu0 %v763
  %v951 = vpop.f32.mrb[0].mxu0
  %v952 = vadd.f32 0.0, %v951
  %v953 = vpop.f32.mrb[0].mxu0
  %v954 = vpop.f32.mrb[0].mxu0
  %v955 = vadd.f32 0.0, %v954
  %v956 = vpop.f32.mrb[0].mxu0
  %957 = vmatprep.mubr.bf16.mxu0 0
  %958 = vmatmul.mubr.bf16.gmra.mrb[0].mxu0 %v766
  %v959 = vpop.f32.mrb[0].mxu0
  %v960 = vadd.f32 0.0, %v959
  %v961 = vpop.f32.mrb[0].mxu0
  %v962 = vpop.f32.mrb[0].mxu0
  %v963 = vadd.f32 0.0, %v962
  %v964 = vpop.f32.mrb[0].mxu0
  %965 = vmatprep.mubr.bf16.mxu0 0
  %966 = vmatmul.mubr.bf16.gmra.mrb[0].mxu0 %v769
  %v967 = vpop.f32.mrb[0].mxu0
  %v968 = vadd.f32 0.0, %v967
  %v969 = vpop.f32.mrb[0].mxu0
  %v970 = vpop.f32.mrb[0].mxu0
  %v971 = vadd.f32 0.0, %v970
  %v972 = vpop.f32.mrb[0].mxu0
  %973 = vmatprep.mubr.bf16.mxu0 0
  %974 = vmatmul.mubr.bf16.gmra.mrb[0].mxu0 %v772
  %v975 = vpop.f32.mrb[0].mxu0
  %v976 = vadd.f32 0.0, %v975
  %v977 = vpop.f32.mrb[0].mxu0
  %v978 = vpop.f32.mrb[0].mxu0
  %v979 = vadd.f32 0.0, %v978
  %v980 = vpop.f32.mrb[0].mxu0
  %981 = vmatprep.mubr.bf16.mxu0 0
  %982 = vmatmul.mubr.bf16.gmra.mrb[0].mxu0 %v775
  %v983 = vpop.f32.mrb[0].mxu0
  %v984 = vadd.f32 0.0, %v983
  %v985 = vpop.f32.mrb[0].mxu0
  %v986 = vpop.f32.mrb[0].mxu0
  %v987 = vadd.f32 0.0, %v986
  %v988 = vpop.f32.mrb[0].mxu0
  %989 = vmatprep.mubr.bf16.mxu0 0
  %990 = vmatmul.mubr.bf16.gmra.mrb[0].mxu0 %v778
  %v991 = vpop.f32.mrb[0].mxu0
  %v992 = vadd.f32 0.0, %v991
  %v993 = vpop.f32.mrb[0].mxu0
  %v994 = vpop.f32.mrb[0].mxu0
  %v995 = vadd.f32 0.0, %v994
  %v996 = vpop.f32.mrb[0].mxu0
  %997 = vmatprep.mubr.bf16.mxu0 0
  %998 = vmatmul.mubr.bf16.gmra.mrb[0].mxu0 %v781
  %v999 = vpop.f32.mrb[0].mxu0
  %v1000 = vadd.f32 0.0, %v999
  %v1001 = vpop.f32.mrb[0].mxu0
  %v1002 = vpop.f32.mrb[0].mxu0
  %v1003 = vadd.f32 0.0, %v1002
  %v1004 = vpop.f32.mrb[0].mxu0
  %1005 = vmatprep.mubr.bf16.mxu0 0
  %1006 = vmatmul.mubr.bf16.gmra.mrb[0].mxu0 %v784
  %v1007 = vpop.f32.mrb[0].mxu0
  %v1008 = vadd.f32 0.0, %v1007
  %v1009 = vpop.f32.mrb[0].mxu0
  %v1010 = vpop.f32.mrb[0].mxu0
  %v1011 = vadd.f32 0.0, %v1010
  %v1012 = vpop.f32.mrb[0].mxu0
  %1013 = vmatprep.mubr.bf16.mxu0 0
  %1014 = vmatmul.mubr.bf16.gmra.mrb[0].mxu0 %v787
  %v1015 = vpop.f32.mrb[0].mxu0
  %v1016 = vadd.f32 0.0, %v1015
  %v1017 = vpop.f32.mrb[0].mxu0
  %v1018 = vpop.f32.mrb[0].mxu0
  %v1019 = vpop.f32.mrb[0].mxu0
  %1020 = vdwg.mxu0
  %v1021 = vmax.f32 %v344, %v824
  %v1022 = vmax.f32 %v347, %v827
  %v1023 = vmax.f32 %v352, %v832
  %v1024 = vmax.f32 %v355, %v835
  %v1025 = vmax.f32 %v360, %v840
  %v1026 = vmax.f32 %v363, %v843
  %v1027 = vmax.f32 %v368, %v848
  %v1028 = vmax.f32 %v371, %v851
  %v1029 = vmax.f32 %v376, %v856
  %v1030 = vmax.f32 %v379, %v859
  %v1031 = vmax.f32 %v384, %v864
  %v1032 = vmax.f32 %v387, %v867
  %v1033 = vmax.f32 %v392, %v872
  %v1034 = vmax.f32 %v395, %v875
  %v1035 = vmax.f32 %v400, %v880
  %v1036 = vmax.f32 %v403, %v883
  %v1037 = vmax.f32 %v408, %v888
  %v1038 = vmax.f32 %v411, %v891
  %v1039 = vmax.f32 %v416, %v896
  %v1040 = vmax.f32 %v419, %v899
  %v1041 = vmax.f32 %v424, %v904
  %v1042 = vmax.f32 %v427, %v907
  %v1043 = vmax.f32 %v432, %v912
  %v1044 = vmax.f32 %v435, %v915
  %v1045 = vmax.f32 %v440, %v920
  %v1046 = vmax.f32 %v443, %v923
  %v1047 = vmax.f32 %v448, %v928
  %v1048 = vmax.f32 %v451, %v931
  %v1049 = vmax.f32 %v456, %v936
  %v1050 = vmax.f32 %v459, %v939
  %v1051 = vmax.f32 %v464, %v944
  %v1052 = vmax.f32 %v467, %v947
  %v1053 = vmax.f32 %v472, %v952
  %v1054 = vmax.f32 %v475, %v955
  %v1055 = vmax.f32 %v480, %v960
  %v1056 = vmax.f32 %v483, %v963
  %v1057 = vmax.f32 %v488, %v968
  %v1058 = vmax.f32 %v491, %v971
  %v1059 = vmax.f32 %v496, %v976
  %v1060 = vmax.f32 %v499, %v979
  %v1061 = vmax.f32 %v504, %v984
  %v1062 = vmax.f32 %v507, %v987
  %v1063 = vmax.f32 %v512, %v992
  %v1064 = vmax.f32 %v515, %v995
  %v1065 = vmax.f32 %v520, %v1000
  %v1066 = vmax.f32 %v523, %v1003
  %v1067 = vmax.f32 %v528, %v1008
  %v1068 = vmax.f32 %v531, %v1011
  %v1069 = vmax.f32 %v536, %v1016
  %s1070 = scalar_lea.vmem %s0, 392
  %v1071 = vld [vmem:[%s1070] sm:$0xf]
  %v1072 = vld [vmem:[%s1070 + $0x4] sm:$0xf]
  %v1073 = vld [vmem:[%s1070 + $0x8] sm:$0xf]
  %v1074 = vld [vmem:[%s1070 + $0xc] sm:$0xf]
  %v1075 = vld [vmem:[%s1070 + $0x10] sm:$0xf]
  %v1076 = vld [vmem:[%s1070 + $0x14] sm:$0xf]
  %v1077 = vld [vmem:[%s1070 + $0x18] sm:$0xf]
  %v1078 = vld [vmem:[%s1070 + $0x1c] sm:$0xf]
  %v1079 = vld [vmem:[%s1070 + $0x20] sm:$0xf]
  %v1080 = vld [vmem:[%s1070 + $0x24] sm:$0xf]
  %v1081 = vld [vmem:[%s1070 + $0x28] sm:$0xf]
  %v1082 = vld [vmem:[%s1070 + $0x2c] sm:$0xf]
  %v1083 = vld [vmem:[%s1070 + $0x30] sm:$0xf]
  %v1084 = vld [vmem:[%s1070 + $0x34] sm:$0xf]
  %v1085 = vld [vmem:[%s1070 + $0x38] sm:$0xf]
  %v1086 = vld [vmem:[%s1070 + $0x3c] sm:$0xf]
  %v1087 = vld [vmem:[%s1070 + $0x40] sm:$0xf]
  %v1088 = vld [vmem:[%s1070 + $0x44] sm:$0xf]
  %v1089 = vld [vmem:[%s1070 + $0x48] sm:$0xf]
  %v1090 = vld [vmem:[%s1070 + $0x4c] sm:$0xf]
  %v1091 = vld [vmem:[%s1070 + $0x50] sm:$0xf]
  %v1092 = vld [vmem:[%s1070 + $0x54] sm:$0xf]
  %v1093 = vld [vmem:[%s1070 + $0x58] sm:$0xf]
  %v1094 = vld [vmem:[%s1070 + $0x5c] sm:$0xf]
  %v1095 = vld [vmem:[%s1070 + $0x60] sm:$0xf]
  %v1096 = vld [vmem:[%s1070 + $0x64] sm:$0xf]
  %v1097 = vld [vmem:[%s1070 + $0x68] sm:$0xf]
  %v1098 = vld [vmem:[%s1070 + $0x6c] sm:$0xf]
  %v1099 = vld [vmem:[%s1070 + $0x70] sm:$0xf]
  %v1100 = vld [vmem:[%s1070 + $0x74] sm:$0xf]
  %v1101 = vld [vmem:[%s1070 + $0x78] sm:$0xf]
  %v1102 = vld [vmem:[%s1070 + $0x7c] sm:$0xf]
  %v1103 = vld [vmem:[%s1070 + $0x80] sm:$0xf]
  %v1104 = vld [vmem:[%s1070 + $0x84] sm:$0xf]
  %v1105 = vld [vmem:[%s1070 + $0x88] sm:$0xf]
  %v1106 = vld [vmem:[%s1070 + $0x8c] sm:$0xf]
  %v1107 = vld [vmem:[%s1070 + $0x90] sm:$0xf]
  %v1108 = vld [vmem:[%s1070 + $0x94] sm:$0xf]
  %v1109 = vld [vmem:[%s1070 + $0x98] sm:$0xf]
  %v1110 = vld [vmem:[%s1070 + $0x9c] sm:$0xf]
  %v1111 = vld [vmem:[%s1070 + $0xa0] sm:$0xf]
  %v1112 = vld [vmem:[%s1070 + $0xa4] sm:$0xf]
  %v1113 = vld [vmem:[%s1070 + $0xa8] sm:$0xf]
  %v1114 = vld [vmem:[%s1070 + $0xac] sm:$0xf]
  %v1115 = vld [vmem:[%s1070 + $0xb0] sm:$0xf]
  %v1116 = vld [vmem:[%s1070 + $0xb4] sm:$0xf]
  %v1117 = vld [vmem:[%s1070 + $0xb8] sm:$0xf]
  %v1118 = vld [vmem:[%s1070 + $0xbc] sm:$0xf]
  %v1119 = vld [vmem:[%s1070 + $0xc0] sm:$0xf]
  %v1169 = vunpack.c.l.b16 %v1071
  %v1170 = vunpack.c.l.b16 %v1072
  %v1171 = vunpack.c.l.b16 %v1073
  %v1172 = vunpack.c.l.b16 %v1074
  %v1173 = vunpack.c.l.b16 %v1075
  %v1174 = vunpack.c.l.b16 %v1076
  %v1175 = vunpack.c.l.b16 %v1077
  %v1176 = vunpack.c.l.b16 %v1078
  %v1177 = vunpack.c.l.b16 %v1079
  %v1178 = vunpack.c.l.b16 %v1080
  %v1179 = vunpack.c.l.b16 %v1081
  %v1180 = vunpack.c.l.b16 %v1082
  %v1181 = vunpack.c.l.b16 %v1083
  %v1182 = vunpack.c.l.b16 %v1084
  %v1183 = vunpack.c.l.b16 %v1085
  %v1184 = vunpack.c.l.b16 %v1086
  %v1185 = vunpack.c.l.b16 %v1087
  %v1186 = vunpack.c.l.b16 %v1088
  %v1187 = vunpack.c.l.b16 %v1089
  %v1188 = vunpack.c.l.b16 %v1090
  %v1189 = vunpack.c.l.b16 %v1091
  %v1190 = vunpack.c.l.b16 %v1092
  %v1191 = vunpack.c.l.b16 %v1093
  %v1192 = vunpack.c.l.b16 %v1094
  %v1193 = vunpack.c.l.b16 %v1095
  %v1194 = vunpack.c.l.b16 %v1096
  %v1195 = vunpack.c.l.b16 %v1097
  %v1196 = vunpack.c.l.b16 %v1098
  %v1197 = vunpack.c.l.b16 %v1099
  %v1198 = vunpack.c.l.b16 %v1100
  %v1199 = vunpack.c.l.b16 %v1101
  %v1200 = vunpack.c.l.b16 %v1102
  %v1201 = vunpack.c.l.b16 %v1103
  %v1202 = vunpack.c.l.b16 %v1104
  %v1203 = vunpack.c.l.b16 %v1105
  %v1204 = vunpack.c.l.b16 %v1106
  %v1205 = vunpack.c.l.b16 %v1107
  %v1206 = vunpack.c.l.b16 %v1108
  %v1207 = vunpack.c.l.b16 %v1109
  %v1208 = vunpack.c.l.b16 %v1110
  %v1209 = vunpack.c.l.b16 %v1111
  %v1210 = vunpack.c.l.b16 %v1112
  %v1211 = vunpack.c.l.b16 %v1113
  %v1212 = vunpack.c.l.b16 %v1114
  %v1213 = vunpack.c.l.b16 %v1115
  %v1214 = vunpack.c.l.b16 %v1116
  %v1215 = vunpack.c.l.b16 %v1117
  %v1216 = vunpack.c.l.b16 %v1118
  %v1217 = vunpack.c.l.b16 %v1119
  %v1218 = vpack.c.b16 %v1170, %v1169
  %v1219 = vpack.c.b16 %v1172, %v1171
  %v1220 = vpack.c.b16 %v1174, %v1173
  %v1221 = vpack.c.b16 %v1176, %v1175
  %v1222 = vpack.c.b16 %v1178, %v1177
  %v1223 = vpack.c.b16 %v1180, %v1179
  %v1224 = vpack.c.b16 %v1182, %v1181
  %v1225 = vpack.c.b16 %v1184, %v1183
  %v1226 = vpack.c.b16 %v1186, %v1185
  %v1227 = vpack.c.b16 %v1188, %v1187
  %v1228 = vpack.c.b16 %v1190, %v1189
  %v1229 = vpack.c.b16 %v1192, %v1191
  %v1230 = vpack.c.b16 %v1194, %v1193
  %v1231 = vpack.c.b16 %v1196, %v1195
  %v1232 = vpack.c.b16 %v1198, %v1197
  %v1233 = vpack.c.b16 %v1200, %v1199
  %v1234 = vpack.c.b16 %v1202, %v1201
  %v1235 = vpack.c.b16 %v1204, %v1203
  %v1236 = vpack.c.b16 %v1206, %v1205
  %v1237 = vpack.c.b16 %v1208, %v1207
  %v1238 = vpack.c.b16 %v1210, %v1209
  %v1239 = vpack.c.b16 %v1212, %v1211
  %v1240 = vpack.c.b16 %v1214, %v1213
  %v1241 = vpack.c.b16 %v1216, %v1215
  %v1242 = vpack.c.b16 %v1217, %v1217
  %v1244 = vsel %vm226, %v1218, 0
  %v1247 = vsel %vm226, %v1219, 0
  %v1250 = vsel %vm226, %v1220, 0
  %v1253 = vsel %vm226, %v1221, 0
  %v1256 = vsel %vm226, %v1222, 0
  %v1259 = vsel %vm226, %v1223, 0
  %v1262 = vsel %vm226, %v1224, 0
  %v1265 = vsel %vm226, %v1225, 0
  %v1268 = vsel %vm226, %v1226, 0
  %v1271 = vsel %vm226, %v1227, 0
  %v1274 = vsel %vm226, %v1228, 0
  %v1277 = vsel %vm226, %v1229, 0
  %v1280 = vsel %vm226, %v1230, 0
  %v1283 = vsel %vm226, %v1231, 0
  %v1286 = vsel %vm226, %v1232, 0
  %v1289 = vsel %vm226, %v1233, 0
  %v1292 = vsel %vm226, %v1234, 0
  %v1295 = vsel %vm226, %v1235, 0
  %v1298 = vsel %vm226, %v1236, 0
  %v1301 = vsel %vm226, %v1237, 0
  %v1304 = vsel %vm226, %v1238, 0
  %v1307 = vsel %vm226, %v1239, 0
  %v1310 = vsel %vm226, %v1240, 0
  %v1313 = vsel %vm226, %v1241, 0
  %v1316 = vsel %vm226, %v1242, 0
  %1318 = vmatprep.subr.bf16.mxu0 0
  %1319 = vmatpush1.bf16.msra.mxu0 %v217
  %1320 = vmatprep.subr.bf16.mxu0 0
  %1321 = vmatpush1.bf16.msra.mxu0 %v218
  %1322 = vmatprep.subr.bf16.mxu0 0
  %1323 = vmatpush1.bf16.msra.mxu0 %v219
  %1324 = vmatprep.subr.bf16.mxu0 0
  %1325 = vmatpush1.bf16.msra.mxu0 %v220
  %1326 = vmatprep.subr.bf16.mxu0 0
  %1327 = vmatpush1.bf16.msra.mxu0 %v307
  %1328 = vmatprep.subr.bf16.mxu0 0
  %1329 = vmatpush1.bf16.msra.mxu0 0
  %1330 = vmatprep.subr.bf16.mxu0 0
  %1331 = vmatpush1.bf16.msra.mxu0 0
  %1332 = vmatprep.subr.bf16.mxu0 0
  %1333 = vmatpush1.bf16.msra.mxu0 0
  %1334 = vmatprep.subr.bf16.mxu0 0
  %1335 = vmatpush1.bf16.msra.mxu0 0
  %1336 = vmatprep.subr.bf16.mxu0 0
  %1337 = vmatpush1.bf16.msra.mxu0 0
  %1338 = vmatprep.subr.bf16.mxu0 0
  %1339 = vmatpush1.bf16.msra.mxu0 0
  %1340 = vmatprep.subr.bf16.mxu0 0
  %1341 = vmatpush1.bf16.msra.mxu0 0
  %1342 = vmatprep.subr.bf16.mxu0 0
  %1343 = vmatpush1.bf16.msra.mxu0 0
  %1344 = vmatprep.subr.bf16.mxu0 0
  %1345 = vmatpush1.bf16.msra.mxu0 0
  %1346 = vmatprep.subr.bf16.mxu0 0
  %1347 = vmatpush1.bf16.msra.mxu0 0
  %1348 = vmatprep.subr.bf16.mxu0 0
  %1349 = vmatpush1.bf16.msra.mxu0 0
  %1350 = vmatprep.mubr.bf16.mxu0 0
  %1351 = vmatmul.mubr.bf16.gmra.mrb[0].mxu0 %v1244
  %v1352 = vpop.f32.mrb[0].mxu0
  %v1353 = vadd.f32 0.0, %v1352
  %v1354 = vpop.f32.mrb[0].mxu0
  %v1355 = vpop.f32.mrb[0].mxu0
  %v1356 = vadd.f32 0.0, %v1355
  %v1357 = vpop.f32.mrb[0].mxu0
  %1358 = vmatprep.mubr.bf16.mxu0 0
  %1359 = vmatmul.mubr.bf16.gmra.mrb[0].mxu0 %v1247
  %v1360 = vpop.f32.mrb[0].mxu0
  %v1361 = vadd.f32 0.0, %v1360
  %v1362 = vpop.f32.mrb[0].mxu0
  %v1363 = vpop.f32.mrb[0].mxu0
  %v1364 = vadd.f32 0.0, %v1363
  %v1365 = vpop.f32.mrb[0].mxu0
  %1366 = vmatprep.mubr.bf16.mxu0 0
  %1367 = vmatmul.mubr.bf16.gmra.mrb[0].mxu0 %v1250
  %v1368 = vpop.f32.mrb[0].mxu0
  %v1369 = vadd.f32 0.0, %v1368
  %v1370 = vpop.f32.mrb[0].mxu0
  %v1371 = vpop.f32.mrb[0].mxu0
  %v1372 = vadd.f32 0.0, %v1371
  %v1373 = vpop.f32.mrb[0].mxu0
  %1374 = vmatprep.mubr.bf16.mxu0 0
  %1375 = vmatmul.mubr.bf16.gmra.mrb[0].mxu0 %v1253
  %v1376 = vpop.f32.mrb[0].mxu0
  %v1377 = vadd.f32 0.0, %v1376
  %v1378 = vpop.f32.mrb[0].mxu0
  %v1379 = vpop.f32.mrb[0].mxu0
  %v1380 = vadd.f32 0.0, %v1379
  %v1381 = vpop.f32.mrb[0].mxu0
  %1382 = vmatprep.mubr.bf16.mxu0 0
  %1383 = vmatmul.mubr.bf16.gmra.mrb[0].mxu0 %v1256
  %v1384 = vpop.f32.mrb[0].mxu0
  %v1385 = vadd.f32 0.0, %v1384
  %v1386 = vpop.f32.mrb[0].mxu0
  %v1387 = vpop.f32.mrb[0].mxu0
  %v1388 = vadd.f32 0.0, %v1387
  %v1389 = vpop.f32.mrb[0].mxu0
  %1390 = vmatprep.mubr.bf16.mxu0 0
  %1391 = vmatmul.mubr.bf16.gmra.mrb[0].mxu0 %v1259
  %v1392 = vpop.f32.mrb[0].mxu0
  %v1393 = vadd.f32 0.0, %v1392
  %v1394 = vpop.f32.mrb[0].mxu0
  %v1395 = vpop.f32.mrb[0].mxu0
  %v1396 = vadd.f32 0.0, %v1395
  %v1397 = vpop.f32.mrb[0].mxu0
  %1398 = vmatprep.mubr.bf16.mxu0 0
  %1399 = vmatmul.mubr.bf16.gmra.mrb[0].mxu0 %v1262
  %v1400 = vpop.f32.mrb[0].mxu0
  %v1401 = vadd.f32 0.0, %v1400
  %v1402 = vpop.f32.mrb[0].mxu0
  %v1403 = vpop.f32.mrb[0].mxu0
  %v1404 = vadd.f32 0.0, %v1403
  %v1405 = vpop.f32.mrb[0].mxu0
  %1406 = vmatprep.mubr.bf16.mxu0 0
  %1407 = vmatmul.mubr.bf16.gmra.mrb[0].mxu0 %v1265
  %v1408 = vpop.f32.mrb[0].mxu0
  %v1409 = vadd.f32 0.0, %v1408
  %v1410 = vpop.f32.mrb[0].mxu0
  %v1411 = vpop.f32.mrb[0].mxu0
  %v1412 = vadd.f32 0.0, %v1411
  %v1413 = vpop.f32.mrb[0].mxu0
  %1414 = vmatprep.mubr.bf16.mxu0 0
  %1415 = vmatmul.mubr.bf16.gmra.mrb[0].mxu0 %v1268
  %v1416 = vpop.f32.mrb[0].mxu0
  %v1417 = vadd.f32 0.0, %v1416
  %v1418 = vpop.f32.mrb[0].mxu0
  %v1419 = vpop.f32.mrb[0].mxu0
  %v1420 = vadd.f32 0.0, %v1419
  %v1421 = vpop.f32.mrb[0].mxu0
  %1422 = vmatprep.mubr.bf16.mxu0 0
  %1423 = vmatmul.mubr.bf16.gmra.mrb[0].mxu0 %v1271
  %v1424 = vpop.f32.mrb[0].mxu0
  %v1425 = vadd.f32 0.0, %v1424
  %v1426 = vpop.f32.mrb[0].mxu0
  %v1427 = vpop.f32.mrb[0].mxu0
  %v1428 = vadd.f32 0.0, %v1427
  %v1429 = vpop.f32.mrb[0].mxu0
  %1430 = vmatprep.mubr.bf16.mxu0 0
  %1431 = vmatmul.mubr.bf16.gmra.mrb[0].mxu0 %v1274
  %v1432 = vpop.f32.mrb[0].mxu0
  %v1433 = vadd.f32 0.0, %v1432
  %v1434 = vpop.f32.mrb[0].mxu0
  %v1435 = vpop.f32.mrb[0].mxu0
  %v1436 = vadd.f32 0.0, %v1435
  %v1437 = vpop.f32.mrb[0].mxu0
  %1438 = vmatprep.mubr.bf16.mxu0 0
  %1439 = vmatmul.mubr.bf16.gmra.mrb[0].mxu0 %v1277
  %v1440 = vpop.f32.mrb[0].mxu0
  %v1441 = vadd.f32 0.0, %v1440
  %v1442 = vpop.f32.mrb[0].mxu0
  %v1443 = vpop.f32.mrb[0].mxu0
  %v1444 = vadd.f32 0.0, %v1443
  %v1445 = vpop.f32.mrb[0].mxu0
  %1446 = vmatprep.mubr.bf16.mxu0 0
  %1447 = vmatmul.mubr.bf16.gmra.mrb[0].mxu0 %v1280
  %v1448 = vpop.f32.mrb[0].mxu0
  %v1449 = vadd.f32 0.0, %v1448
  %v1450 = vpop.f32.mrb[0].mxu0
  %v1451 = vpop.f32.mrb[0].mxu0
  %v1452 = vadd.f32 0.0, %v1451
  %v1453 = vpop.f32.mrb[0].mxu0
  %1454 = vmatprep.mubr.bf16.mxu0 0
  %1455 = vmatmul.mubr.bf16.gmra.mrb[0].mxu0 %v1283
  %v1456 = vpop.f32.mrb[0].mxu0
  %v1457 = vadd.f32 0.0, %v1456
  %v1458 = vpop.f32.mrb[0].mxu0
  %v1459 = vpop.f32.mrb[0].mxu0
  %v1460 = vadd.f32 0.0, %v1459
  %v1461 = vpop.f32.mrb[0].mxu0
  %1462 = vmatprep.mubr.bf16.mxu0 0
  %1463 = vmatmul.mubr.bf16.gmra.mrb[0].mxu0 %v1286
  %v1464 = vpop.f32.mrb[0].mxu0
  %v1465 = vadd.f32 0.0, %v1464
  %v1466 = vpop.f32.mrb[0].mxu0
  %v1467 = vpop.f32.mrb[0].mxu0
  %v1468 = vadd.f32 0.0, %v1467
  %v1469 = vpop.f32.mrb[0].mxu0
  %1470 = vmatprep.mubr.bf16.mxu0 0
  %1471 = vmatmul.mubr.bf16.gmra.mrb[0].mxu0 %v1289
  %v1472 = vpop.f32.mrb[0].mxu0
  %v1473 = vadd.f32 0.0, %v1472
  %v1474 = vpop.f32.mrb[0].mxu0
  %v1475 = vpop.f32.mrb[0].mxu0
  %v1476 = vadd.f32 0.0, %v1475
  %v1477 = vpop.f32.mrb[0].mxu0
  %1478 = vmatprep.mubr.bf16.mxu0 0
  %1479 = vmatmul.mubr.bf16.gmra.mrb[0].mxu0 %v1292
  %v1480 = vpop.f32.mrb[0].mxu0
  %v1481 = vadd.f32 0.0, %v1480
  %v1482 = vpop.f32.mrb[0].mxu0
  %v1483 = vpop.f32.mrb[0].mxu0
  %v1484 = vadd.f32 0.0, %v1483
  %v1485 = vpop.f32.mrb[0].mxu0
  %1486 = vmatprep.mubr.bf16.mxu0 0
  %1487 = vmatmul.mubr.bf16.gmra.mrb[0].mxu0 %v1295
  %v1488 = vpop.f32.mrb[0].mxu0
  %v1489 = vadd.f32 0.0, %v1488
  %v1490 = vpop.f32.mrb[0].mxu0
  %v1491 = vpop.f32.mrb[0].mxu0
  %v1492 = vadd.f32 0.0, %v1491
  %v1493 = vpop.f32.mrb[0].mxu0
  %1494 = vmatprep.mubr.bf16.mxu0 0
  %1495 = vmatmul.mubr.bf16.gmra.mrb[0].mxu0 %v1298
  %v1496 = vpop.f32.mrb[0].mxu0
  %v1497 = vadd.f32 0.0, %v1496
  %v1498 = vpop.f32.mrb[0].mxu0
  %v1499 = vpop.f32.mrb[0].mxu0
  %v1500 = vadd.f32 0.0, %v1499
  %v1501 = vpop.f32.mrb[0].mxu0
  %1502 = vmatprep.mubr.bf16.mxu0 0
  %1503 = vmatmul.mubr.bf16.gmra.mrb[0].mxu0 %v1301
  %v1504 = vpop.f32.mrb[0].mxu0
  %v1505 = vadd.f32 0.0, %v1504
  %v1506 = vpop.f32.mrb[0].mxu0
  %v1507 = vpop.f32.mrb[0].mxu0
  %v1508 = vadd.f32 0.0, %v1507
  %v1509 = vpop.f32.mrb[0].mxu0
  %1510 = vmatprep.mubr.bf16.mxu0 0
  %1511 = vmatmul.mubr.bf16.gmra.mrb[0].mxu0 %v1304
  %v1512 = vpop.f32.mrb[0].mxu0
  %v1513 = vadd.f32 0.0, %v1512
  %v1514 = vpop.f32.mrb[0].mxu0
  %v1515 = vpop.f32.mrb[0].mxu0
  %v1516 = vadd.f32 0.0, %v1515
  %v1517 = vpop.f32.mrb[0].mxu0
  %1518 = vmatprep.mubr.bf16.mxu0 0
  %1519 = vmatmul.mubr.bf16.gmra.mrb[0].mxu0 %v1307
  %v1520 = vpop.f32.mrb[0].mxu0
  %v1521 = vadd.f32 0.0, %v1520
  %v1522 = vpop.f32.mrb[0].mxu0
  %v1523 = vpop.f32.mrb[0].mxu0
  %v1524 = vadd.f32 0.0, %v1523
  %v1525 = vpop.f32.mrb[0].mxu0
  %1526 = vmatprep.mubr.bf16.mxu0 0
  %1527 = vmatmul.mubr.bf16.gmra.mrb[0].mxu0 %v1310
  %v1528 = vpop.f32.mrb[0].mxu0
  %v1529 = vadd.f32 0.0, %v1528
  %v1530 = vpop.f32.mrb[0].mxu0
  %v1531 = vpop.f32.mrb[0].mxu0
  %v1532 = vadd.f32 0.0, %v1531
  %v1533 = vpop.f32.mrb[0].mxu0
  %1534 = vmatprep.mubr.bf16.mxu0 0
  %1535 = vmatmul.mubr.bf16.gmra.mrb[0].mxu0 %v1313
  %v1536 = vpop.f32.mrb[0].mxu0
  %v1537 = vadd.f32 0.0, %v1536
  %v1538 = vpop.f32.mrb[0].mxu0
  %v1539 = vpop.f32.mrb[0].mxu0
  %v1540 = vadd.f32 0.0, %v1539
  %v1541 = vpop.f32.mrb[0].mxu0
  %1542 = vmatprep.mubr.bf16.mxu0 0
  %1543 = vmatmul.mubr.bf16.gmra.mrb[0].mxu0 %v1316
  %v1544 = vpop.f32.mrb[0].mxu0
  %v1545 = vadd.f32 0.0, %v1544
  %v1546 = vpop.f32.mrb[0].mxu0
  %v1547 = vpop.f32.mrb[0].mxu0
  %v1548 = vpop.f32.mrb[0].mxu0
  %1549 = vdwg.mxu0
  %v1550 = vmax.f32 %v1021, %v1353
  %v1551 = vmax.f32 %v1022, %v1356
  %v1552 = vmax.f32 %v1023, %v1361
  %v1553 = vmax.f32 %v1024, %v1364
  %v1554 = vmax.f32 %v1025, %v1369
  %v1555 = vmax.f32 %v1026, %v1372
  %v1556 = vmax.f32 %v1027, %v1377
  %v1557 = vmax.f32 %v1028, %v1380
  %v1558 = vmax.f32 %v1029, %v1385
  %v1559 = vmax.f32 %v1030, %v1388
  %v1560 = vmax.f32 %v1031, %v1393
  %v1561 = vmax.f32 %v1032, %v1396
  %v1562 = vmax.f32 %v1033, %v1401
  %v1563 = vmax.f32 %v1034, %v1404
  %v1564 = vmax.f32 %v1035, %v1409
  %v1565 = vmax.f32 %v1036, %v1412
  %v1566 = vmax.f32 %v1037, %v1417
  %v1567 = vmax.f32 %v1038, %v1420
  %v1568 = vmax.f32 %v1039, %v1425
  %v1569 = vmax.f32 %v1040, %v1428
  %v1570 = vmax.f32 %v1041, %v1433
  %v1571 = vmax.f32 %v1042, %v1436
  %v1572 = vmax.f32 %v1043, %v1441
  %v1573 = vmax.f32 %v1044, %v1444
  %v1574 = vmax.f32 %v1045, %v1449
  %v1575 = vmax.f32 %v1046, %v1452
  %v1576 = vmax.f32 %v1047, %v1457
  %v1577 = vmax.f32 %v1048, %v1460
  %v1578 = vmax.f32 %v1049, %v1465
  %v1579 = vmax.f32 %v1050, %v1468
  %v1580 = vmax.f32 %v1051, %v1473
  %v1581 = vmax.f32 %v1052, %v1476
  %v1582 = vmax.f32 %v1053, %v1481
  %v1583 = vmax.f32 %v1054, %v1484
  %v1584 = vmax.f32 %v1055, %v1489
  %v1585 = vmax.f32 %v1056, %v1492
  %v1586 = vmax.f32 %v1057, %v1497
  %v1587 = vmax.f32 %v1058, %v1500
  %v1588 = vmax.f32 %v1059, %v1505
  %v1589 = vmax.f32 %v1060, %v1508
  %v1590 = vmax.f32 %v1061, %v1513
  %v1591 = vmax.f32 %v1062, %v1516
  %v1592 = vmax.f32 %v1063, %v1521
  %v1593 = vmax.f32 %v1064, %v1524
  %v1594 = vmax.f32 %v1065, %v1529
  %v1595 = vmax.f32 %v1066, %v1532
  %v1596 = vmax.f32 %v1067, %v1537
  %v1597 = vmax.f32 %v1068, %v1540
  %v1598 = vmax.f32 %v1069, %v1545
  %s1599 = scalar_lea.vmem %s0, 588
  %v1600 = vld [vmem:[%s1599] sm:$0xf]
  %v1601 = vld [vmem:[%s1599 + $0x4] sm:$0xf]
  %v1602 = vld [vmem:[%s1599 + $0x8] sm:$0xf]
  %v1603 = vld [vmem:[%s1599 + $0xc] sm:$0xf]
  %v1604 = vld [vmem:[%s1599 + $0x10] sm:$0xf]
  %v1605 = vld [vmem:[%s1599 + $0x14] sm:$0xf]
  %v1606 = vld [vmem:[%s1599 + $0x18] sm:$0xf]
  %v1607 = vld [vmem:[%s1599 + $0x1c] sm:$0xf]
  %v1608 = vld [vmem:[%s1599 + $0x20] sm:$0xf]
  %v1609 = vld [vmem:[%s1599 + $0x24] sm:$0xf]
  %v1610 = vld [vmem:[%s1599 + $0x28] sm:$0xf]
  %v1611 = vld [vmem:[%s1599 + $0x2c] sm:$0xf]
  %v1612 = vld [vmem:[%s1599 + $0x30] sm:$0xf]
  %v1613 = vld [vmem:[%s1599 + $0x34] sm:$0xf]
  %v1614 = vld [vmem:[%s1599 + $0x38] sm:$0xf]
  %v1615 = vld [vmem:[%s1599 + $0x3c] sm:$0xf]
  %v1616 = vld [vmem:[%s1599 + $0x40] sm:$0xf]
  %v1617 = vld [vmem:[%s1599 + $0x44] sm:$0xf]
  %v1618 = vld [vmem:[%s1599 + $0x48] sm:$0xf]
  %v1619 = vld [vmem:[%s1599 + $0x4c] sm:$0xf]
  %v1620 = vld [vmem:[%s1599 + $0x50] sm:$0xf]
  %v1621 = vld [vmem:[%s1599 + $0x54] sm:$0xf]
  %v1622 = vld [vmem:[%s1599 + $0x58] sm:$0xf]
  %v1623 = vld [vmem:[%s1599 + $0x5c] sm:$0xf]
  %v1624 = vld [vmem:[%s1599 + $0x60] sm:$0xf]
  %v1625 = vld [vmem:[%s1599 + $0x64] sm:$0xf]
  %v1626 = vld [vmem:[%s1599 + $0x68] sm:$0xf]
  %v1627 = vld [vmem:[%s1599 + $0x6c] sm:$0xf]
  %v1628 = vld [vmem:[%s1599 + $0x70] sm:$0xf]
  %v1629 = vld [vmem:[%s1599 + $0x74] sm:$0xf]
  %v1630 = vld [vmem:[%s1599 + $0x78] sm:$0xf]
  %v1631 = vld [vmem:[%s1599 + $0x7c] sm:$0xf]
  %v1632 = vld [vmem:[%s1599 + $0x80] sm:$0xf]
  %v1633 = vld [vmem:[%s1599 + $0x84] sm:$0xf]
  %v1634 = vld [vmem:[%s1599 + $0x88] sm:$0xf]
  %v1635 = vld [vmem:[%s1599 + $0x8c] sm:$0xf]
  %v1636 = vld [vmem:[%s1599 + $0x90] sm:$0xf]
  %v1637 = vld [vmem:[%s1599 + $0x94] sm:$0xf]
  %v1638 = vld [vmem:[%s1599 + $0x98] sm:$0xf]
  %v1639 = vld [vmem:[%s1599 + $0x9c] sm:$0xf]
  %v1640 = vld [vmem:[%s1599 + $0xa0] sm:$0xf]
  %v1641 = vld [vmem:[%s1599 + $0xa4] sm:$0xf]
  %v1642 = vld [vmem:[%s1599 + $0xa8] sm:$0xf]
  %v1643 = vld [vmem:[%s1599 + $0xac] sm:$0xf]
  %v1644 = vld [vmem:[%s1599 + $0xb0] sm:$0xf]
  %v1645 = vld [vmem:[%s1599 + $0xb4] sm:$0xf]
  %v1646 = vld [vmem:[%s1599 + $0xb8] sm:$0xf]
  %v1647 = vld [vmem:[%s1599 + $0xbc] sm:$0xf]
  %v1648 = vld [vmem:[%s1599 + $0xc0] sm:$0xf]
  %v1698 = vunpack.c.l.b16 %v1600
  %v1699 = vunpack.c.l.b16 %v1601
  %v1700 = vunpack.c.l.b16 %v1602
  %v1701 = vunpack.c.l.b16 %v1603
  %v1702 = vunpack.c.l.b16 %v1604
  %v1703 = vunpack.c.l.b16 %v1605
  %v1704 = vunpack.c.l.b16 %v1606
  %v1705 = vunpack.c.l.b16 %v1607
  %v1706 = vunpack.c.l.b16 %v1608
  %v1707 = vunpack.c.l.b16 %v1609
  %v1708 = vunpack.c.l.b16 %v1610
  %v1709 = vunpack.c.l.b16 %v1611
  %v1710 = vunpack.c.l.b16 %v1612
  %v1711 = vunpack.c.l.b16 %v1613
  %v1712 = vunpack.c.l.b16 %v1614
  %v1713 = vunpack.c.l.b16 %v1615
  %v1714 = vunpack.c.l.b16 %v1616
  %v1715 = vunpack.c.l.b16 %v1617
  %v1716 = vunpack.c.l.b16 %v1618
  %v1717 = vunpack.c.l.b16 %v1619
  %v1718 = vunpack.c.l.b16 %v1620
  %v1719 = vunpack.c.l.b16 %v1621
  %v1720 = vunpack.c.l.b16 %v1622
  %v1721 = vunpack.c.l.b16 %v1623
  %v1722 = vunpack.c.l.b16 %v1624
  %v1723 = vunpack.c.l.b16 %v1625
  %v1724 = vunpack.c.l.b16 %v1626
  %v1725 = vunpack.c.l.b16 %v1627
  %v1726 = vunpack.c.l.b16 %v1628
  %v1727 = vunpack.c.l.b16 %v1629
  %v1728 = vunpack.c.l.b16 %v1630
  %v1729 = vunpack.c.l.b16 %v1631
  %v1730 = vunpack.c.l.b16 %v1632
  %v1731 = vunpack.c.l.b16 %v1633
  %v1732 = vunpack.c.l.b16 %v1634
  %v1733 = vunpack.c.l.b16 %v1635
  %v1734 = vunpack.c.l.b16 %v1636
  %v1735 = vunpack.c.l.b16 %v1637
  %v1736 = vunpack.c.l.b16 %v1638
  %v1737 = vunpack.c.l.b16 %v1639
  %v1738 = vunpack.c.l.b16 %v1640
  %v1739 = vunpack.c.l.b16 %v1641
  %v1740 = vunpack.c.l.b16 %v1642
  %v1741 = vunpack.c.l.b16 %v1643
  %v1742 = vunpack.c.l.b16 %v1644
  %v1743 = vunpack.c.l.b16 %v1645
  %v1744 = vunpack.c.l.b16 %v1646
  %v1745 = vunpack.c.l.b16 %v1647
  %v1746 = vunpack.c.l.b16 %v1648
  %v1747 = vpack.c.b16 %v1699, %v1698
  %v1748 = vpack.c.b16 %v1701, %v1700
  %v1749 = vpack.c.b16 %v1703, %v1702
  %v1750 = vpack.c.b16 %v1705, %v1704
  %v1751 = vpack.c.b16 %v1707, %v1706
  %v1752 = vpack.c.b16 %v1709, %v1708
  %v1753 = vpack.c.b16 %v1711, %v1710
  %v1754 = vpack.c.b16 %v1713, %v1712
  %v1755 = vpack.c.b16 %v1715, %v1714
  %v1756 = vpack.c.b16 %v1717, %v1716
  %v1757 = vpack.c.b16 %v1719, %v1718
  %v1758 = vpack.c.b16 %v1721, %v1720
  %v1759 = vpack.c.b16 %v1723, %v1722
  %v1760 = vpack.c.b16 %v1725, %v1724
  %v1761 = vpack.c.b16 %v1727, %v1726
  %v1762 = vpack.c.b16 %v1729, %v1728
  %v1763 = vpack.c.b16 %v1731, %v1730
  %v1764 = vpack.c.b16 %v1733, %v1732
  %v1765 = vpack.c.b16 %v1735, %v1734
  %v1766 = vpack.c.b16 %v1737, %v1736
  %v1767 = vpack.c.b16 %v1739, %v1738
  %v1768 = vpack.c.b16 %v1741, %v1740
  %v1769 = vpack.c.b16 %v1743, %v1742
  %v1770 = vpack.c.b16 %v1745, %v1744
  %v1771 = vpack.c.b16 %v1746, %v1746
  %v1773 = vsel %vm226, %v1747, 0
  %v1776 = vsel %vm226, %v1748, 0
  %v1779 = vsel %vm226, %v1749, 0
  %v1782 = vsel %vm226, %v1750, 0
  %v1785 = vsel %vm226, %v1751, 0
  %v1788 = vsel %vm226, %v1752, 0
  %v1791 = vsel %vm226, %v1753, 0
  %v1794 = vsel %vm226, %v1754, 0
  %v1797 = vsel %vm226, %v1755, 0
  %v1800 = vsel %vm226, %v1756, 0
  %v1803 = vsel %vm226, %v1757, 0
  %v1806 = vsel %vm226, %v1758, 0
  %v1809 = vsel %vm226, %v1759, 0
  %v1812 = vsel %vm226, %v1760, 0
  %v1815 = vsel %vm226, %v1761, 0
  %v1818 = vsel %vm226, %v1762, 0
  %v1821 = vsel %vm226, %v1763, 0
  %v1824 = vsel %vm226, %v1764, 0
  %v1827 = vsel %vm226, %v1765, 0
  %v1830 = vsel %vm226, %v1766, 0
  %v1833 = vsel %vm226, %v1767, 0
  %v1836 = vsel %vm226, %v1768, 0
  %v1839 = vsel %vm226, %v1769, 0
  %v1842 = vsel %vm226, %v1770, 0
  %v1845 = vsel %vm226, %v1771, 0
  %1847 = vmatprep.subr.bf16.mxu0 0
  %1848 = vmatpush1.bf16.msra.mxu0 %v217
  %1849 = vmatprep.subr.bf16.mxu0 0
  %1850 = vmatpush1.bf16.msra.mxu0 %v218
  %1851 = vmatprep.subr.bf16.mxu0 0
  %1852 = vmatpush1.bf16.msra.mxu0 %v219
  %1853 = vmatprep.subr.bf16.mxu0 0
  %1854 = vmatpush1.bf16.msra.mxu0 %v220
  %1855 = vmatprep.subr.bf16.mxu0 0
  %1856 = vmatpush1.bf16.msra.mxu0 %v307
  %1857 = vmatprep.subr.bf16.mxu0 0
  %1858 = vmatpush1.bf16.msra.mxu0 0
  %1859 = vmatprep.subr.bf16.mxu0 0
  %1860 = vmatpush1.bf16.msra.mxu0 0
  %1861 = vmatprep.subr.bf16.mxu0 0
  %1862 = vmatpush1.bf16.msra.mxu0 0
  %1863 = vmatprep.subr.bf16.mxu0 0
  %1864 = vmatpush1.bf16.msra.mxu0 0
  %1865 = vmatprep.subr.bf16.mxu0 0
  %1866 = vmatpush1.bf16.msra.mxu0 0
  %1867 = vmatprep.subr.bf16.mxu0 0
  %1868 = vmatpush1.bf16.msra.mxu0 0
  %1869 = vmatprep.subr.bf16.mxu0 0
  %1870 = vmatpush1.bf16.msra.mxu0 0
  %1871 = vmatprep.subr.bf16.mxu0 0
  %1872 = vmatpush1.bf16.msra.mxu0 0
  %1873 = vmatprep.subr.bf16.mxu0 0
  %1874 = vmatpush1.bf16.msra.mxu0 0
  %1875 = vmatprep.subr.bf16.mxu0 0
  %1876 = vmatpush1.bf16.msra.mxu0 0
  %1877 = vmatprep.subr.bf16.mxu0 0
  %1878 = vmatpush1.bf16.msra.mxu0 0
  %1879 = vmatprep.mubr.bf16.mxu0 0
  %1880 = vmatmul.mubr.bf16.gmra.mrb[0].mxu0 %v1773
  %v1881 = vpop.f32.mrb[0].mxu0
  %v1882 = vadd.f32 0.0, %v1881
  %v1883 = vpop.f32.mrb[0].mxu0
  %v1884 = vpop.f32.mrb[0].mxu0
  %v1885 = vadd.f32 0.0, %v1884
  %v1886 = vpop.f32.mrb[0].mxu0
  %1887 = vmatprep.mubr.bf16.mxu0 0
  %1888 = vmatmul.mubr.bf16.gmra.mrb[0].mxu0 %v1776
  %v1889 = vpop.f32.mrb[0].mxu0
  %v1890 = vadd.f32 0.0, %v1889
  %v1891 = vpop.f32.mrb[0].mxu0
  %v1892 = vpop.f32.mrb[0].mxu0
  %v1893 = vadd.f32 0.0, %v1892
  %v1894 = vpop.f32.mrb[0].mxu0
  %1895 = vmatprep.mubr.bf16.mxu0 0
  %1896 = vmatmul.mubr.bf16.gmra.mrb[0].mxu0 %v1779
  %v1897 = vpop.f32.mrb[0].mxu0
  %v1898 = vadd.f32 0.0, %v1897
  %v1899 = vpop.f32.mrb[0].mxu0
  %v1900 = vpop.f32.mrb[0].mxu0
  %v1901 = vadd.f32 0.0, %v1900
  %v1902 = vpop.f32.mrb[0].mxu0
  %1903 = vmatprep.mubr.bf16.mxu0 0
  %1904 = vmatmul.mubr.bf16.gmra.mrb[0].mxu0 %v1782
  %v1905 = vpop.f32.mrb[0].mxu0
  %v1906 = vadd.f32 0.0, %v1905
  %v1907 = vpop.f32.mrb[0].mxu0
  %v1908 = vpop.f32.mrb[0].mxu0
  %v1909 = vadd.f32 0.0, %v1908
  %v1910 = vpop.f32.mrb[0].mxu0
  %1911 = vmatprep.mubr.bf16.mxu0 0
  %1912 = vmatmul.mubr.bf16.gmra.mrb[0].mxu0 %v1785
  %v1913 = vpop.f32.mrb[0].mxu0
  %v1914 = vadd.f32 0.0, %v1913
  %v1915 = vpop.f32.mrb[0].mxu0
  %v1916 = vpop.f32.mrb[0].mxu0
  %v1917 = vadd.f32 0.0, %v1916
  %v1918 = vpop.f32.mrb[0].mxu0
  %1919 = vmatprep.mubr.bf16.mxu0 0
  %1920 = vmatmul.mubr.bf16.gmra.mrb[0].mxu0 %v1788
  %v1921 = vpop.f32.mrb[0].mxu0
  %v1922 = vadd.f32 0.0, %v1921
  %v1923 = vpop.f32.mrb[0].mxu0
  %v1924 = vpop.f32.mrb[0].mxu0
  %v1925 = vadd.f32 0.0, %v1924
  %v1926 = vpop.f32.mrb[0].mxu0
  %1927 = vmatprep.mubr.bf16.mxu0 0
  %1928 = vmatmul.mubr.bf16.gmra.mrb[0].mxu0 %v1791
  %v1929 = vpop.f32.mrb[0].mxu0
  %v1930 = vadd.f32 0.0, %v1929
  %v1931 = vpop.f32.mrb[0].mxu0
  %v1932 = vpop.f32.mrb[0].mxu0
  %v1933 = vadd.f32 0.0, %v1932
  %v1934 = vpop.f32.mrb[0].mxu0
  %1935 = vmatprep.mubr.bf16.mxu0 0
  %1936 = vmatmul.mubr.bf16.gmra.mrb[0].mxu0 %v1794
  %v1937 = vpop.f32.mrb[0].mxu0
  %v1938 = vadd.f32 0.0, %v1937
  %v1939 = vpop.f32.mrb[0].mxu0
  %v1940 = vpop.f32.mrb[0].mxu0
  %v1941 = vadd.f32 0.0, %v1940
  %v1942 = vpop.f32.mrb[0].mxu0
  %1943 = vmatprep.mubr.bf16.mxu0 0
  %1944 = vmatmul.mubr.bf16.gmra.mrb[0].mxu0 %v1797
  %v1945 = vpop.f32.mrb[0].mxu0
  %v1946 = vadd.f32 0.0, %v1945
  %v1947 = vpop.f32.mrb[0].mxu0
  %v1948 = vpop.f32.mrb[0].mxu0
  %v1949 = vadd.f32 0.0, %v1948
  %v1950 = vpop.f32.mrb[0].mxu0
  %1951 = vmatprep.mubr.bf16.mxu0 0
  %1952 = vmatmul.mubr.bf16.gmra.mrb[0].mxu0 %v1800
  %v1953 = vpop.f32.mrb[0].mxu0
  %v1954 = vadd.f32 0.0, %v1953
  %v1955 = vpop.f32.mrb[0].mxu0
  %v1956 = vpop.f32.mrb[0].mxu0
  %v1957 = vadd.f32 0.0, %v1956
  %v1958 = vpop.f32.mrb[0].mxu0
  %1959 = vmatprep.mubr.bf16.mxu0 0
  %1960 = vmatmul.mubr.bf16.gmra.mrb[0].mxu0 %v1803
  %v1961 = vpop.f32.mrb[0].mxu0
  %v1962 = vadd.f32 0.0, %v1961
  %v1963 = vpop.f32.mrb[0].mxu0
  %v1964 = vpop.f32.mrb[0].mxu0
  %v1965 = vadd.f32 0.0, %v1964
  %v1966 = vpop.f32.mrb[0].mxu0
  %1967 = vmatprep.mubr.bf16.mxu0 0
  %1968 = vmatmul.mubr.bf16.gmra.mrb[0].mxu0 %v1806
  %v1969 = vpop.f32.mrb[0].mxu0
  %v1970 = vadd.f32 0.0, %v1969
  %v1971 = vpop.f32.mrb[0].mxu0
  %v1972 = vpop.f32.mrb[0].mxu0
  %v1973 = vadd.f32 0.0, %v1972
  %v1974 = vpop.f32.mrb[0].mxu0
  %1975 = vmatprep.mubr.bf16.mxu0 0
  %1976 = vmatmul.mubr.bf16.gmra.mrb[0].mxu0 %v1809
  %v1977 = vpop.f32.mrb[0].mxu0
  %v1978 = vadd.f32 0.0, %v1977
  %v1979 = vpop.f32.mrb[0].mxu0
  %v1980 = vpop.f32.mrb[0].mxu0
  %v1981 = vadd.f32 0.0, %v1980
  %v1982 = vpop.f32.mrb[0].mxu0
  %1983 = vmatprep.mubr.bf16.mxu0 0
  %1984 = vmatmul.mubr.bf16.gmra.mrb[0].mxu0 %v1812
  %v1985 = vpop.f32.mrb[0].mxu0
  %v1986 = vadd.f32 0.0, %v1985
  %v1987 = vpop.f32.mrb[0].mxu0
  %v1988 = vpop.f32.mrb[0].mxu0
  %v1989 = vadd.f32 0.0, %v1988
  %v1990 = vpop.f32.mrb[0].mxu0
  %1991 = vmatprep.mubr.bf16.mxu0 0
  %1992 = vmatmul.mubr.bf16.gmra.mrb[0].mxu0 %v1815
  %v1993 = vpop.f32.mrb[0].mxu0
  %v1994 = vadd.f32 0.0, %v1993
  %v1995 = vpop.f32.mrb[0].mxu0
  %v1996 = vpop.f32.mrb[0].mxu0
  %v1997 = vadd.f32 0.0, %v1996
  %v1998 = vpop.f32.mrb[0].mxu0
  %1999 = vmatprep.mubr.bf16.mxu0 0
  %2000 = vmatmul.mubr.bf16.gmra.mrb[0].mxu0 %v1818
  %v2001 = vpop.f32.mrb[0].mxu0
  %v2002 = vadd.f32 0.0, %v2001
  %v2003 = vpop.f32.mrb[0].mxu0
  %v2004 = vpop.f32.mrb[0].mxu0
  %v2005 = vadd.f32 0.0, %v2004
  %v2006 = vpop.f32.mrb[0].mxu0
  %2007 = vmatprep.mubr.bf16.mxu0 0
  %2008 = vmatmul.mubr.bf16.gmra.mrb[0].mxu0 %v1821
  %v2009 = vpop.f32.mrb[0].mxu0
  %v2010 = vadd.f32 0.0, %v2009
  %v2011 = vpop.f32.mrb[0].mxu0
  %v2012 = vpop.f32.mrb[0].mxu0
  %v2013 = vadd.f32 0.0, %v2012
  %v2014 = vpop.f32.mrb[0].mxu0
  %2015 = vmatprep.mubr.bf16.mxu0 0
  %2016 = vmatmul.mubr.bf16.gmra.mrb[0].mxu0 %v1824
  %v2017 = vpop.f32.mrb[0].mxu0
  %v2018 = vadd.f32 0.0, %v2017
  %v2019 = vpop.f32.mrb[0].mxu0
  %v2020 = vpop.f32.mrb[0].mxu0
  %v2021 = vadd.f32 0.0, %v2020
  %v2022 = vpop.f32.mrb[0].mxu0
  %2023 = vmatprep.mubr.bf16.mxu0 0
  %2024 = vmatmul.mubr.bf16.gmra.mrb[0].mxu0 %v1827
  %v2025 = vpop.f32.mrb[0].mxu0
  %v2026 = vadd.f32 0.0, %v2025
  %v2027 = vpop.f32.mrb[0].mxu0
  %v2028 = vpop.f32.mrb[0].mxu0
  %v2029 = vadd.f32 0.0, %v2028
  %v2030 = vpop.f32.mrb[0].mxu0
  %2031 = vmatprep.mubr.bf16.mxu0 0
  %2032 = vmatmul.mubr.bf16.gmra.mrb[0].mxu0 %v1830
  %v2033 = vpop.f32.mrb[0].mxu0
  %v2034 = vadd.f32 0.0, %v2033
  %v2035 = vpop.f32.mrb[0].mxu0
  %v2036 = vpop.f32.mrb[0].mxu0
  %v2037 = vadd.f32 0.0, %v2036
  %v2038 = vpop.f32.mrb[0].mxu0
  %2039 = vmatprep.mubr.bf16.mxu0 0
  %2040 = vmatmul.mubr.bf16.gmra.mrb[0].mxu0 %v1833
  %v2041 = vpop.f32.mrb[0].mxu0
  %v2042 = vadd.f32 0.0, %v2041
  %v2043 = vpop.f32.mrb[0].mxu0
  %v2044 = vpop.f32.mrb[0].mxu0
  %v2045 = vadd.f32 0.0, %v2044
  %v2046 = vpop.f32.mrb[0].mxu0
  %2047 = vmatprep.mubr.bf16.mxu0 0
  %2048 = vmatmul.mubr.bf16.gmra.mrb[0].mxu0 %v1836
  %v2049 = vpop.f32.mrb[0].mxu0
  %v2050 = vadd.f32 0.0, %v2049
  %v2051 = vpop.f32.mrb[0].mxu0
  %v2052 = vpop.f32.mrb[0].mxu0
  %v2053 = vadd.f32 0.0, %v2052
  %v2054 = vpop.f32.mrb[0].mxu0
  %2055 = vmatprep.mubr.bf16.mxu0 0
  %2056 = vmatmul.mubr.bf16.gmra.mrb[0].mxu0 %v1839
  %v2057 = vpop.f32.mrb[0].mxu0
  %v2058 = vadd.f32 0.0, %v2057
  %v2059 = vpop.f32.mrb[0].mxu0
  %v2060 = vpop.f32.mrb[0].mxu0
  %v2061 = vadd.f32 0.0, %v2060
  %v2062 = vpop.f32.mrb[0].mxu0
  %2063 = vmatprep.mubr.bf16.mxu0 0
  %2064 = vmatmul.mubr.bf16.gmra.mrb[0].mxu0 %v1842
  %v2065 = vpop.f32.mrb[0].mxu0
  %v2066 = vadd.f32 0.0, %v2065
  %v2067 = vpop.f32.mrb[0].mxu0
  %v2068 = vpop.f32.mrb[0].mxu0
  %v2069 = vadd.f32 0.0, %v2068
  %v2070 = vpop.f32.mrb[0].mxu0
  %2071 = vmatprep.mubr.bf16.mxu0 0
  %2072 = vmatmul.mubr.bf16.gmra.mrb[0].mxu0 %v1845
  %v2073 = vpop.f32.mrb[0].mxu0
  %v2074 = vadd.f32 0.0, %v2073
  %v2075 = vpop.f32.mrb[0].mxu0
  %v2076 = vpop.f32.mrb[0].mxu0
  %v2077 = vpop.f32.mrb[0].mxu0
  %2078 = vdwg.mxu0
  %v2079 = vmax.f32 %v1550, %v1882
  %v2080 = vmax.f32 %v1551, %v1885
  %v2081 = vmax.f32 %v1552, %v1890
  %v2082 = vmax.f32 %v1553, %v1893
  %v2083 = vmax.f32 %v1554, %v1898
  %v2084 = vmax.f32 %v1555, %v1901
  %v2085 = vmax.f32 %v1556, %v1906
  %v2086 = vmax.f32 %v1557, %v1909
  %v2087 = vmax.f32 %v1558, %v1914
  %v2088 = vmax.f32 %v1559, %v1917
  %v2089 = vmax.f32 %v1560, %v1922
  %v2090 = vmax.f32 %v1561, %v1925
  %v2091 = vmax.f32 %v1562, %v1930
  %v2092 = vmax.f32 %v1563, %v1933
  %v2093 = vmax.f32 %v1564, %v1938
  %v2094 = vmax.f32 %v1565, %v1941
  %v2095 = vmax.f32 %v1566, %v1946
  %v2096 = vmax.f32 %v1567, %v1949
  %v2097 = vmax.f32 %v1568, %v1954
  %v2098 = vmax.f32 %v1569, %v1957
  %v2099 = vmax.f32 %v1570, %v1962
  %v2100 = vmax.f32 %v1571, %v1965
  %v2101 = vmax.f32 %v1572, %v1970
  %v2102 = vmax.f32 %v1573, %v1973
  %v2103 = vmax.f32 %v1574, %v1978
  %v2104 = vmax.f32 %v1575, %v1981
  %v2105 = vmax.f32 %v1576, %v1986
  %v2106 = vmax.f32 %v1577, %v1989
  %v2107 = vmax.f32 %v1578, %v1994
  %v2108 = vmax.f32 %v1579, %v1997
  %v2109 = vmax.f32 %v1580, %v2002
  %v2110 = vmax.f32 %v1581, %v2005
  %v2111 = vmax.f32 %v1582, %v2010
  %v2112 = vmax.f32 %v1583, %v2013
  %v2113 = vmax.f32 %v1584, %v2018
  %v2114 = vmax.f32 %v1585, %v2021
  %v2115 = vmax.f32 %v1586, %v2026
  %v2116 = vmax.f32 %v1587, %v2029
  %v2117 = vmax.f32 %v1588, %v2034
  %v2118 = vmax.f32 %v1589, %v2037
  %v2119 = vmax.f32 %v1590, %v2042
  %v2120 = vmax.f32 %v1591, %v2045
  %v2121 = vmax.f32 %v1592, %v2050
  %v2122 = vmax.f32 %v1593, %v2053
  %v2123 = vmax.f32 %v1594, %v2058
  %v2124 = vmax.f32 %v1595, %v2061
  %v2125 = vmax.f32 %v1596, %v2066
  %v2126 = vmax.f32 %v1597, %v2069
  %v2127 = vmax.f32 %v1598, %v2074
  %v2128 = vld [vmem:[%s2] sm:$0x1]
  %v2130 = vlaneseq
  %v2131 = vshrl.u32 %v2130, 7
  %v2132 = vsub.s32 0, %v2131
  %v2133 = vrot.slane %v2128, %v2132
  %v2135 = vadd.f32 %v2079, %v2133
  %v2136 = vadd.f32 %v2080, %v2133
  %v2137 = vadd.f32 %v2081, %v2133
  %v2138 = vadd.f32 %v2082, %v2133
  %v2139 = vadd.f32 %v2083, %v2133
  %v2140 = vadd.f32 %v2084, %v2133
  %v2141 = vadd.f32 %v2085, %v2133
  %v2142 = vadd.f32 %v2086, %v2133
  %v2143 = vadd.f32 %v2087, %v2133
  %v2144 = vadd.f32 %v2088, %v2133
  %v2145 = vadd.f32 %v2089, %v2133
  %v2146 = vadd.f32 %v2090, %v2133
  %v2147 = vadd.f32 %v2091, %v2133
  %v2148 = vadd.f32 %v2092, %v2133
  %v2149 = vadd.f32 %v2093, %v2133
  %v2150 = vadd.f32 %v2094, %v2133
  %v2151 = vadd.f32 %v2095, %v2133
  %v2152 = vadd.f32 %v2096, %v2133
  %v2153 = vadd.f32 %v2097, %v2133
  %v2154 = vadd.f32 %v2098, %v2133
  %v2155 = vadd.f32 %v2099, %v2133
  %v2156 = vadd.f32 %v2100, %v2133
  %v2157 = vadd.f32 %v2101, %v2133
  %v2158 = vadd.f32 %v2102, %v2133
  %v2159 = vadd.f32 %v2103, %v2133
  %v2160 = vadd.f32 %v2104, %v2133
  %v2161 = vadd.f32 %v2105, %v2133
  %v2162 = vadd.f32 %v2106, %v2133
  %v2163 = vadd.f32 %v2107, %v2133
  %v2164 = vadd.f32 %v2108, %v2133
  %v2165 = vadd.f32 %v2109, %v2133
  %v2166 = vadd.f32 %v2110, %v2133
  %v2167 = vadd.f32 %v2111, %v2133
  %v2168 = vadd.f32 %v2112, %v2133
  %v2169 = vadd.f32 %v2113, %v2133
  %v2170 = vadd.f32 %v2114, %v2133
  %v2171 = vadd.f32 %v2115, %v2133
  %v2172 = vadd.f32 %v2116, %v2133
  %v2173 = vadd.f32 %v2117, %v2133
  %v2174 = vadd.f32 %v2118, %v2133
  %v2175 = vadd.f32 %v2119, %v2133
  %v2176 = vadd.f32 %v2120, %v2133
  %v2177 = vadd.f32 %v2121, %v2133
  %v2178 = vadd.f32 %v2122, %v2133
  %v2179 = vadd.f32 %v2123, %v2133
  %v2180 = vadd.f32 %v2124, %v2133
  %v2181 = vadd.f32 %v2125, %v2133
  %v2182 = vadd.f32 %v2126, %v2133
  %v2183 = vadd.f32 %v2127, %v2133
  %v2184 = vmax.f32 %v2135, 0.0
  %v2185 = vmax.f32 %v2136, 0.0
  %v2186 = vmax.f32 %v2137, 0.0
  %v2187 = vmax.f32 %v2138, 0.0
  %v2188 = vmax.f32 %v2139, 0.0
  %v2189 = vmax.f32 %v2140, 0.0
  %v2190 = vmax.f32 %v2141, 0.0
  %v2191 = vmax.f32 %v2142, 0.0
  %v2192 = vmax.f32 %v2143, 0.0
  %v2193 = vmax.f32 %v2144, 0.0
  %v2194 = vmax.f32 %v2145, 0.0
  %v2195 = vmax.f32 %v2146, 0.0
  %v2196 = vmax.f32 %v2147, 0.0
  %v2197 = vmax.f32 %v2148, 0.0
  %v2198 = vmax.f32 %v2149, 0.0
  %v2199 = vmax.f32 %v2150, 0.0
  %v2200 = vmax.f32 %v2151, 0.0
  %v2201 = vmax.f32 %v2152, 0.0
  %v2202 = vmax.f32 %v2153, 0.0
  %v2203 = vmax.f32 %v2154, 0.0
  %v2204 = vmax.f32 %v2155, 0.0
  %v2205 = vmax.f32 %v2156, 0.0
  %v2206 = vmax.f32 %v2157, 0.0
  %v2207 = vmax.f32 %v2158, 0.0
  %v2208 = vmax.f32 %v2159, 0.0
  %v2209 = vmax.f32 %v2160, 0.0
  %v2210 = vmax.f32 %v2161, 0.0
  %v2211 = vmax.f32 %v2162, 0.0
  %v2212 = vmax.f32 %v2163, 0.0
  %v2213 = vmax.f32 %v2164, 0.0
  %v2214 = vmax.f32 %v2165, 0.0
  %v2215 = vmax.f32 %v2166, 0.0
  %v2216 = vmax.f32 %v2167, 0.0
  %v2217 = vmax.f32 %v2168, 0.0
  %v2218 = vmax.f32 %v2169, 0.0
  %v2219 = vmax.f32 %v2170, 0.0
  %v2220 = vmax.f32 %v2171, 0.0
  %v2221 = vmax.f32 %v2172, 0.0
  %v2222 = vmax.f32 %v2173, 0.0
  %v2223 = vmax.f32 %v2174, 0.0
  %v2224 = vmax.f32 %v2175, 0.0
  %v2225 = vmax.f32 %v2176, 0.0
  %v2226 = vmax.f32 %v2177, 0.0
  %v2227 = vmax.f32 %v2178, 0.0
  %v2228 = vmax.f32 %v2179, 0.0
  %v2229 = vmax.f32 %v2180, 0.0
  %v2230 = vmax.f32 %v2181, 0.0
  %v2231 = vmax.f32 %v2182, 0.0
  %v2232 = vmax.f32 %v2183, 0.0
  %v2233 = vpack.c.bf16 %v2185, %v2184
  %v2234 = vpack.c.bf16 %v2187, %v2186
  %v2235 = vpack.c.bf16 %v2189, %v2188
  %v2236 = vpack.c.bf16 %v2191, %v2190
  %v2237 = vpack.c.bf16 %v2193, %v2192
  %v2238 = vpack.c.bf16 %v2195, %v2194
  %v2239 = vpack.c.bf16 %v2197, %v2196
  %v2240 = vpack.c.bf16 %v2199, %v2198
  %v2241 = vpack.c.bf16 %v2201, %v2200
  %v2242 = vpack.c.bf16 %v2203, %v2202
  %v2243 = vpack.c.bf16 %v2205, %v2204
  %v2244 = vpack.c.bf16 %v2207, %v2206
  %v2245 = vpack.c.bf16 %v2209, %v2208
  %v2246 = vpack.c.bf16 %v2211, %v2210
  %v2247 = vpack.c.bf16 %v2213, %v2212
  %v2248 = vpack.c.bf16 %v2215, %v2214
  %v2249 = vpack.c.bf16 %v2217, %v2216
  %v2250 = vpack.c.bf16 %v2219, %v2218
  %v2251 = vpack.c.bf16 %v2221, %v2220
  %v2252 = vpack.c.bf16 %v2223, %v2222
  %v2253 = vpack.c.bf16 %v2225, %v2224
  %v2254 = vpack.c.bf16 %v2227, %v2226
  %v2255 = vpack.c.bf16 %v2229, %v2228
  %v2256 = vpack.c.bf16 %v2231, %v2230
  %v2257 = vpack.c.bf16 %v2232, %v2232
  %v2283 = vunpack.c.l.b16 %v2233
  %v2284 = vunpack.c.h.b16 %v2233
  %v2285 = vunpack.c.l.b16 %v2234
  %v2286 = vunpack.c.h.b16 %v2234
  %v2287 = vunpack.c.l.b16 %v2235
  %v2288 = vunpack.c.h.b16 %v2235
  %v2289 = vunpack.c.l.b16 %v2236
  %v2290 = vunpack.c.h.b16 %v2236
  %v2291 = vunpack.c.l.b16 %v2237
  %v2292 = vunpack.c.h.b16 %v2237
  %v2293 = vunpack.c.l.b16 %v2238
  %v2294 = vunpack.c.h.b16 %v2238
  %v2295 = vunpack.c.l.b16 %v2239
  %v2296 = vunpack.c.h.b16 %v2239
  %v2297 = vunpack.c.l.b16 %v2240
  %v2298 = vunpack.c.h.b16 %v2240
  %v2299 = vunpack.c.l.b16 %v2241
  %v2300 = vunpack.c.h.b16 %v2241
  %v2301 = vunpack.c.l.b16 %v2242
  %v2302 = vunpack.c.h.b16 %v2242
  %v2303 = vunpack.c.l.b16 %v2243
  %v2304 = vunpack.c.h.b16 %v2243
  %v2305 = vunpack.c.l.b16 %v2244
  %v2306 = vunpack.c.h.b16 %v2244
  %v2307 = vunpack.c.l.b16 %v2245
  %v2308 = vunpack.c.h.b16 %v2245
  %v2309 = vunpack.c.l.b16 %v2246
  %v2310 = vunpack.c.h.b16 %v2246
  %v2311 = vunpack.c.l.b16 %v2247
  %v2312 = vunpack.c.h.b16 %v2247
  %v2313 = vunpack.c.l.b16 %v2248
  %v2314 = vunpack.c.h.b16 %v2248
  %v2315 = vunpack.c.l.b16 %v2249
  %v2316 = vunpack.c.h.b16 %v2249
  %v2317 = vunpack.c.l.b16 %v2250
  %v2318 = vunpack.c.h.b16 %v2250
  %v2319 = vunpack.c.l.b16 %v2251
  %v2320 = vunpack.c.h.b16 %v2251
  %v2321 = vunpack.c.l.b16 %v2252
  %v2322 = vunpack.c.h.b16 %v2252
  %v2323 = vunpack.c.l.b16 %v2253
  %v2324 = vunpack.c.h.b16 %v2253
  %v2325 = vunpack.c.l.b16 %v2254
  %v2326 = vunpack.c.h.b16 %v2254
  %v2327 = vunpack.c.l.b16 %v2255
  %v2328 = vunpack.c.h.b16 %v2255
  %v2329 = vunpack.c.l.b16 %v2256
  %v2330 = vunpack.c.h.b16 %v2256
  %v2331 = vunpack.c.l.b16 %v2257
  %v2332 = vpack.c.b16 %v2283, %v2283
  %v2333 = vpack.c.b16 %v2284, %v2284
  %v2334 = vpack.c.b16 %v2285, %v2285
  %v2335 = vpack.c.b16 %v2286, %v2286
  %v2336 = vpack.c.b16 %v2287, %v2287
  %v2337 = vpack.c.b16 %v2288, %v2288
  %v2338 = vpack.c.b16 %v2289, %v2289
  %v2339 = vpack.c.b16 %v2290, %v2290
  %v2340 = vpack.c.b16 %v2291, %v2291
  %v2341 = vpack.c.b16 %v2292, %v2292
  %v2342 = vpack.c.b16 %v2293, %v2293
  %v2343 = vpack.c.b16 %v2294, %v2294
  %v2344 = vpack.c.b16 %v2295, %v2295
  %v2345 = vpack.c.b16 %v2296, %v2296
  %v2346 = vpack.c.b16 %v2297, %v2297
  %v2347 = vpack.c.b16 %v2298, %v2298
  %v2348 = vpack.c.b16 %v2299, %v2299
  %v2349 = vpack.c.b16 %v2300, %v2300
  %v2350 = vpack.c.b16 %v2301, %v2301
  %v2351 = vpack.c.b16 %v2302, %v2302
  %v2352 = vpack.c.b16 %v2303, %v2303
  %v2353 = vpack.c.b16 %v2304, %v2304
  %v2354 = vpack.c.b16 %v2305, %v2305
  %v2355 = vpack.c.b16 %v2306, %v2306
  %v2356 = vpack.c.b16 %v2307, %v2307
  %v2357 = vpack.c.b16 %v2308, %v2308
  %v2358 = vpack.c.b16 %v2309, %v2309
  %v2359 = vpack.c.b16 %v2310, %v2310
  %v2360 = vpack.c.b16 %v2311, %v2311
  %v2361 = vpack.c.b16 %v2312, %v2312
  %v2362 = vpack.c.b16 %v2313, %v2313
  %v2363 = vpack.c.b16 %v2314, %v2314
  %v2364 = vpack.c.b16 %v2315, %v2315
  %v2365 = vpack.c.b16 %v2316, %v2316
  %v2366 = vpack.c.b16 %v2317, %v2317
  %v2367 = vpack.c.b16 %v2318, %v2318
  %v2368 = vpack.c.b16 %v2319, %v2319
  %v2369 = vpack.c.b16 %v2320, %v2320
  %v2370 = vpack.c.b16 %v2321, %v2321
  %v2371 = vpack.c.b16 %v2322, %v2322
  %v2372 = vpack.c.b16 %v2323, %v2323
  %v2373 = vpack.c.b16 %v2324, %v2324
  %v2374 = vpack.c.b16 %v2325, %v2325
  %v2375 = vpack.c.b16 %v2326, %v2326
  %v2376 = vpack.c.b16 %v2327, %v2327
  %v2377 = vpack.c.b16 %v2328, %v2328
  %v2378 = vpack.c.b16 %v2329, %v2329
  %v2379 = vpack.c.b16 %v2330, %v2330
  %v2380 = vpack.c.b16 %v2331, %v2331
  %vm2430 = vcmask 44032
  %2431 = vst.msk [vmem:[%s3] sm:$0xf] %vm2430, %v2332
  %2432 = vst.msk [vmem:[%s3 + $0x4] sm:$0xf] %vm2430, %v2333
  %2433 = vst.msk [vmem:[%s3 + $0x8] sm:$0xf] %vm2430, %v2334
  %2434 = vst.msk [vmem:[%s3 + $0xc] sm:$0xf] %vm2430, %v2335
  %2435 = vst.msk [vmem:[%s3 + $0x10] sm:$0xf] %vm2430, %v2336
  %2436 = vst.msk [vmem:[%s3 + $0x14] sm:$0xf] %vm2430, %v2337
  %2437 = vst.msk [vmem:[%s3 + $0x18] sm:$0xf] %vm2430, %v2338
  %2438 = vst.msk [vmem:[%s3 + $0x1c] sm:$0xf] %vm2430, %v2339
  %2439 = vst.msk [vmem:[%s3 + $0x20] sm:$0xf] %vm2430, %v2340
  %2440 = vst.msk [vmem:[%s3 + $0x24] sm:$0xf] %vm2430, %v2341
  %2441 = vst.msk [vmem:[%s3 + $0x28] sm:$0xf] %vm2430, %v2342
  %2442 = vst.msk [vmem:[%s3 + $0x2c] sm:$0xf] %vm2430, %v2343
  %2443 = vst.msk [vmem:[%s3 + $0x30] sm:$0xf] %vm2430, %v2344
  %2444 = vst.msk [vmem:[%s3 + $0x34] sm:$0xf] %vm2430, %v2345
  %2445 = vst.msk [vmem:[%s3 + $0x38] sm:$0xf] %vm2430, %v2346
  %2446 = vst.msk [vmem:[%s3 + $0x3c] sm:$0xf] %vm2430, %v2347
  %2447 = vst.msk [vmem:[%s3 + $0x40] sm:$0xf] %vm2430, %v2348
  %2448 = vst.msk [vmem:[%s3 + $0x44] sm:$0xf] %vm2430, %v2349
  %2449 = vst.msk [vmem:[%s3 + $0x48] sm:$0xf] %vm2430, %v2350
  %2450 = vst.msk [vmem:[%s3 + $0x4c] sm:$0xf] %vm2430, %v2351
  %2451 = vst.msk [vmem:[%s3 + $0x50] sm:$0xf] %vm2430, %v2352
  %2452 = vst.msk [vmem:[%s3 + $0x54] sm:$0xf] %vm2430, %v2353
  %2453 = vst.msk [vmem:[%s3 + $0x58] sm:$0xf] %vm2430, %v2354
  %2454 = vst.msk [vmem:[%s3 + $0x5c] sm:$0xf] %vm2430, %v2355
  %2455 = vst.msk [vmem:[%s3 + $0x60] sm:$0xf] %vm2430, %v2356
  %2456 = vst.msk [vmem:[%s3 + $0x64] sm:$0xf] %vm2430, %v2357
  %2457 = vst.msk [vmem:[%s3 + $0x68] sm:$0xf] %vm2430, %v2358
  %2458 = vst.msk [vmem:[%s3 + $0x6c] sm:$0xf] %vm2430, %v2359
  %2459 = vst.msk [vmem:[%s3 + $0x70] sm:$0xf] %vm2430, %v2360
  %2460 = vst.msk [vmem:[%s3 + $0x74] sm:$0xf] %vm2430, %v2361
  %2461 = vst.msk [vmem:[%s3 + $0x78] sm:$0xf] %vm2430, %v2362
  %2462 = vst.msk [vmem:[%s3 + $0x7c] sm:$0xf] %vm2430, %v2363
  %2463 = vst.msk [vmem:[%s3 + $0x80] sm:$0xf] %vm2430, %v2364
  %2464 = vst.msk [vmem:[%s3 + $0x84] sm:$0xf] %vm2430, %v2365
  %2465 = vst.msk [vmem:[%s3 + $0x88] sm:$0xf] %vm2430, %v2366
  %2466 = vst.msk [vmem:[%s3 + $0x8c] sm:$0xf] %vm2430, %v2367
  %2467 = vst.msk [vmem:[%s3 + $0x90] sm:$0xf] %vm2430, %v2368
  %2468 = vst.msk [vmem:[%s3 + $0x94] sm:$0xf] %vm2430, %v2369
  %2469 = vst.msk [vmem:[%s3 + $0x98] sm:$0xf] %vm2430, %v2370
  %2470 = vst.msk [vmem:[%s3 + $0x9c] sm:$0xf] %vm2430, %v2371
  %2471 = vst.msk [vmem:[%s3 + $0xa0] sm:$0xf] %vm2430, %v2372
  %2472 = vst.msk [vmem:[%s3 + $0xa4] sm:$0xf] %vm2430, %v2373
  %2473 = vst.msk [vmem:[%s3 + $0xa8] sm:$0xf] %vm2430, %v2374
  %2474 = vst.msk [vmem:[%s3 + $0xac] sm:$0xf] %vm2430, %v2375
  %2475 = vst.msk [vmem:[%s3 + $0xb0] sm:$0xf] %vm2430, %v2376
  %2476 = vst.msk [vmem:[%s3 + $0xb4] sm:$0xf] %vm2430, %v2377
  %2477 = vst.msk [vmem:[%s3 + $0xb8] sm:$0xf] %vm2430, %v2378
  %2478 = vst.msk [vmem:[%s3 + $0xbc] sm:$0xf] %vm2430, %v2379
  %2479 = vst.msk [vmem:[%s3 + $0xc0] sm:$0xf] %vm2430, %v2380
  // Predicated region
  $region14: #{net_forward.2} parent=0 // pred_check
    _
  $region15: #{net_forward.2} parent=0 // pred_check_branch
    %2481 = sbr.rel (0) target = $region17
  $region16: #{net_forward.2} parent=0 // pred_region
    _
  $region17: #{net_forward.2} parent=0 // pred_fallthru
    _
  // Predicated region
  $region18: #{net_forward.2} parent=0 // pred_check
    _
  $region19: #{net_forward.2} parent=0 // pred_check_branch
    %2483 = sbr.rel (0) target = $region21
  $region20: #{net_forward.2} parent=0 // pred_region
    _
  $region21: #{net_forward.2} parent=0 // pred_fallthru
    _

// kernel: net_forward.3
$region0: #{net_forward.3}
  #allocation0 [shape = 'u32[]', space=smem, size = 0x4, offset = 0x4, fixed_abs, tag = 'smem constant byte address 0x4 - core index']
  #allocation1 [shape = 'u32[144,128]{1,0:T(1,128)}', space=vmem, size = 0x12000, scoped, tag = 'internal scratch']
  #allocation2 [shape = 'bf16[50,16]{1,0:T(8,128)(2,1)}', space=vmem, size = 0x3800, scoped, tag = 'scratch operand']
  %s0 = inlined_call_operand.vmem [shape: bf16[4,50,150], index: 0, kind: input, shape index: {}]
  %s1 = inlined_call_operand.vmem [shape: bf16[150,16], index: 1, kind: input, shape index: {}]
  %s2 = inlined_call_operand.vmem [shape: f32[1,16], index: 2, kind: input, shape index: {}]
  %s3 = inlined_call_operand.vmem [shape: bf16[400,120], index: 3, kind: input, shape index: {}]
  %s4 = inlined_call_operand.vmem [shape: f32[1,120], index: 4, kind: input, shape index: {}]
  %s5 = inlined_call_operand.vmem [shape: bf16[120,84], index: 5, kind: input, shape index: {}]
  %s6 = inlined_call_operand.vmem [shape: f32[1,84], index: 6, kind: input, shape index: {}]
  %s7 = inlined_call_operand.vmem [shape: bf16[84,10], index: 7, kind: input, shape index: {}]
  %s8 = inlined_call_operand.vmem [shape: f32[1,10], index: 8, kind: input, shape index: {}]
  %s9 = inlined_call_operand.hbm [shape: f32[2,10], index: 9, kind: output, shape index: {}]
  %s10 = sld [smem:[#allocation0]]
  $region46: #{net_forward.3} parent=0
    _
  %s12 = ssub.s32 1, %s10
  %s13 = scalar_select 0, %s12, %s10
  $region1: #{net_forward.3} parent=0
    #allocation3 [shape = 'u8[1024]{0}', space=vmem, size = 0x400, scoped, tag = 'output window, operand 0, single buffered']
    #allocation4 [shape = 's32[1]{0}', space=sflag, size = 0x4, scoped, tag = 'scoped memory for net_forward.3']
    %14 = vsyncpa [#allocation4], 0
    // Predicated region
    $region2: #{net_forward.3} parent=1 // pred_check
      _
    $region3: #{net_forward.3} parent=1 // pred_check_branch
      %16 = sbr.rel (0) target = $region5
    $region4: #{net_forward.3} parent=1 // pred_region
      _
    $region5: #{net_forward.3} parent=1 // pred_fallthru
      _
    // Predicated region
    $region6: #{net_forward.3} parent=1 // pred_check
      _
    $region7: #{net_forward.3} parent=1 // pred_check_branch
      %18 = sbr.rel (0) target = $region9
    $region8: #{net_forward.3} parent=1 // pred_region
      _
    $region9: #{net_forward.3} parent=1 // pred_fallthru
      _
    // Predicated region
    $region10: #{net_forward.3} parent=1 // pred_check
      _
    $region11: #{net_forward.3} parent=1 // pred_check_branch
      %20 = sbr.rel (0) target = $region13
    $region12: #{net_forward.3} parent=1 // pred_region
      _
    $region13: #{net_forward.3} parent=1 // pred_fallthru
      _
    // Predicated region
    $region14: #{net_forward.3} parent=1 // pred_check
      _
    $region15: #{net_forward.3} parent=1 // pred_check_branch
      %22 = sbr.rel (0) target = $region17
    $region16: #{net_forward.3} parent=1 // pred_region
      _
    $region17: #{net_forward.3} parent=1 // pred_fallthru
      _
    // Predicated region
    $region18: #{net_forward.3} parent=1 // pred_check
      _
    $region19: #{net_forward.3} parent=1 // pred_check_branch
      %24 = sbr.rel (0) target = $region21
    $region20: #{net_forward.3} parent=1 // pred_region
      _
    $region21: #{net_forward.3} parent=1 // pred_fallthru
      _
    // Predicated region
    $region22: #{net_forward.3} parent=1 // pred_check
      _
    $region23: #{net_forward.3} parent=1 // pred_check_branch
      %26 = sbr.rel (0) target = $region25
    $region24: #{net_forward.3} parent=1 // pred_region
      _
    $region25: #{net_forward.3} parent=1 // pred_fallthru
      _
    // Predicated region
    $region26: #{net_forward.3} parent=1 // pred_check
      _
    $region27: #{net_forward.3} parent=1 // pred_check_branch
      %28 = sbr.rel (0) target = $region29
    $region28: #{net_forward.3} parent=1 // pred_region
      _
    $region29: #{net_forward.3} parent=1 // pred_fallthru
      _
    // Predicated region
    $region30: #{net_forward.3} parent=1 // pred_check
      _
    $region31: #{net_forward.3} parent=1 // pred_check_branch
      %30 = sbr.rel (0) target = $region33
    $region32: #{net_forward.3} parent=1 // pred_region
      _
    $region33: #{net_forward.3} parent=1 // pred_fallthru
      _
    // Predicated region
    $region34: #{net_forward.3} parent=1 // pred_check
      _
    $region35: #{net_forward.3} parent=1 // pred_check_branch
      %32 = sbr.rel (0) target = $region37
    $region36: #{net_forward.3} parent=1 // pred_region
      _
    $region37: #{net_forward.3} parent=1 // pred_fallthru
      _
    %v34 = vld [vmem:[%s0] sm:$0xff]
    %v35 = vld [vmem:[%s0 + $0x8] sm:$0xff]
    %v36 = vld [vmem:[%s0 + $0x10] sm:$0xff]
    %v37 = vld [vmem:[%s0 + $0x18] sm:$0xff]
    %v38 = vld [vmem:[%s0 + $0x20] sm:$0xff]
    %v39 = vld [vmem:[%s0 + $0x28] sm:$0xff]
    %v40 = vld [vmem:[%s0 + $0x30] sm:$0x11]
    %v41 = vld [vmem:[%s1] sm:$0xf]
    %v42 = vld [vmem:[%s1 + $0x4] sm:$0xf]
    %v43 = vld [vmem:[%s1 + $0x8] sm:$0xf]
    %v44 = vld [vmem:[%s1 + $0xc] sm:$0xf]
    %v45 = vld [vmem:[%s1 + $0x10] sm:$0xf]
    %v46 = vld [vmem:[%s1 + $0x14] sm:$0xf]
    %v47 = vld [vmem:[%s1 + $0x18] sm:$0xf]
    %v48 = vld [vmem:[%s1 + $0x1c] sm:$0xf]
    %v49 = vld [vmem:[%s1 + $0x20] sm:$0xf]
    %v50 = vld [vmem:[%s1 + $0x24] sm:$0xf]
    %v51 = vld [vmem:[%s1 + $0x28] sm:$0xf]
    %v52 = vld [vmem:[%s1 + $0x2c] sm:$0xf]
    %v53 = vld [vmem:[%s1 + $0x30] sm:$0xf]
    %v54 = vld [vmem:[%s1 + $0x34] sm:$0xf]
    %v55 = vld [vmem:[%s1 + $0x38] sm:$0xf]
    %v56 = vld [vmem:[%s1 + $0x3c] sm:$0xf]
    %v57 = vld [vmem:[%s1 + $0x40] sm:$0xf]
    %v58 = vld [vmem:[%s1 + $0x44] sm:$0xf]
    %v59 = vld [vmem:[%s1 + $0x48] sm:$0x7]
    %v67 = vunpack.c.l.b16 %v34
    %v68 = vunpack.c.h.b16 %v34
    %v69 = vunpack.c.l.b16 %v35
    %v70 = vunpack.c.h.b16 %v35
    %v71 = vunpack.c.l.b16 %v36
    %v72 = vunpack.c.h.b16 %v36
    %v73 = vunpack.c.l.b16 %v37
    %v74 = vunpack.c.h.b16 %v37
    %v75 = vunpack.c.l.b16 %v38
    %v76 = vunpack.c.h.b16 %v38
    %v77 = vunpack.c.l.b16 %v39
    %v78 = vunpack.c.h.b16 %v39
    %v79 = vunpack.c.l.b16 %v40
    %v80 = vunpack.c.h.b16 %v40
    %v81 = vpack.c.b16 %v69, %v67
    %v82 = vpack.c.b16 %v70, %v68
    %v83 = vpack.c.b16 %v73, %v71
    %v84 = vpack.c.b16 %v74, %v72
    %v85 = vpack.c.b16 %v77, %v75
    %v86 = vpack.c.b16 %v78, %v76
    %v87 = vpack.c.b16 %v79, %v79
    %v88 = vpack.c.b16 %v80, %v80
    %v112 = vunpack.c.l.b16 %v41
    %v113 = vunpack.c.l.b16 %v42
    %v114 = vunpack.c.l.b16 %v43
    %v115 = vunpack.c.l.b16 %v44
    %v116 = vunpack.c.l.b16 %v45
    %v117 = vunpack.c.l.b16 %v46
    %v118 = vunpack.c.l.b16 %v47
    %v119 = vunpack.c.l.b16 %v48
    %v120 = vunpack.c.l.b16 %v49
    %v121 = vunpack.c.l.b16 %v50
    %v122 = vunpack.c.l.b16 %v51
    %v123 = vunpack.c.l.b16 %v52
    %v124 = vunpack.c.l.b16 %v53
    %v125 = vunpack.c.l.b16 %v54
    %v126 = vunpack.c.l.b16 %v55
    %v127 = vunpack.c.l.b16 %v56
    %v128 = vunpack.c.l.b16 %v57
    %v129 = vunpack.c.l.b16 %v58
    %v130 = vunpack.c.l.b16 %v59
    %v131 = vpack.c.b16 %v113, %v112
    %v132 = vpack.c.b16 %v115, %v114
    %v133 = vpack.c.b16 %v117, %v116
    %v134 = vpack.c.b16 %v119, %v118
    %v135 = vpack.c.b16 %v121, %v120
    %v136 = vpack.c.b16 %v123, %v122
    %v137 = vpack.c.b16 %v125, %v124
    %v138 = vpack.c.b16 %v127, %v126
    %v139 = vpack.c.b16 %v129, %v128
    %v140 = vpack.c.b16 %v130, %v130
    %vm150 = vcmask 179200
    %v152 = vsel %vm150, %v82, 0
    %v155 = vsel %vm150, %v84, 0
    %v158 = vsel %vm150, %v86, 0
    %v161 = vsel %vm150, %v88, 0
    %vm163 = vcmask 1042432
    %v165 = vsel %vm163, %v140, 0
    %167 = vmatprep.subr.bf16.mxu0 0
    %168 = vmatpush1.bf16.msra.mxu0 %v131
    %169 = vmatprep.subr.bf16.mxu0 0
    %170 = vmatpush1.bf16.msra.mxu0 %v132
    %171 = vmatprep.subr.bf16.mxu0 0
    %172 = vmatpush1.bf16.msra.mxu0 %v133
    %173 = vmatprep.subr.bf16.mxu0 0
    %174 = vmatpush1.bf16.msra.mxu0 %v134
    %175 = vmatprep.subr.bf16.mxu0 0
    %176 = vmatpush1.bf16.msra.mxu0 %v135
    %177 = vmatprep.subr.bf16.mxu0 0
    %178 = vmatpush1.bf16.msra.mxu0 %v136
    %179 = vmatprep.subr.bf16.mxu0 0
    %180 = vmatpush1.bf16.msra.mxu0 %v137
    %181 = vmatprep.subr.bf16.mxu0 0
    %182 = vmatpush1.bf16.msra.mxu0 %v138
    %183 = vmatprep.subr.bf16.mxu0 0
    %184 = vmatpush1.bf16.msra.mxu0 %v139
    %185 = vmatprep.subr.bf16.mxu0 0
    %186 = vmatpush1.bf16.msra.mxu0 %v165
    %187 = vmatprep.subr.bf16.mxu0 0
    %188 = vmatpush1.bf16.msra.mxu0 0
    %189 = vmatprep.subr.bf16.mxu0 0
    %190 = vmatpush1.bf16.msra.mxu0 0
    %191 = vmatprep.subr.bf16.mxu0 0
    %192 = vmatpush1.bf16.msra.mxu0 0
    %193 = vmatprep.subr.bf16.mxu0 0
    %194 = vmatpush1.bf16.msra.mxu0 0
    %195 = vmatprep.subr.bf16.mxu0 0
    %196 = vmatpush1.bf16.msra.mxu0 0
    %197 = vmatprep.subr.bf16.mxu0 0
    %198 = vmatpush1.bf16.msra.mxu0 0
    %199 = vmatprep.mubr.bf16.mxu0 %v152
    %200 = vmatmul.mubr.bf16.gmra.mrb[0].mxu0 %v81
    %v201 = vpop.f32.mrb[0].mxu0
    %v202 = vadd.f32 0.0, %v201
    %v203 = vpop.f32.mrb[0].mxu0
    %v204 = vpop.f32.mrb[0].mxu0
    %v205 = vadd.f32 0.0, %v204
    %v206 = vpop.f32.mrb[0].mxu0
    %207 = vmatprep.mubr.bf16.mxu0 %v155
    %208 = vmatmul.mubr.bf16.gmra.mrb[0].mxu0 %v83
    %v209 = vpop.f32.mrb[0].mxu0
    %v210 = vadd.f32 0.0, %v209
    %v211 = vpop.f32.mrb[0].mxu0
    %v212 = vpop.f32.mrb[0].mxu0
    %v213 = vadd.f32 0.0, %v212
    %v214 = vpop.f32.mrb[0].mxu0
    %215 = vmatprep.mubr.bf16.mxu0 %v158
    %216 = vmatmul.mubr.bf16.gmra.mrb[0].mxu0 %v85
    %v217 = vpop.f32.mrb[0].mxu0
    %v218 = vadd.f32 0.0, %v217
    %v219 = vpop.f32.mrb[0].mxu0
    %v220 = vpop.f32.mrb[0].mxu0
    %v221 = vadd.f32 0.0, %v220
    %v222 = vpop.f32.mrb[0].mxu0
    %223 = vmatprep.mubr.bf16.mxu0 %v161
    %224 = vmatmul.mubr.bf16.gmra.mrb[0].mxu0 %v87
    %v225 = vpop.f32.mrb[0].mxu0
    %v226 = vadd.f32 0.0, %v225
    %v227 = vpop.f32.mrb[0].mxu0
    %v228 = vpop.f32.mrb[0].mxu0
    %v229 = vpop.f32.mrb[0].mxu0
    %230 = vdwg.mxu0
    %s231 = scalar_lea.vmem %s0, 56
    %v232 = vld [vmem:[%s231] sm:$0xff]
    %v233 = vld [vmem:[%s231 + $0x8] sm:$0xff]
    %v234 = vld [vmem:[%s231 + $0x10] sm:$0xff]
    %v235 = vld [vmem:[%s231 + $0x18] sm:$0xff]
    %v236 = vld [vmem:[%s231 + $0x20] sm:$0xff]
    %v237 = vld [vmem:[%s231 + $0x28] sm:$0xff]
    %v238 = vld [vmem:[%s231 + $0x30] sm:$0x11]
    %v246 = vunpack.c.l.b16 %v232
    %v247 = vunpack.c.h.b16 %v232
    %v248 = vunpack.c.l.b16 %v233
    %v249 = vunpack.c.h.b16 %v233
    %v250 = vunpack.c.l.b16 %v234
    %v251 = vunpack.c.h.b16 %v234
    %v252 = vunpack.c.l.b16 %v235
    %v253 = vunpack.c.h.b16 %v235
    %v254 = vunpack.c.l.b16 %v236
    %v255 = vunpack.c.h.b16 %v236
    %v256 = vunpack.c.l.b16 %v237
    %v257 = vunpack.c.h.b16 %v237
    %v258 = vunpack.c.l.b16 %v238
    %v259 = vunpack.c.h.b16 %v238
    %v260 = vpack.c.b16 %v248, %v246
    %v261 = vpack.c.b16 %v249, %v247
    %v262 = vpack.c.b16 %v252, %v250
    %v263 = vpack.c.b16 %v253, %v251
    %v264 = vpack.c.b16 %v256, %v254
    %v265 = vpack.c.b16 %v257, %v255
    %v266 = vpack.c.b16 %v258, %v258
    %v267 = vpack.c.b16 %v259, %v259
    %v273 = vsel %vm150, %v261, 0
    %v276 = vsel %vm150, %v263, 0
    %v279 = vsel %vm150, %v265, 0
    %v282 = vsel %vm150, %v267, 0
    %284 = vmatprep.subr.bf16.mxu0 0
    %285 = vmatpush1.bf16.msra.mxu0 %v131
    %286 = vmatprep.subr.bf16.mxu0 0
    %287 = vmatpush1.bf16.msra.mxu0 %v132
    %288 = vmatprep.subr.bf16.mxu0 0
    %289 = vmatpush1.bf16.msra.mxu0 %v133
    %290 = vmatprep.subr.bf16.mxu0 0
    %291 = vmatpush1.bf16.msra.mxu0 %v134
    %292 = vmatprep.subr.bf16.mxu0 0
    %293 = vmatpush1.bf16.msra.mxu0 %v135
    %294 = vmatprep.subr.bf16.mxu0 0
    %295 = vmatpush1.bf16.msra.mxu0 %v136
    %296 = vmatprep.subr.bf16.mxu0 0
    %297 = vmatpush1.bf16.msra.mxu0 %v137
    %298 = vmatprep.subr.bf16.mxu0 0
    %299 = vmatpush1.bf16.msra.mxu0 %v138
    %300 = vmatprep.subr.bf16.mxu0 0
    %301 = vmatpush1.bf16.msra.mxu0 %v139
    %302 = vmatprep.subr.bf16.mxu0 0
    %303 = vmatpush1.bf16.msra.mxu0 %v165
    %304 = vmatprep.subr.bf16.mxu0 0
    %305 = vmatpush1.bf16.msra.mxu0 0
    %306 = vmatprep.subr.bf16.mxu0 0
    %307 = vmatpush1.bf16.msra.mxu0 0
    %308 = vmatprep.subr.bf16.mxu0 0
    %309 = vmatpush1.bf16.msra.mxu0 0
    %310 = vmatprep.subr.bf16.mxu0 0
    %311 = vmatpush1.bf16.msra.mxu0 0
    %312 = vmatprep.subr.bf16.mxu0 0
    %313 = vmatpush1.bf16.msra.mxu0 0
    %314 = vmatprep.subr.bf16.mxu0 0
    %315 = vmatpush1.bf16.msra.mxu0 0
    %316 = vmatprep.mubr.bf16.mxu0 %v273
    %317 = vmatmul.mubr.bf16.gmra.mrb[0].mxu0 %v260
    %v318 = vpop.f32.mrb[0].mxu0
    %v319 = vadd.f32 0.0, %v318
    %v320 = vpop.f32.mrb[0].mxu0
    %v321 = vpop.f32.mrb[0].mxu0
    %v322 = vadd.f32 0.0, %v321
    %v323 = vpop.f32.mrb[0].mxu0
    %324 = vmatprep.mubr.bf16.mxu0 %v276
    %325 = vmatmul.mubr.bf16.gmra.mrb[0].mxu0 %v262
    %v326 = vpop.f32.mrb[0].mxu0
    %v327 = vadd.f32 0.0, %v326
    %v328 = vpop.f32.mrb[0].mxu0
    %v329 = vpop.f32.mrb[0].mxu0
    %v330 = vadd.f32 0.0, %v329
    %v331 = vpop.f32.mrb[0].mxu0
    %332 = vmatprep.mubr.bf16.mxu0 %v279
    %333 = vmatmul.mubr.bf16.gmra.mrb[0].mxu0 %v264
    %v334 = vpop.f32.mrb[0].mxu0
    %v335 = vadd.f32 0.0, %v334
    %v336 = vpop.f32.mrb[0].mxu0
    %v337 = vpop.f32.mrb[0].mxu0
    %v338 = vadd.f32 0.0, %v337
    %v339 = vpop.f32.mrb[0].mxu0
    %340 = vmatprep.mubr.bf16.mxu0 %v282
    %341 = vmatmul.mubr.bf16.gmra.mrb[0].mxu0 %v266
    %v342 = vpop.f32.mrb[0].mxu0
    %v343 = vadd.f32 0.0, %v342
    %v344 = vpop.f32.mrb[0].mxu0
    %v345 = vpop.f32.mrb[0].mxu0
    %v346 = vpop.f32.mrb[0].mxu0
    %347 = vdwg.mxu0
    %v348 = vmax.f32 %v202, %v319
    %v349 = vmax.f32 %v205, %v322
    %v350 = vmax.f32 %v210, %v327
    %v351 = vmax.f32 %v213, %v330
    %v352 = vmax.f32 %v218, %v335
    %v353 = vmax.f32 %v221, %v338
    %v354 = vmax.f32 %v226, %v343
    %s355 = scalar_lea.vmem %s0, 112
    %v356 = vld [vmem:[%s355] sm:$0xff]
    %v357 = vld [vmem:[%s355 + $0x8] sm:$0xff]
    %v358 = vld [vmem:[%s355 + $0x10] sm:$0xff]
    %v359 = vld [vmem:[%s355 + $0x18] sm:$0xff]
    %v360 = vld [vmem:[%s355 + $0x20] sm:$0xff]
    %v361 = vld [vmem:[%s355 + $0x28] sm:$0xff]
    %v362 = vld [vmem:[%s355 + $0x30] sm:$0x11]
    %v370 = vunpack.c.l.b16 %v356
    %v371 = vunpack.c.h.b16 %v356
    %v372 = vunpack.c.l.b16 %v357
    %v373 = vunpack.c.h.b16 %v357
    %v374 = vunpack.c.l.b16 %v358
    %v375 = vunpack.c.h.b16 %v358
    %v376 = vunpack.c.l.b16 %v359
    %v377 = vunpack.c.h.b16 %v359
    %v378 = vunpack.c.l.b16 %v360
    %v379 = vunpack.c.h.b16 %v360
    %v380 = vunpack.c.l.b16 %v361
    %v381 = vunpack.c.h.b16 %v361
    %v382 = vunpack.c.l.b16 %v362
    %v383 = vunpack.c.h.b16 %v362
    %v384 = vpack.c.b16 %v372, %v370
    %v385 = vpack.c.b16 %v373, %v371
    %v386 = vpack.c.b16 %v376, %v374
    %v387 = vpack.c.b16 %v377, %v375
    %v388 = vpack.c.b16 %v380, %v378
    %v389 = vpack.c.b16 %v381, %v379
    %v390 = vpack.c.b16 %v382, %v382
    %v391 = vpack.c.b16 %v383, %v383
    %v397 = vsel %vm150, %v385, 0
    %v400 = vsel %vm150, %v387, 0
    %v403 = vsel %vm150, %v389, 0
    %v406 = vsel %vm150, %v391, 0
    %408 = vmatprep.subr.bf16.mxu0 0
    %409 = vmatpush1.bf16.msra.mxu0 %v131
    %410 = vmatprep.subr.bf16.mxu0 0
    %411 = vmatpush1.bf16.msra.mxu0 %v132
    %412 = vmatprep.subr.bf16.mxu0 0
    %413 = vmatpush1.bf16.msra.mxu0 %v133
    %414 = vmatprep.subr.bf16.mxu0 0
    %415 = vmatpush1.bf16.msra.mxu0 %v134
    %416 = vmatprep.subr.bf16.mxu0 0
    %417 = vmatpush1.bf16.msra.mxu0 %v135
    %418 = vmatprep.subr.bf16.mxu0 0
    %419 = vmatpush1.bf16.msra.mxu0 %v136
    %420 = vmatprep.subr.bf16.mxu0 0
    %421 = vmatpush1.bf16.msra.mxu0 %v137
    %422 = vmatprep.subr.bf16.mxu0 0
    %423 = vmatpush1.bf16.msra.mxu0 %v138
    %424 = vmatprep.subr.bf16.mxu0 0
    %425 = vmatpush1.bf16.msra.mxu0 %v139
    %426 = vmatprep.subr.bf16.mxu0 0
    %427 = vmatpush1.bf16.msra.mxu0 %v165
    %428 = vmatprep.subr.bf16.mxu0 0
    %429 = vmatpush1.bf16.msra.mxu0 0
    %430 = vmatprep.subr.bf16.mxu0 0
    %431 = vmatpush1.bf16.msra.mxu0 0
    %432 = vmatprep.subr.bf16.mxu0 0
    %433 = vmatpush1.bf16.msra.mxu0 0
    %434 = vmatprep.subr.bf16.mxu0 0
    %435 = vmatpush1.bf16.msra.mxu0 0
    %436 = vmatprep.subr.bf16.mxu0 0
    %437 = vmatpush1.bf16.msra.mxu0 0
    %438 = vmatprep.subr.bf16.mxu0 0
    %439 = vmatpush1.bf16.msra.mxu0 0
    %440 = vmatprep.mubr.bf16.mxu0 %v397
    %441 = vmatmul.mubr.bf16.gmra.mrb[0].mxu0 %v384
    %v442 = vpop.f32.mrb[0].mxu0
    %v443 = vadd.f32 0.0, %v442
    %v444 = vpop.f32.mrb[0].mxu0
    %v445 = vpop.f32.mrb[0].mxu0
    %v446 = vadd.f32 0.0, %v445
    %v447 = vpop.f32.mrb[0].mxu0
    %448 = vmatprep.mubr.bf16.mxu0 %v400
    %449 = vmatmul.mubr.bf16.gmra.mrb[0].mxu0 %v386
    %v450 = vpop.f32.mrb[0].mxu0
    %v451 = vadd.f32 0.0, %v450
    %v452 = vpop.f32.mrb[0].mxu0
    %v453 = vpop.f32.mrb[0].mxu0
    %v454 = vadd.f32 0.0, %v453
    %v455 = vpop.f32.mrb[0].mxu0
    %456 = vmatprep.mubr.bf16.mxu0 %v403
    %457 = vmatmul.mubr.bf16.gmra.mrb[0].mxu0 %v388
    %v458 = vpop.f32.mrb[0].mxu0
    %v459 = vadd.f32 0.0, %v458
    %v460 = vpop.f32.mrb[0].mxu0
    %v461 = vpop.f32.mrb[0].mxu0
    %v462 = vadd.f32 0.0, %v461
    %v463 = vpop.f32.mrb[0].mxu0
    %464 = vmatprep.mubr.bf16.mxu0 %v406
    %465 = vmatmul.mubr.bf16.gmra.mrb[0].mxu0 %v390
    %v466 = vpop.f32.mrb[0].mxu0
    %v467 = vadd.f32 0.0, %v466
    %v468 = vpop.f32.mrb[0].mxu0
    %v469 = vpop.f32.mrb[0].mxu0
    %v470 = vpop.f32.mrb[0].mxu0
    %471 = vdwg.mxu0
    %v472 = vmax.f32 %v348, %v443
    %v473 = vmax.f32 %v349, %v446
    %v474 = vmax.f32 %v350, %v451
    %v475 = vmax.f32 %v351, %v454
    %v476 = vmax.f32 %v352, %v459
    %v477 = vmax.f32 %v353, %v462
    %v478 = vmax.f32 %v354, %v467
    %s479 = scalar_lea.vmem %s0, 168
    %v480 = vld [vmem:[%s479] sm:$0xff]
    %v481 = vld [vmem:[%s479 + $0x8] sm:$0xff]
    %v482 = vld [vmem:[%s479 + $0x10] sm:$0xff]
    %v483 = vld [vmem:[%s479 + $0x18] sm:$0xff]
    %v484 = vld [vmem:[%s479 + $0x20] sm:$0xff]
    %v485 = vld [vmem:[%s479 + $0x28] sm:$0xff]
    %v486 = vld [vmem:[%s479 + $0x30] sm:$0x11]
    %v494 = vunpack.c.l.b16 %v480
    %v495 = vunpack.c.h.b16 %v480
    %v496 = vunpack.c.l.b16 %v481
    %v497 = vunpack.c.h.b16 %v481
    %v498 = vunpack.c.l.b16 %v482
    %v499 = vunpack.c.h.b16 %v482
    %v500 = vunpack.c.l.b16 %v483
    %v501 = vunpack.c.h.b16 %v483
    %v502 = vunpack.c.l.b16 %v484
    %v503 = vunpack.c.h.b16 %v484
    %v504 = vunpack.c.l.b16 %v485
    %v505 = vunpack.c.h.b16 %v485
    %v506 = vunpack.c.l.b16 %v486
    %v507 = vunpack.c.h.b16 %v486
    %v508 = vpack.c.b16 %v496, %v494
    %v509 = vpack.c.b16 %v497, %v495
    %v510 = vpack.c.b16 %v500, %v498
    %v511 = vpack.c.b16 %v501, %v499
    %v512 = vpack.c.b16 %v504, %v502
    %v513 = vpack.c.b16 %v505, %v503
    %v514 = vpack.c.b16 %v506, %v506
    %v515 = vpack.c.b16 %v507, %v507
    %v521 = vsel %vm150, %v509, 0
    %v524 = vsel %vm150, %v511, 0
    %v527 = vsel %vm150, %v513, 0
    %v530 = vsel %vm150, %v515, 0
    %532 = vmatprep.subr.bf16.mxu0 0
    %533 = vmatpush1.bf16.msra.mxu0 %v131
    %534 = vmatprep.subr.bf16.mxu0 0
    %535 = vmatpush1.bf16.msra.mxu0 %v132
    %536 = vmatprep.subr.bf16.mxu0 0
    %537 = vmatpush1.bf16.msra.mxu0 %v133
    %538 = vmatprep.subr.bf16.mxu0 0
    %539 = vmatpush1.bf16.msra.mxu0 %v134
    %540 = vmatprep.subr.bf16.mxu0 0
    %541 = vmatpush1.bf16.msra.mxu0 %v135
    %542 = vmatprep.subr.bf16.mxu0 0
    %543 = vmatpush1.bf16.msra.mxu0 %v136
    %544 = vmatprep.subr.bf16.mxu0 0
    %545 = vmatpush1.bf16.msra.mxu0 %v137
    %546 = vmatprep.subr.bf16.mxu0 0
    %547 = vmatpush1.bf16.msra.mxu0 %v138
    %548 = vmatprep.subr.bf16.mxu0 0
    %549 = vmatpush1.bf16.msra.mxu0 %v139
    %550 = vmatprep.subr.bf16.mxu0 0
    %551 = vmatpush1.bf16.msra.mxu0 %v165
    %552 = vmatprep.subr.bf16.mxu0 0
    %553 = vmatpush1.bf16.msra.mxu0 0
    %554 = vmatprep.subr.bf16.mxu0 0
    %555 = vmatpush1.bf16.msra.mxu0 0
    %556 = vmatprep.subr.bf16.mxu0 0
    %557 = vmatpush1.bf16.msra.mxu0 0
    %558 = vmatprep.subr.bf16.mxu0 0
    %559 = vmatpush1.bf16.msra.mxu0 0
    %560 = vmatprep.subr.bf16.mxu0 0
    %561 = vmatpush1.bf16.msra.mxu0 0
    %562 = vmatprep.subr.bf16.mxu0 0
    %563 = vmatpush1.bf16.msra.mxu0 0
    %564 = vmatprep.mubr.bf16.mxu0 %v521
    %565 = vmatmul.mubr.bf16.gmra.mrb[0].mxu0 %v508
    %v566 = vpop.f32.mrb[0].mxu0
    %v567 = vadd.f32 0.0, %v566
    %v568 = vpop.f32.mrb[0].mxu0
    %v569 = vpop.f32.mrb[0].mxu0
    %v570 = vadd.f32 0.0, %v569
    %v571 = vpop.f32.mrb[0].mxu0
    %572 = vmatprep.mubr.bf16.mxu0 %v524
    %573 = vmatmul.mubr.bf16.gmra.mrb[0].mxu0 %v510
    %v574 = vpop.f32.mrb[0].mxu0
    %v575 = vadd.f32 0.0, %v574
    %v576 = vpop.f32.mrb[0].mxu0
    %v577 = vpop.f32.mrb[0].mxu0
    %v578 = vadd.f32 0.0, %v577
    %v579 = vpop.f32.mrb[0].mxu0
    %580 = vmatprep.mubr.bf16.mxu0 %v527
    %581 = vmatmul.mubr.bf16.gmra.mrb[0].mxu0 %v512
    %v582 = vpop.f32.mrb[0].mxu0
    %v583 = vadd.f32 0.0, %v582
    %v584 = vpop.f32.mrb[0].mxu0
    %v585 = vpop.f32.mrb[0].mxu0
    %v586 = vadd.f32 0.0, %v585
    %v587 = vpop.f32.mrb[0].mxu0
    %588 = vmatprep.mubr.bf16.mxu0 %v530
    %589 = vmatmul.mubr.bf16.gmra.mrb[0].mxu0 %v514
    %v590 = vpop.f32.mrb[0].mxu0
    %v591 = vadd.f32 0.0, %v590
    %v592 = vpop.f32.mrb[0].mxu0
    %v593 = vpop.f32.mrb[0].mxu0
    %v594 = vpop.f32.mrb[0].mxu0
    %595 = vdwg.mxu0
    %v596 = vmax.f32 %v472, %v567
    %v597 = vmax.f32 %v473, %v570
    %v598 = vmax.f32 %v474, %v575
    %v599 = vmax.f32 %v475, %v578
    %v600 = vmax.f32 %v476, %v583
    %v601 = vmax.f32 %v477, %v586
    %v602 = vmax.f32 %v478, %v591
    %v603 = vld [vmem:[%s2] sm:$0x1]
    %v605 = vlaneseq
    %v606 = vshrl.u32 %v605, 7
    %v607 = vsub.s32 0, %v606
    %v608 = vrot.slane %v603, %v607
    %v610 = vadd.f32 %v596, %v608
    %v611 = vadd.f32 %v597, %v608
    %v612 = vadd.f32 %v598, %v608
    %v613 = vadd.f32 %v599, %v608
    %v614 = vadd.f32 %v600, %v608
    %v615 = vadd.f32 %v601, %v608
    %v616 = vadd.f32 %v602, %v608
    %v617 = vmax.f32 %v610, 0.0
    %v618 = vmax.f32 %v611, 0.0
    %v619 = vmax.f32 %v612, 0.0
    %v620 = vmax.f32 %v613, 0.0
    %v621 = vmax.f32 %v614, 0.0
    %v622 = vmax.f32 %v615, 0.0
    %v623 = vmax.f32 %v616, 0.0
    %v624 = vpack.c.bf16 %v618, %v617
    %v625 = vpack.c.bf16 %v620, %v619
    %v626 = vpack.c.bf16 %v622, %v621
    %v627 = vpack.c.bf16 %v623, %v623
    %v632 = vunpack.c.l.b16 %v624
    %v633 = vunpack.c.h.b16 %v624
    %v634 = vunpack.c.l.b16 %v625
    %v635 = vunpack.c.h.b16 %v625
    %v636 = vunpack.c.l.b16 %v626
    %v637 = vunpack.c.h.b16 %v626
    %v638 = vunpack.c.l.b16 %v627
    %v639 = vpack.c.b16 %v632, %v632
    %v640 = vpack.c.b16 %v633, %v633
    %v641 = vpack.c.b16 %v634, %v634
    %v642 = vpack.c.b16 %v635, %v635
    %v643 = vpack.c.b16 %v636, %v636
    %v644 = vpack.c.b16 %v637, %v637
    %v645 = vpack.c.b16 %v638, %v638
    %vm653 = vcmask 125952
    %654 = vst.msk [vmem:[#allocation2] sm:$0xf] %vm653, %v639
    %655 = vst.msk [vmem:[#allocation2 + $0x4] sm:$0xf] %vm653, %v640
    %656 = vst.msk [vmem:[#allocation2 + $0x8] sm:$0xf] %vm653, %v641
    %657 = vst.msk [vmem:[#allocation2 + $0xc] sm:$0xf] %vm653, %v642
    %658 = vst.msk [vmem:[#allocation2 + $0x10] sm:$0xf] %vm653, %v643
    %659 = vst.msk [vmem:[#allocation2 + $0x14] sm:$0xf] %vm653, %v644
    %vm660 = vcmask 122880
    %661 = vst.msk [vmem:[#allocation2 + $0x18] sm:$0x1] %vm660, %v645
    %v662 = vld [vmem:[#allocation2] sm:$0x1]
    %v663 = vld [vmem:[%s3] sm:$0xf]
    %v664 = vld [vmem:[%s3 + $0x4] sm:$0xf]
    %v665 = vld [vmem:[#allocation2] sm:$0x2]
    %v666 = vld [vmem:[%s3 + $0x8] sm:$0xf]
    %v667 = vld [vmem:[%s3 + $0xc] sm:$0xf]
    %v669 = vunpack.c.l.b16 %v665
    %v670 = vpack.c.b16 %v669, %v669
    %v671 = vrot.slane %v670, 1
    %v674 = vunpack.c.l.b16 %v666
    %v675 = vunpack.c.l.b16 %v667
    %v676 = vpack.c.b16 %v675, %v674
    %vm678 = vcmask 130048
    %v680 = vsel %vm678, %v671, 0
    %682 = vmatprep.subr.bf16.mxu0 0
    %683 = vmatpush1.bf16.msra.mxu0 %v676
    %684 = vmatprep.subr.bf16.mxu0 0
    %685 = vmatpush1.bf16.msra.mxu0 0
    %686 = vmatprep.subr.bf16.mxu0 0
    %687 = vmatpush1.bf16.msra.mxu0 0
    %688 = vmatprep.subr.bf16.mxu0 0
    %689 = vmatpush1.bf16.msra.mxu0 0
    %690 = vmatprep.subr.bf16.mxu0 0
    %691 = vmatpush1.bf16.msra.mxu0 0
    %692 = vmatprep.subr.bf16.mxu0 0
    %693 = vmatpush1.bf16.msra.mxu0 0
    %694 = vmatprep.subr.bf16.mxu0 0
    %695 = vmatpush1.bf16.msra.mxu0 0
    %696 = vmatprep.subr.bf16.mxu0 0
    %697 = vmatpush1.bf16.msra.mxu0 0
    %698 = vmatprep.subr.bf16.mxu0 0
    %699 = vmatpush1.bf16.msra.mxu0 0
    %700 = vmatprep.subr.bf16.mxu0 0
    %701 = vmatpush1.bf16.msra.mxu0 0
    %702 = vmatprep.subr.bf16.mxu0 0
    %703 = vmatpush1.bf16.msra.mxu0 0
    %704 = vmatprep.subr.bf16.mxu0 0
    %705 = vmatpush1.bf16.msra.mxu0 0
    %706 = vmatprep.subr.bf16.mxu0 0
    %707 = vmatpush1.bf16.msra.mxu0 0
    %708 = vmatprep.subr.bf16.mxu0 0
    %709 = vmatpush1.bf16.msra.mxu0 0
    %710 = vmatprep.subr.bf16.mxu0 0
    %711 = vmatpush1.bf16.msra.mxu0 0
    %712 = vmatprep.subr.bf16.mxu0 0
    %713 = vmatpush1.bf16.msra.mxu0 0
    %714 = vmatprep.mubr.bf16.mxu0 0
    %715 = vmatmul.mubr.bf16.gmra.mrb[0].mxu0 %v680
    %v716 = vpop.f32.mrb[0].mxu0
    %v717 = vadd.f32 0.0, %v716
    %v718 = vpop.f32.mrb[0].mxu0
    %v719 = vpop.f32.mrb[0].mxu0
    %v720 = vpop.f32.mrb[0].mxu0
    %721 = vdwg.mxu0
    %v724 = vunpack.c.l.b16 %v663
    %v725 = vunpack.c.l.b16 %v664
    %v726 = vpack.c.b16 %v725, %v724
    %v729 = vsel %vm678, %v662, 0
    %731 = vmatprep.subr.bf16.mxu0 0
    %732 = vmatpush1.bf16.msra.mxu0 %v726
    %733 = vmatprep.subr.bf16.mxu0 0
    %734 = vmatpush1.bf16.msra.mxu0 0
    %735 = vmatprep.subr.bf16.mxu0 0
    %736 = vmatpush1.bf16.msra.mxu0 0
    %737 = vmatprep.subr.bf16.mxu0 0
    %738 = vmatpush1.bf16.msra.mxu0 0
    %739 = vmatprep.subr.bf16.mxu0 0
    %740 = vmatpush1.bf16.msra.mxu0 0
    %741 = vmatprep.subr.bf16.mxu0 0
    %742 = vmatpush1.bf16.msra.mxu0 0
    %743 = vmatprep.subr.bf16.mxu0 0
    %744 = vmatpush1.bf16.msra.mxu0 0
    %745 = vmatprep.subr.bf16.mxu0 0
    %746 = vmatpush1.bf16.msra.mxu0 0
    %747 = vmatprep.subr.bf16.mxu0 0
    %748 = vmatpush1.bf16.msra.mxu0 0
    %749 = vmatprep.subr.bf16.mxu0 0
    %750 = vmatpush1.bf16.msra.mxu0 0
    %751 = vmatprep.subr.bf16.mxu0 0
    %752 = vmatpush1.bf16.msra.mxu0 0
    %753 = vmatprep.subr.bf16.mxu0 0
    %754 = vmatpush1.bf16.msra.mxu0 0
    %755 = vmatprep.subr.bf16.mxu0 0
    %756 = vmatpush1.bf16.msra.mxu0 0
    %757 = vmatprep.subr.bf16.mxu0 0
    %758 = vmatpush1.bf16.msra.mxu0 0
    %759 = vmatprep.subr.bf16.mxu0 0
    %760 = vmatpush1.bf16.msra.mxu0 0
    %761 = vmatprep.subr.bf16.mxu0 0
    %762 = vmatpush1.bf16.msra.mxu0 0
    %763 = vmatprep.mubr.bf16.mxu0 0
    %764 = vmatmul.mubr.bf16.gmra.mrb[0].mxu0 %v729
    %v765 = vpop.f32.mrb[0].mxu0
    %v766 = vadd.f32 %v717, %v765
    %v767 = vpop.f32.mrb[0].mxu0
    %v768 = vpop.f32.mrb[0].mxu0
    %v769 = vpop.f32.mrb[0].mxu0
    %770 = vdwg.mxu0
    %v771 = vld [vmem:[#allocation2] sm:$0x4]
    %v772 = vld [vmem:[%s3 + $0x10] sm:$0xf]
    %v773 = vld [vmem:[%s3 + $0x14] sm:$0xf]
    %v775 = vunpack.c.l.b16 %v771
    %v776 = vpack.c.b16 %v775, %v775
    %v777 = vrot.slane %v776, 2
    %v780 = vunpack.c.l.b16 %v772
    %v781 = vunpack.c.l.b16 %v773
    %v782 = vpack.c.b16 %v781, %v780
    %v785 = vsel %vm678, %v777, 0
    %787 = vmatprep.subr.bf16.mxu0 0
    %788 = vmatpush1.bf16.msra.mxu0 %v782
    %789 = vmatprep.subr.bf16.mxu0 0
    %790 = vmatpush1.bf16.msra.mxu0 0
    %791 = vmatprep.subr.bf16.mxu0 0
    %792 = vmatpush1.bf16.msra.mxu0 0
    %793 = vmatprep.subr.bf16.mxu0 0
    %794 = vmatpush1.bf16.msra.mxu0 0
    %795 = vmatprep.subr.bf16.mxu0 0
    %796 = vmatpush1.bf16.msra.mxu0 0
    %797 = vmatprep.subr.bf16.mxu0 0
    %798 = vmatpush1.bf16.msra.mxu0 0
    %799 = vmatprep.subr.bf16.mxu0 0
    %800 = vmatpush1.bf16.msra.mxu0 0
    %801 = vmatprep.subr.bf16.mxu0 0
    %802 = vmatpush1.bf16.msra.mxu0 0
    %803 = vmatprep.subr.bf16.mxu0 0
    %804 = vmatpush1.bf16.msra.mxu0 0
    %805 = vmatprep.subr.bf16.mxu0 0
    %806 = vmatpush1.bf16.msra.mxu0 0
    %807 = vmatprep.subr.bf16.mxu0 0
    %808 = vmatpush1.bf16.msra.mxu0 0
    %809 = vmatprep.subr.bf16.mxu0 0
    %810 = vmatpush1.bf16.msra.mxu0 0
    %811 = vmatprep.subr.bf16.mxu0 0
    %812 = vmatpush1.bf16.msra.mxu0 0
    %813 = vmatprep.subr.bf16.mxu0 0
    %814 = vmatpush1.bf16.msra.mxu0 0
    %815 = vmatprep.subr.bf16.mxu0 0
    %816 = vmatpush1.bf16.msra.mxu0 0
    %817 = vmatprep.subr.bf16.mxu0 0
    %818 = vmatpush1.bf16.msra.mxu0 0
    %819 = vmatprep.mubr.bf16.mxu0 0
    %820 = vmatmul.mubr.bf16.gmra.mrb[0].mxu0 %v785
    %v821 = vpop.f32.mrb[0].mxu0
    %v822 = vadd.f32 0.0, %v821
    %v823 = vpop.f32.mrb[0].mxu0
    %v824 = vpop.f32.mrb[0].mxu0
    %v825 = vpop.f32.mrb[0].mxu0
    %826 = vdwg.mxu0
    %v827 = vadd.f32 %v766, %v822
    %v828 = vld [vmem:[#allocation2] sm:$0x8]
    %v829 = vld [vmem:[%s3 + $0x18] sm:$0xf]
    %v830 = vld [vmem:[%s3 + $0x1c] sm:$0xf]
    %v832 = vunpack.c.l.b16 %v828
    %v833 = vpack.c.b16 %v832, %v832
    %v834 = vrot.slane %v833, 3
    %v837 = vunpack.c.l.b16 %v829
    %v838 = vunpack.c.l.b16 %v830
    %v839 = vpack.c.b16 %v838, %v837
    %v842 = vsel %vm678, %v834, 0
    %844 = vmatprep.subr.bf16.mxu0 0
    %845 = vmatpush1.bf16.msra.mxu0 %v839
    %846 = vmatprep.subr.bf16.mxu0 0
    %847 = vmatpush1.bf16.msra.mxu0 0
    %848 = vmatprep.subr.bf16.mxu0 0
    %849 = vmatpush1.bf16.msra.mxu0 0
    %850 = vmatprep.subr.bf16.mxu0 0
    %851 = vmatpush1.bf16.msra.mxu0 0
    %852 = vmatprep.subr.bf16.mxu0 0
    %853 = vmatpush1.bf16.msra.mxu0 0
    %854 = vmatprep.subr.bf16.mxu0 0
    %855 = vmatpush1.bf16.msra.mxu0 0
    %856 = vmatprep.subr.bf16.mxu0 0
    %857 = vmatpush1.bf16.msra.mxu0 0
    %858 = vmatprep.subr.bf16.mxu0 0
    %859 = vmatpush1.bf16.msra.mxu0 0
    %860 = vmatprep.subr.bf16.mxu0 0
    %861 = vmatpush1.bf16.msra.mxu0 0
    %862 = vmatprep.subr.bf16.mxu0 0
    %863 = vmatpush1.bf16.msra.mxu0 0
    %864 = vmatprep.subr.bf16.mxu0 0
    %865 = vmatpush1.bf16.msra.mxu0 0
    %866 = vmatprep.subr.bf16.mxu0 0
    %867 = vmatpush1.bf16.msra.mxu0 0
    %868 = vmatprep.subr.bf16.mxu0 0
    %869 = vmatpush1.bf16.msra.mxu0 0
    %870 = vmatprep.subr.bf16.mxu0 0
    %871 = vmatpush1.bf16.msra.mxu0 0
    %872 = vmatprep.subr.bf16.mxu0 0
    %873 = vmatpush1.bf16.msra.mxu0 0
    %874 = vmatprep.subr.bf16.mxu0 0
    %875 = vmatpush1.bf16.msra.mxu0 0
    %876 = vmatprep.mubr.bf16.mxu0 0
    %877 = vmatmul.mubr.bf16.gmra.mrb[0].mxu0 %v842
    %v878 = vpop.f32.mrb[0].mxu0
    %v879 = vadd.f32 0.0, %v878
    %v880 = vpop.f32.mrb[0].mxu0
    %v881 = vpop.f32.mrb[0].mxu0
    %v882 = vpop.f32.mrb[0].mxu0
    %883 = vdwg.mxu0
    %v884 = vadd.f32 %v827, %v879
    %v885 = vld [vmem:[#allocation2 + $0x4] sm:$0x1]
    %v886 = vld [vmem:[%s3 + $0x20] sm:$0xf]
    %v887 = vld [vmem:[%s3 + $0x24] sm:$0xf]
    %v890 = vunpack.c.l.b16 %v886
    %v891 = vunpack.c.l.b16 %v887
    %v892 = vpack.c.b16 %v891, %v890
    %v895 = vsel %vm678, %v885, 0
    %897 = vmatprep.subr.bf16.mxu0 0
    %898 = vmatpush1.bf16.msra.mxu0 %v892
    %899 = vmatprep.subr.bf16.mxu0 0
    %900 = vmatpush1.bf16.msra.mxu0 0
    %901 = vmatprep.subr.bf16.mxu0 0
    %902 = vmatpush1.bf16.msra.mxu0 0
    %903 = vmatprep.subr.bf16.mxu0 0
    %904 = vmatpush1.bf16.msra.mxu0 0
    %905 = vmatprep.subr.bf16.mxu0 0
    %906 = vmatpush1.bf16.msra.mxu0 0
    %907 = vmatprep.subr.bf16.mxu0 0
    %908 = vmatpush1.bf16.msra.mxu0 0
    %909 = vmatprep.subr.bf16.mxu0 0
    %910 = vmatpush1.bf16.msra.mxu0 0
    %911 = vmatprep.subr.bf16.mxu0 0
    %912 = vmatpush1.bf16.msra.mxu0 0
    %913 = vmatprep.subr.bf16.mxu0 0
    %914 = vmatpush1.bf16.msra.mxu0 0
    %915 = vmatprep.subr.bf16.mxu0 0
    %916 = vmatpush1.bf16.msra.mxu0 0
    %917 = vmatprep.subr.bf16.mxu0 0
    %918 = vmatpush1.bf16.msra.mxu0 0
    %919 = vmatprep.subr.bf16.mxu0 0
    %920 = vmatpush1.bf16.msra.mxu0 0
    %921 = vmatprep.subr.bf16.mxu0 0
    %922 = vmatpush1.bf16.msra.mxu0 0
    %923 = vmatprep.subr.bf16.mxu0 0
    %924 = vmatpush1.bf16.msra.mxu0 0
    %925 = vmatprep.subr.bf16.mxu0 0
    %926 = vmatpush1.bf16.msra.mxu0 0
    %927 = vmatprep.subr.bf16.mxu0 0
    %928 = vmatpush1.bf16.msra.mxu0 0
    %929 = vmatprep.mubr.bf16.mxu0 0
    %930 = vmatmul.mubr.bf16.gmra.mrb[0].mxu0 %v895
    %v931 = vpop.f32.mrb[0].mxu0
    %v932 = vadd.f32 0.0, %v931
    %v933 = vpop.f32.mrb[0].mxu0
    %v934 = vpop.f32.mrb[0].mxu0
    %v935 = vpop.f32.mrb[0].mxu0
    %936 = vdwg.mxu0
    %v937 = vadd.f32 %v884, %v932
    %v938 = vld [vmem:[#allocation2 + $0x4] sm:$0x2]
    %v939 = vld [vmem:[%s3 + $0x28] sm:$0xf]
    %v940 = vld [vmem:[%s3 + $0x2c] sm:$0xf]
    %v942 = vunpack.c.l.b16 %v938
    %v943 = vpack.c.b16 %v942, %v942
    %v944 = vrot.slane %v943, 1
    %v947 = vunpack.c.l.b16 %v939
    %v948 = vunpack.c.l.b16 %v940
    %v949 = vpack.c.b16 %v948, %v947
    %v952 = vsel %vm678, %v944, 0
    %954 = vmatprep.subr.bf16.mxu0 0
    %955 = vmatpush1.bf16.msra.mxu0 %v949
    %956 = vmatprep.subr.bf16.mxu0 0
    %957 = vmatpush1.bf16.msra.mxu0 0
    %958 = vmatprep.subr.bf16.mxu0 0
    %959 = vmatpush1.bf16.msra.mxu0 0
    %960 = vmatprep.subr.bf16.mxu0 0
    %961 = vmatpush1.bf16.msra.mxu0 0
    %962 = vmatprep.subr.bf16.mxu0 0
    %963 = vmatpush1.bf16.msra.mxu0 0
    %964 = vmatprep.subr.bf16.mxu0 0
    %965 = vmatpush1.bf16.msra.mxu0 0
    %966 = vmatprep.subr.bf16.mxu0 0
    %967 = vmatpush1.bf16.msra.mxu0 0
    %968 = vmatprep.subr.bf16.mxu0 0
    %969 = vmatpush1.bf16.msra.mxu0 0
    %970 = vmatprep.subr.bf16.mxu0 0
    %971 = vmatpush1.bf16.msra.mxu0 0
    %972 = vmatprep.subr.bf16.mxu0 0
    %973 = vmatpush1.bf16.msra.mxu0 0
    %974 = vmatprep.subr.bf16.mxu0 0
    %975 = vmatpush1.bf16.msra.mxu0 0
    %976 = vmatprep.subr.bf16.mxu0 0
    %977 = vmatpush1.bf16.msra.mxu0 0
    %978 = vmatprep.subr.bf16.mxu0 0
    %979 = vmatpush1.bf16.msra.mxu0 0
    %980 = vmatprep.subr.bf16.mxu0 0
    %981 = vmatpush1.bf16.msra.mxu0 0
    %982 = vmatprep.subr.bf16.mxu0 0
    %983 = vmatpush1.bf16.msra.mxu0 0
    %984 = vmatprep.subr.bf16.mxu0 0
    %985 = vmatpush1.bf16.msra.mxu0 0
    %986 = vmatprep.mubr.bf16.mxu0 0
    %987 = vmatmul.mubr.bf16.gmra.mrb[0].mxu0 %v952
    %v988 = vpop.f32.mrb[0].mxu0
    %v989 = vadd.f32 0.0, %v988
    %v990 = vpop.f32.mrb[0].mxu0
    %v991 = vpop.f32.mrb[0].mxu0
    %v992 = vpop.f32.mrb[0].mxu0
    %993 = vdwg.mxu0
    %v994 = vadd.f32 %v937, %v989
    %v995 = vld [vmem:[#allocation2 + $0x4] sm:$0x4]
    %v996 = vld [vmem:[%s3 + $0x30] sm:$0xf]
    %v997 = vld [vmem:[%s3 + $0x34] sm:$0xf]
    %v999 = vunpack.c.l.b16 %v995
    %v1000 = vpack.c.b16 %v999, %v999
    %v1001 = vrot.slane %v1000, 2
    %v1004 = vunpack.c.l.b16 %v996
    %v1005 = vunpack.c.l.b16 %v997
    %v1006 = vpack.c.b16 %v1005, %v1004
    %v1009 = vsel %vm678, %v1001, 0
    %1011 = vmatprep.subr.bf16.mxu0 0
    %1012 = vmatpush1.bf16.msra.mxu0 %v1006
    %1013 = vmatprep.subr.bf16.mxu0 0
    %1014 = vmatpush1.bf16.msra.mxu0 0
    %1015 = vmatprep.subr.bf16.mxu0 0
    %1016 = vmatpush1.bf16.msra.mxu0 0
    %1017 = vmatprep.subr.bf16.mxu0 0
    %1018 = vmatpush1.bf16.msra.mxu0 0
    %1019 = vmatprep.subr.bf16.mxu0 0
    %1020 = vmatpush1.bf16.msra.mxu0 0
    %1021 = vmatprep.subr.bf16.mxu0 0
    %1022 = vmatpush1.bf16.msra.mxu0 0
    %1023 = vmatprep.subr.bf16.mxu0 0
    %1024 = vmatpush1.bf16.msra.mxu0 0
    %1025 = vmatprep.subr.bf16.mxu0 0
    %1026 = vmatpush1.bf16.msra.mxu0 0
    %1027 = vmatprep.subr.bf16.mxu0 0
    %1028 = vmatpush1.bf16.msra.mxu0 0
    %1029 = vmatprep.subr.bf16.mxu0 0
    %1030 = vmatpush1.bf16.msra.mxu0 0
    %1031 = vmatprep.subr.bf16.mxu0 0
    %1032 = vmatpush1.bf16.msra.mxu0 0
    %1033 = vmatprep.subr.bf16.mxu0 0
    %1034 = vmatpush1.bf16.msra.mxu0 0
    %1035 = vmatprep.subr.bf16.mxu0 0
    %1036 = vmatpush1.bf16.msra.mxu0 0
    %1037 = vmatprep.subr.bf16.mxu0 0
    %1038 = vmatpush1.bf16.msra.mxu0 0
    %1039 = vmatprep.subr.bf16.mxu0 0
    %1040 = vmatpush1.bf16.msra.mxu0 0
    %1041 = vmatprep.subr.bf16.mxu0 0
    %1042 = vmatpush1.bf16.msra.mxu0 0
    %1043 = vmatprep.mubr.bf16.mxu0 0
    %1044 = vmatmul.mubr.bf16.gmra.mrb[0].mxu0 %v1009
    %v1045 = vpop.f32.mrb[0].mxu0
    %v1046 = vadd.f32 0.0, %v1045
    %v1047 = vpop.f32.mrb[0].mxu0
    %v1048 = vpop.f32.mrb[0].mxu0
    %v1049 = vpop.f32.mrb[0].mxu0
    %1050 = vdwg.mxu0
    %v1051 = vadd.f32 %v994, %v1046
    %v1052 = vld [vmem:[#allocation2 + $0x4] sm:$0x8]
    %v1053 = vld [vmem:[%s3 + $0x38] sm:$0xf]
    %v1054 = vld [vmem:[%s3 + $0x3c] sm:$0xf]
    %v1056 = vunpack.c.l.b16 %v1052
    %v1057 = vpack.c.b16 %v1056, %v1056
    %v1058 = vrot.slane %v1057, 3
    %v1061 = vunpack.c.l.b16 %v1053
    %v1062 = vunpack.c.l.b16 %v1054
    %v1063 = vpack.c.b16 %v1062, %v1061
    %v1066 = vsel %vm678, %v1058, 0
    %1068 = vmatprep.subr.bf16.mxu0 0
    %1069 = vmatpush1.bf16.msra.mxu0 %v1063
    %1070 = vmatprep.subr.bf16.mxu0 0
    %1071 = vmatpush1.bf16.msra.mxu0 0
    %1072 = vmatprep.subr.bf16.mxu0 0
    %1073 = vmatpush1.bf16.msra.mxu0 0
    %1074 = vmatprep.subr.bf16.mxu0 0
    %1075 = vmatpush1.bf16.msra.mxu0 0
    %1076 = vmatprep.subr.bf16.mxu0 0
    %1077 = vmatpush1.bf16.msra.mxu0 0
    %1078 = vmatprep.subr.bf16.mxu0 0
    %1079 = vmatpush1.bf16.msra.mxu0 0
    %1080 = vmatprep.subr.bf16.mxu0 0
    %1081 = vmatpush1.bf16.msra.mxu0 0
    %1082 = vmatprep.subr.bf16.mxu0 0
    %1083 = vmatpush1.bf16.msra.mxu0 0
    %1084 = vmatprep.subr.bf16.mxu0 0
    %1085 = vmatpush1.bf16.msra.mxu0 0
    %1086 = vmatprep.subr.bf16.mxu0 0
    %1087 = vmatpush1.bf16.msra.mxu0 0
    %1088 = vmatprep.subr.bf16.mxu0 0
    %1089 = vmatpush1.bf16.msra.mxu0 0
    %1090 = vmatprep.subr.bf16.mxu0 0
    %1091 = vmatpush1.bf16.msra.mxu0 0
    %1092 = vmatprep.subr.bf16.mxu0 0
    %1093 = vmatpush1.bf16.msra.mxu0 0
    %1094 = vmatprep.subr.bf16.mxu0 0
    %1095 = vmatpush1.bf16.msra.mxu0 0
    %1096 = vmatprep.subr.bf16.mxu0 0
    %1097 = vmatpush1.bf16.msra.mxu0 0
    %1098 = vmatprep.subr.bf16.mxu0 0
    %1099 = vmatpush1.bf16.msra.mxu0 0
    %1100 = vmatprep.mubr.bf16.mxu0 0
    %1101 = vmatmul.mubr.bf16.gmra.mrb[0].mxu0 %v1066
    %v1102 = vpop.f32.mrb[0].mxu0
    %v1103 = vadd.f32 0.0, %v1102
    %v1104 = vpop.f32.mrb[0].mxu0
    %v1105 = vpop.f32.mrb[0].mxu0
    %v1106 = vpop.f32.mrb[0].mxu0
    %1107 = vdwg.mxu0
    %v1108 = vadd.f32 %v1051, %v1103
    %v1109 = vld [vmem:[#allocation2 + $0x8] sm:$0x1]
    %v1110 = vld [vmem:[%s3 + $0x40] sm:$0xf]
    %v1111 = vld [vmem:[%s3 + $0x44] sm:$0xf]
    %v1114 = vunpack.c.l.b16 %v1110
    %v1115 = vunpack.c.l.b16 %v1111
    %v1116 = vpack.c.b16 %v1115, %v1114
    %v1119 = vsel %vm678, %v1109, 0
    %1121 = vmatprep.subr.bf16.mxu0 0
    %1122 = vmatpush1.bf16.msra.mxu0 %v1116
    %1123 = vmatprep.subr.bf16.mxu0 0
    %1124 = vmatpush1.bf16.msra.mxu0 0
    %1125 = vmatprep.subr.bf16.mxu0 0
    %1126 = vmatpush1.bf16.msra.mxu0 0
    %1127 = vmatprep.subr.bf16.mxu0 0
    %1128 = vmatpush1.bf16.msra.mxu0 0
    %1129 = vmatprep.subr.bf16.mxu0 0
    %1130 = vmatpush1.bf16.msra.mxu0 0
    %1131 = vmatprep.subr.bf16.mxu0 0
    %1132 = vmatpush1.bf16.msra.mxu0 0
    %1133 = vmatprep.subr.bf16.mxu0 0
    %1134 = vmatpush1.bf16.msra.mxu0 0
    %1135 = vmatprep.subr.bf16.mxu0 0
    %1136 = vmatpush1.bf16.msra.mxu0 0
    %1137 = vmatprep.subr.bf16.mxu0 0
    %1138 = vmatpush1.bf16.msra.mxu0 0
    %1139 = vmatprep.subr.bf16.mxu0 0
    %1140 = vmatpush1.bf16.msra.mxu0 0
    %1141 = vmatprep.subr.bf16.mxu0 0
    %1142 = vmatpush1.bf16.msra.mxu0 0
    %1143 = vmatprep.subr.bf16.mxu0 0
    %1144 = vmatpush1.bf16.msra.mxu0 0
    %1145 = vmatprep.subr.bf16.mxu0 0
    %1146 = vmatpush1.bf16.msra.mxu0 0
    %1147 = vmatprep.subr.bf16.mxu0 0
    %1148 = vmatpush1.bf16.msra.mxu0 0
    %1149 = vmatprep.subr.bf16.mxu0 0
    %1150 = vmatpush1.bf16.msra.mxu0 0
    %1151 = vmatprep.subr.bf16.mxu0 0
    %1152 = vmatpush1.bf16.msra.mxu0 0
    %1153 = vmatprep.mubr.bf16.mxu0 0
    %1154 = vmatmul.mubr.bf16.gmra.mrb[0].mxu0 %v1119
    %v1155 = vpop.f32.mrb[0].mxu0
    %v1156 = vadd.f32 0.0, %v1155
    %v1157 = vpop.f32.mrb[0].mxu0
    %v1158 = vpop.f32.mrb[0].mxu0
    %v1159 = vpop.f32.mrb[0].mxu0
    %1160 = vdwg.mxu0
    %v1161 = vadd.f32 %v1108, %v1156
    %v1162 = vld [vmem:[#allocation2 + $0x8] sm:$0x2]
    %v1163 = vld [vmem:[%s3 + $0x48] sm:$0xf]
    %v1164 = vld [vmem:[%s3 + $0x4c] sm:$0xf]
    %v1166 = vunpack.c.l.b16 %v1162
    %v1167 = vpack.c.b16 %v1166, %v1166
    %v1168 = vrot.slane %v1167, 1
    %v1171 = vunpack.c.l.b16 %v1163
    %v1172 = vunpack.c.l.b16 %v1164
    %v1173 = vpack.c.b16 %v1172, %v1171
    %v1176 = vsel %vm678, %v1168, 0
    %1178 = vmatprep.subr.bf16.mxu0 0
    %1179 = vmatpush1.bf16.msra.mxu0 %v1173
    %1180 = vmatprep.subr.bf16.mxu0 0
    %1181 = vmatpush1.bf16.msra.mxu0 0
    %1182 = vmatprep.subr.bf16.mxu0 0
    %1183 = vmatpush1.bf16.msra.mxu0 0
    %1184 = vmatprep.subr.bf16.mxu0 0
    %1185 = vmatpush1.bf16.msra.mxu0 0
    %1186 = vmatprep.subr.bf16.mxu0 0
    %1187 = vmatpush1.bf16.msra.mxu0 0
    %1188 = vmatprep.subr.bf16.mxu0 0
    %1189 = vmatpush1.bf16.msra.mxu0 0
    %1190 = vmatprep.subr.bf16.mxu0 0
    %1191 = vmatpush1.bf16.msra.mxu0 0
    %1192 = vmatprep.subr.bf16.mxu0 0
    %1193 = vmatpush1.bf16.msra.mxu0 0
    %1194 = vmatprep.subr.bf16.mxu0 0
    %1195 = vmatpush1.bf16.msra.mxu0 0
    %1196 = vmatprep.subr.bf16.mxu0 0
    %1197 = vmatpush1.bf16.msra.mxu0 0
    %1198 = vmatprep.subr.bf16.mxu0 0
    %1199 = vmatpush1.bf16.msra.mxu0 0
    %1200 = vmatprep.subr.bf16.mxu0 0
    %1201 = vmatpush1.bf16.msra.mxu0 0
    %1202 = vmatprep.subr.bf16.mxu0 0
    %1203 = vmatpush1.bf16.msra.mxu0 0
    %1204 = vmatprep.subr.bf16.mxu0 0
    %1205 = vmatpush1.bf16.msra.mxu0 0
    %1206 = vmatprep.subr.bf16.mxu0 0
    %1207 = vmatpush1.bf16.msra.mxu0 0
    %1208 = vmatprep.subr.bf16.mxu0 0
    %1209 = vmatpush1.bf16.msra.mxu0 0
    %1210 = vmatprep.mubr.bf16.mxu0 0
    %1211 = vmatmul.mubr.bf16.gmra.mrb[0].mxu0 %v1176
    %v1212 = vpop.f32.mrb[0].mxu0
    %v1213 = vadd.f32 0.0, %v1212
    %v1214 = vpop.f32.mrb[0].mxu0
    %v1215 = vpop.f32.mrb[0].mxu0
    %v1216 = vpop.f32.mrb[0].mxu0
    %1217 = vdwg.mxu0
    %v1218 = vadd.f32 %v1161, %v1213
    %v1219 = vld [vmem:[#allocation2 + $0x8] sm:$0x4]
    %v1220 = vld [vmem:[%s3 + $0x50] sm:$0xf]
    %v1221 = vld [vmem:[%s3 + $0x54] sm:$0xf]
    %v1223 = vunpack.c.l.b16 %v1219
    %v1224 = vpack.c.b16 %v1223, %v1223
    %v1225 = vrot.slane %v1224, 2
    %v1228 = vunpack.c.l.b16 %v1220
    %v1229 = vunpack.c.l.b16 %v1221
    %v1230 = vpack.c.b16 %v1229, %v1228
    %v1233 = vsel %vm678, %v1225, 0
    %1235 = vmatprep.subr.bf16.mxu0 0
    %1236 = vmatpush1.bf16.msra.mxu0 %v1230
    %1237 = vmatprep.subr.bf16.mxu0 0
    %1238 = vmatpush1.bf16.msra.mxu0 0
    %1239 = vmatprep.subr.bf16.mxu0 0
    %1240 = vmatpush1.bf16.msra.mxu0 0
    %1241 = vmatprep.subr.bf16.mxu0 0
    %1242 = vmatpush1.bf16.msra.mxu0 0
    %1243 = vmatprep.subr.bf16.mxu0 0
    %1244 = vmatpush1.bf16.msra.mxu0 0
    %1245 = vmatprep.subr.bf16.mxu0 0
    %1246 = vmatpush1.bf16.msra.mxu0 0
    %1247 = vmatprep.subr.bf16.mxu0 0
    %1248 = vmatpush1.bf16.msra.mxu0 0
    %1249 = vmatprep.subr.bf16.mxu0 0
    %1250 = vmatpush1.bf16.msra.mxu0 0
    %1251 = vmatprep.subr.bf16.mxu0 0
    %1252 = vmatpush1.bf16.msra.mxu0 0
    %1253 = vmatprep.subr.bf16.mxu0 0
    %1254 = vmatpush1.bf16.msra.mxu0 0
    %1255 = vmatprep.subr.bf16.mxu0 0
    %1256 = vmatpush1.bf16.msra.mxu0 0
    %1257 = vmatprep.subr.bf16.mxu0 0
    %1258 = vmatpush1.bf16.msra.mxu0 0
    %1259 = vmatprep.subr.bf16.mxu0 0
    %1260 = vmatpush1.bf16.msra.mxu0 0
    %1261 = vmatprep.subr.bf16.mxu0 0
    %1262 = vmatpush1.bf16.msra.mxu0 0
    %1263 = vmatprep.subr.bf16.mxu0 0
    %1264 = vmatpush1.bf16.msra.mxu0 0
    %1265 = vmatprep.subr.bf16.mxu0 0
    %1266 = vmatpush1.bf16.msra.mxu0 0
    %1267 = vmatprep.mubr.bf16.mxu0 0
    %1268 = vmatmul.mubr.bf16.gmra.mrb[0].mxu0 %v1233
    %v1269 = vpop.f32.mrb[0].mxu0
    %v1270 = vadd.f32 0.0, %v1269
    %v1271 = vpop.f32.mrb[0].mxu0
    %v1272 = vpop.f32.mrb[0].mxu0
    %v1273 = vpop.f32.mrb[0].mxu0
    %1274 = vdwg.mxu0
    %v1275 = vadd.f32 %v1218, %v1270
    %v1276 = vld [vmem:[#allocation2 + $0x8] sm:$0x8]
    %v1277 = vld [vmem:[%s3 + $0x58] sm:$0xf]
    %v1278 = vld [vmem:[%s3 + $0x5c] sm:$0xf]
    %v1280 = vunpack.c.l.b16 %v1276
    %v1281 = vpack.c.b16 %v1280, %v1280
    %v1282 = vrot.slane %v1281, 3
    %v1285 = vunpack.c.l.b16 %v1277
    %v1286 = vunpack.c.l.b16 %v1278
    %v1287 = vpack.c.b16 %v1286, %v1285
    %v1290 = vsel %vm678, %v1282, 0
    %1292 = vmatprep.subr.bf16.mxu0 0
    %1293 = vmatpush1.bf16.msra.mxu0 %v1287
    %1294 = vmatprep.subr.bf16.mxu0 0
    %1295 = vmatpush1.bf16.msra.mxu0 0
    %1296 = vmatprep.subr.bf16.mxu0 0
    %1297 = vmatpush1.bf16.msra.mxu0 0
    %1298 = vmatprep.subr.bf16.mxu0 0
    %1299 = vmatpush1.bf16.msra.mxu0 0
    %1300 = vmatprep.subr.bf16.mxu0 0
    %1301 = vmatpush1.bf16.msra.mxu0 0
    %1302 = vmatprep.subr.bf16.mxu0 0
    %1303 = vmatpush1.bf16.msra.mxu0 0
    %1304 = vmatprep.subr.bf16.mxu0 0
    %1305 = vmatpush1.bf16.msra.mxu0 0
    %1306 = vmatprep.subr.bf16.mxu0 0
    %1307 = vmatpush1.bf16.msra.mxu0 0
    %1308 = vmatprep.subr.bf16.mxu0 0
    %1309 = vmatpush1.bf16.msra.mxu0 0
    %1310 = vmatprep.subr.bf16.mxu0 0
    %1311 = vmatpush1.bf16.msra.mxu0 0
    %1312 = vmatprep.subr.bf16.mxu0 0
    %1313 = vmatpush1.bf16.msra.mxu0 0
    %1314 = vmatprep.subr.bf16.mxu0 0
    %1315 = vmatpush1.bf16.msra.mxu0 0
    %1316 = vmatprep.subr.bf16.mxu0 0
    %1317 = vmatpush1.bf16.msra.mxu0 0
    %1318 = vmatprep.subr.bf16.mxu0 0
    %1319 = vmatpush1.bf16.msra.mxu0 0
    %1320 = vmatprep.subr.bf16.mxu0 0
    %1321 = vmatpush1.bf16.msra.mxu0 0
    %1322 = vmatprep.subr.bf16.mxu0 0
    %1323 = vmatpush1.bf16.msra.mxu0 0
    %1324 = vmatprep.mubr.bf16.mxu0 0
    %1325 = vmatmul.mubr.bf16.gmra.mrb[0].mxu0 %v1290
    %v1326 = vpop.f32.mrb[0].mxu0
    %v1327 = vadd.f32 0.0, %v1326
    %v1328 = vpop.f32.mrb[0].mxu0
    %v1329 = vpop.f32.mrb[0].mxu0
    %v1330 = vpop.f32.mrb[0].mxu0
    %1331 = vdwg.mxu0
    %v1332 = vadd.f32 %v1275, %v1327
    %v1333 = vld [vmem:[#allocation2 + $0xc] sm:$0x1]
    %v1334 = vld [vmem:[%s3 + $0x60] sm:$0xf]
    %v1335 = vld [vmem:[%s3 + $0x64] sm:$0xf]
    %v1338 = vunpack.c.l.b16 %v1334
    %v1339 = vunpack.c.l.b16 %v1335
    %v1340 = vpack.c.b16 %v1339, %v1338
    %v1343 = vsel %vm678, %v1333, 0
    %1345 = vmatprep.subr.bf16.mxu0 0
    %1346 = vmatpush1.bf16.msra.mxu0 %v1340
    %1347 = vmatprep.subr.bf16.mxu0 0
    %1348 = vmatpush1.bf16.msra.mxu0 0
    %1349 = vmatprep.subr.bf16.mxu0 0
    %1350 = vmatpush1.bf16.msra.mxu0 0
    %1351 = vmatprep.subr.bf16.mxu0 0
    %1352 = vmatpush1.bf16.msra.mxu0 0
    %1353 = vmatprep.subr.bf16.mxu0 0
    %1354 = vmatpush1.bf16.msra.mxu0 0
    %1355 = vmatprep.subr.bf16.mxu0 0
    %1356 = vmatpush1.bf16.msra.mxu0 0
    %1357 = vmatprep.subr.bf16.mxu0 0
    %1358 = vmatpush1.bf16.msra.mxu0 0
    %1359 = vmatprep.subr.bf16.mxu0 0
    %1360 = vmatpush1.bf16.msra.mxu0 0
    %1361 = vmatprep.subr.bf16.mxu0 0
    %1362 = vmatpush1.bf16.msra.mxu0 0
    %1363 = vmatprep.subr.bf16.mxu0 0
    %1364 = vmatpush1.bf16.msra.mxu0 0
    %1365 = vmatprep.subr.bf16.mxu0 0
    %1366 = vmatpush1.bf16.msra.mxu0 0
    %1367 = vmatprep.subr.bf16.mxu0 0
    %1368 = vmatpush1.bf16.msra.mxu0 0
    %1369 = vmatprep.subr.bf16.mxu0 0
    %1370 = vmatpush1.bf16.msra.mxu0 0
    %1371 = vmatprep.subr.bf16.mxu0 0
    %1372 = vmatpush1.bf16.msra.mxu0 0
    %1373 = vmatprep.subr.bf16.mxu0 0
    %1374 = vmatpush1.bf16.msra.mxu0 0
    %1375 = vmatprep.subr.bf16.mxu0 0
    %1376 = vmatpush1.bf16.msra.mxu0 0
    %1377 = vmatprep.mubr.bf16.mxu0 0
    %1378 = vmatmul.mubr.bf16.gmra.mrb[0].mxu0 %v1343
    %v1379 = vpop.f32.mrb[0].mxu0
    %v1380 = vadd.f32 0.0, %v1379
    %v1381 = vpop.f32.mrb[0].mxu0
    %v1382 = vpop.f32.mrb[0].mxu0
    %v1383 = vpop.f32.mrb[0].mxu0
    %1384 = vdwg.mxu0
    %v1385 = vadd.f32 %v1332, %v1380
    %v1386 = vld [vmem:[#allocation2 + $0xc] sm:$0x2]
    %v1387 = vld [vmem:[%s3 + $0x68] sm:$0xf]
    %v1388 = vld [vmem:[%s3 + $0x6c] sm:$0xf]
    %v1390 = vunpack.c.l.b16 %v1386
    %v1391 = vpack.c.b16 %v1390, %v1390
    %v1392 = vrot.slane %v1391, 1
    %v1395 = vunpack.c.l.b16 %v1387
    %v1396 = vunpack.c.l.b16 %v1388
    %v1397 = vpack.c.b16 %v1396, %v1395
    %v1400 = vsel %vm678, %v1392, 0
    %1402 = vmatprep.subr.bf16.mxu0 0
    %1403 = vmatpush1.bf16.msra.mxu0 %v1397
    %1404 = vmatprep.subr.bf16.mxu0 0
    %1405 = vmatpush1.bf16.msra.mxu0 0
    %1406 = vmatprep.subr.bf16.mxu0 0
    %1407 = vmatpush1.bf16.msra.mxu0 0
    %1408 = vmatprep.subr.bf16.mxu0 0
    %1409 = vmatpush1.bf16.msra.mxu0 0
    %1410 = vmatprep.subr.bf16.mxu0 0
    %1411 = vmatpush1.bf16.msra.mxu0 0
    %1412 = vmatprep.subr.bf16.mxu0 0
    %1413 = vmatpush1.bf16.msra.mxu0 0
    %1414 = vmatprep.subr.bf16.mxu0 0
    %1415 = vmatpush1.bf16.msra.mxu0 0
    %1416 = vmatprep.subr.bf16.mxu0 0
    %1417 = vmatpush1.bf16.msra.mxu0 0
    %1418 = vmatprep.subr.bf16.mxu0 0
    %1419 = vmatpush1.bf16.msra.mxu0 0
    %1420 = vmatprep.subr.bf16.mxu0 0
    %1421 = vmatpush1.bf16.msra.mxu0 0
    %1422 = vmatprep.subr.bf16.mxu0 0
    %1423 = vmatpush1.bf16.msra.mxu0 0
    %1424 = vmatprep.subr.bf16.mxu0 0
    %1425 = vmatpush1.bf16.msra.mxu0 0
    %1426 = vmatprep.subr.bf16.mxu0 0
    %1427 = vmatpush1.bf16.msra.mxu0 0
    %1428 = vmatprep.subr.bf16.mxu0 0
    %1429 = vmatpush1.bf16.msra.mxu0 0
    %1430 = vmatprep.subr.bf16.mxu0 0
    %1431 = vmatpush1.bf16.msra.mxu0 0
    %1432 = vmatprep.subr.bf16.mxu0 0
    %1433 = vmatpush1.bf16.msra.mxu0 0
    %1434 = vmatprep.mubr.bf16.mxu0 0
    %1435 = vmatmul.mubr.bf16.gmra.mrb[0].mxu0 %v1400
    %v1436 = vpop.f32.mrb[0].mxu0
    %v1437 = vadd.f32 0.0, %v1436
    %v1438 = vpop.f32.mrb[0].mxu0
    %v1439 = vpop.f32.mrb[0].mxu0
    %v1440 = vpop.f32.mrb[0].mxu0
    %1441 = vdwg.mxu0
    %v1442 = vadd.f32 %v1385, %v1437
    %v1443 = vld [vmem:[#allocation2 + $0xc] sm:$0x4]
    %v1444 = vld [vmem:[%s3 + $0x70] sm:$0xf]
    %v1445 = vld [vmem:[%s3 + $0x74] sm:$0xf]
    %v1447 = vunpack.c.l.b16 %v1443
    %v1448 = vpack.c.b16 %v1447, %v1447
    %v1449 = vrot.slane %v1448, 2
    %v1452 = vunpack.c.l.b16 %v1444
    %v1453 = vunpack.c.l.b16 %v1445
    %v1454 = vpack.c.b16 %v1453, %v1452
    %v1457 = vsel %vm678, %v1449, 0
    %1459 = vmatprep.subr.bf16.mxu0 0
    %1460 = vmatpush1.bf16.msra.mxu0 %v1454
    %1461 = vmatprep.subr.bf16.mxu0 0
    %1462 = vmatpush1.bf16.msra.mxu0 0
    %1463 = vmatprep.subr.bf16.mxu0 0
    %1464 = vmatpush1.bf16.msra.mxu0 0
    %1465 = vmatprep.subr.bf16.mxu0 0
    %1466 = vmatpush1.bf16.msra.mxu0 0
    %1467 = vmatprep.subr.bf16.mxu0 0
    %1468 = vmatpush1.bf16.msra.mxu0 0
    %1469 = vmatprep.subr.bf16.mxu0 0
    %1470 = vmatpush1.bf16.msra.mxu0 0
    %1471 = vmatprep.subr.bf16.mxu0 0
    %1472 = vmatpush1.bf16.msra.mxu0 0
    %1473 = vmatprep.subr.bf16.mxu0 0
    %1474 = vmatpush1.bf16.msra.mxu0 0
    %1475 = vmatprep.subr.bf16.mxu0 0
    %1476 = vmatpush1.bf16.msra.mxu0 0
    %1477 = vmatprep.subr.bf16.mxu0 0
    %1478 = vmatpush1.bf16.msra.mxu0 0
    %1479 = vmatprep.subr.bf16.mxu0 0
    %1480 = vmatpush1.bf16.msra.mxu0 0
    %1481 = vmatprep.subr.bf16.mxu0 0
    %1482 = vmatpush1.bf16.msra.mxu0 0
    %1483 = vmatprep.subr.bf16.mxu0 0
    %1484 = vmatpush1.bf16.msra.mxu0 0
    %1485 = vmatprep.subr.bf16.mxu0 0
    %1486 = vmatpush1.bf16.msra.mxu0 0
    %1487 = vmatprep.subr.bf16.mxu0 0
    %1488 = vmatpush1.bf16.msra.mxu0 0
    %1489 = vmatprep.subr.bf16.mxu0 0
    %1490 = vmatpush1.bf16.msra.mxu0 0
    %1491 = vmatprep.mubr.bf16.mxu0 0
    %1492 = vmatmul.mubr.bf16.gmra.mrb[0].mxu0 %v1457
    %v1493 = vpop.f32.mrb[0].mxu0
    %v1494 = vadd.f32 0.0, %v1493
    %v1495 = vpop.f32.mrb[0].mxu0
    %v1496 = vpop.f32.mrb[0].mxu0
    %v1497 = vpop.f32.mrb[0].mxu0
    %1498 = vdwg.mxu0
    %v1499 = vadd.f32 %v1442, %v1494
    %v1500 = vld [vmem:[#allocation2 + $0xc] sm:$0x8]
    %v1501 = vld [vmem:[%s3 + $0x78] sm:$0xf]
    %v1502 = vld [vmem:[%s3 + $0x7c] sm:$0xf]
    %v1504 = vunpack.c.l.b16 %v1500
    %v1505 = vpack.c.b16 %v1504, %v1504
    %v1506 = vrot.slane %v1505, 3
    %v1509 = vunpack.c.l.b16 %v1501
    %v1510 = vunpack.c.l.b16 %v1502
    %v1511 = vpack.c.b16 %v1510, %v1509
    %v1514 = vsel %vm678, %v1506, 0
    %1516 = vmatprep.subr.bf16.mxu0 0
    %1517 = vmatpush1.bf16.msra.mxu0 %v1511
    %1518 = vmatprep.subr.bf16.mxu0 0
    %1519 = vmatpush1.bf16.msra.mxu0 0
    %1520 = vmatprep.subr.bf16.mxu0 0
    %1521 = vmatpush1.bf16.msra.mxu0 0
    %1522 = vmatprep.subr.bf16.mxu0 0
    %1523 = vmatpush1.bf16.msra.mxu0 0
    %1524 = vmatprep.subr.bf16.mxu0 0
    %1525 = vmatpush1.bf16.msra.mxu0 0
    %1526 = vmatprep.subr.bf16.mxu0 0
    %1527 = vmatpush1.bf16.msra.mxu0 0
    %1528 = vmatprep.subr.bf16.mxu0 0
    %1529 = vmatpush1.bf16.msra.mxu0 0
    %1530 = vmatprep.subr.bf16.mxu0 0
    %1531 = vmatpush1.bf16.msra.mxu0 0
    %1532 = vmatprep.subr.bf16.mxu0 0
    %1533 = vmatpush1.bf16.msra.mxu0 0
    %1534 = vmatprep.subr.bf16.mxu0 0
    %1535 = vmatpush1.bf16.msra.mxu0 0
    %1536 = vmatprep.subr.bf16.mxu0 0
    %1537 = vmatpush1.bf16.msra.mxu0 0
    %1538 = vmatprep.subr.bf16.mxu0 0
    %1539 = vmatpush1.bf16.msra.mxu0 0
    %1540 = vmatprep.subr.bf16.mxu0 0
    %1541 = vmatpush1.bf16.msra.mxu0 0
    %1542 = vmatprep.subr.bf16.mxu0 0
    %1543 = vmatpush1.bf16.msra.mxu0 0
    %1544 = vmatprep.subr.bf16.mxu0 0
    %1545 = vmatpush1.bf16.msra.mxu0 0
    %1546 = vmatprep.subr.bf16.mxu0 0
    %1547 = vmatpush1.bf16.msra.mxu0 0
    %1548 = vmatprep.mubr.bf16.mxu0 0
    %1549 = vmatmul.mubr.bf16.gmra.mrb[0].mxu0 %v1514
    %v1550 = vpop.f32.mrb[0].mxu0
    %v1551 = vadd.f32 0.0, %v1550
    %v1552 = vpop.f32.mrb[0].mxu0
    %v1553 = vpop.f32.mrb[0].mxu0
    %v1554 = vpop.f32.mrb[0].mxu0
    %1555 = vdwg.mxu0
    %v1556 = vadd.f32 %v1499, %v1551
    %v1557 = vld [vmem:[#allocation2 + $0x10] sm:$0x1]
    %v1558 = vld [vmem:[%s3 + $0x80] sm:$0xf]
    %v1559 = vld [vmem:[%s3 + $0x84] sm:$0xf]
    %v1562 = vunpack.c.l.b16 %v1558
    %v1563 = vunpack.c.l.b16 %v1559
    %v1564 = vpack.c.b16 %v1563, %v1562
    %v1567 = vsel %vm678, %v1557, 0
    %1569 = vmatprep.subr.bf16.mxu0 0
    %1570 = vmatpush1.bf16.msra.mxu0 %v1564
    %1571 = vmatprep.subr.bf16.mxu0 0
    %1572 = vmatpush1.bf16.msra.mxu0 0
    %1573 = vmatprep.subr.bf16.mxu0 0
    %1574 = vmatpush1.bf16.msra.mxu0 0
    %1575 = vmatprep.subr.bf16.mxu0 0
    %1576 = vmatpush1.bf16.msra.mxu0 0
    %1577 = vmatprep.subr.bf16.mxu0 0
    %1578 = vmatpush1.bf16.msra.mxu0 0
    %1579 = vmatprep.subr.bf16.mxu0 0
    %1580 = vmatpush1.bf16.msra.mxu0 0
    %1581 = vmatprep.subr.bf16.mxu0 0
    %1582 = vmatpush1.bf16.msra.mxu0 0
    %1583 = vmatprep.subr.bf16.mxu0 0
    %1584 = vmatpush1.bf16.msra.mxu0 0
    %1585 = vmatprep.subr.bf16.mxu0 0
    %1586 = vmatpush1.bf16.msra.mxu0 0
    %1587 = vmatprep.subr.bf16.mxu0 0
    %1588 = vmatpush1.bf16.msra.mxu0 0
    %1589 = vmatprep.subr.bf16.mxu0 0
    %1590 = vmatpush1.bf16.msra.mxu0 0
    %1591 = vmatprep.subr.bf16.mxu0 0
    %1592 = vmatpush1.bf16.msra.mxu0 0
    %1593 = vmatprep.subr.bf16.mxu0 0
    %1594 = vmatpush1.bf16.msra.mxu0 0
    %1595 = vmatprep.subr.bf16.mxu0 0
    %1596 = vmatpush1.bf16.msra.mxu0 0
    %1597 = vmatprep.subr.bf16.mxu0 0
    %1598 = vmatpush1.bf16.msra.mxu0 0
    %1599 = vmatprep.subr.bf16.mxu0 0
    %1600 = vmatpush1.bf16.msra.mxu0 0
    %1601 = vmatprep.mubr.bf16.mxu0 0
    %1602 = vmatmul.mubr.bf16.gmra.mrb[0].mxu0 %v1567
    %v1603 = vpop.f32.mrb[0].mxu0
    %v1604 = vadd.f32 0.0, %v1603
    %v1605 = vpop.f32.mrb[0].mxu0
    %v1606 = vpop.f32.mrb[0].mxu0
    %v1607 = vpop.f32.mrb[0].mxu0
    %1608 = vdwg.mxu0
    %v1609 = vadd.f32 %v1556, %v1604
    %v1610 = vld [vmem:[#allocation2 + $0x10] sm:$0x2]
    %v1611 = vld [vmem:[%s3 + $0x88] sm:$0xf]
    %v1612 = vld [vmem:[%s3 + $0x8c] sm:$0xf]
    %v1614 = vunpack.c.l.b16 %v1610
    %v1615 = vpack.c.b16 %v1614, %v1614
    %v1616 = vrot.slane %v1615, 1
    %v1619 = vunpack.c.l.b16 %v1611
    %v1620 = vunpack.c.l.b16 %v1612
    %v1621 = vpack.c.b16 %v1620, %v1619
    %v1624 = vsel %vm678, %v1616, 0
    %1626 = vmatprep.subr.bf16.mxu0 0
    %1627 = vmatpush1.bf16.msra.mxu0 %v1621
    %1628 = vmatprep.subr.bf16.mxu0 0
    %1629 = vmatpush1.bf16.msra.mxu0 0
    %1630 = vmatprep.subr.bf16.mxu0 0
    %1631 = vmatpush1.bf16.msra.mxu0 0
    %1632 = vmatprep.subr.bf16.mxu0 0
    %1633 = vmatpush1.bf16.msra.mxu0 0
    %1634 = vmatprep.subr.bf16.mxu0 0
    %1635 = vmatpush1.bf16.msra.mxu0 0
    %1636 = vmatprep.subr.bf16.mxu0 0
    %1637 = vmatpush1.bf16.msra.mxu0 0
    %1638 = vmatprep.subr.bf16.mxu0 0
    %1639 = vmatpush1.bf16.msra.mxu0 0
    %1640 = vmatprep.subr.bf16.mxu0 0
    %1641 = vmatpush1.bf16.msra.mxu0 0
    %1642 = vmatprep.subr.bf16.mxu0 0
    %1643 = vmatpush1.bf16.msra.mxu0 0
    %1644 = vmatprep.subr.bf16.mxu0 0
    %1645 = vmatpush1.bf16.msra.mxu0 0
    %1646 = vmatprep.subr.bf16.mxu0 0
    %1647 = vmatpush1.bf16.msra.mxu0 0
    %1648 = vmatprep.subr.bf16.mxu0 0
    %1649 = vmatpush1.bf16.msra.mxu0 0
    %1650 = vmatprep.subr.bf16.mxu0 0
    %1651 = vmatpush1.bf16.msra.mxu0 0
    %1652 = vmatprep.subr.bf16.mxu0 0
    %1653 = vmatpush1.bf16.msra.mxu0 0
    %1654 = vmatprep.subr.bf16.mxu0 0
    %1655 = vmatpush1.bf16.msra.mxu0 0
    %1656 = vmatprep.subr.bf16.mxu0 0
    %1657 = vmatpush1.bf16.msra.mxu0 0
    %1658 = vmatprep.mubr.bf16.mxu0 0
    %1659 = vmatmul.mubr.bf16.gmra.mrb[0].mxu0 %v1624
    %v1660 = vpop.f32.mrb[0].mxu0
    %v1661 = vadd.f32 0.0, %v1660
    %v1662 = vpop.f32.mrb[0].mxu0
    %v1663 = vpop.f32.mrb[0].mxu0
    %v1664 = vpop.f32.mrb[0].mxu0
    %1665 = vdwg.mxu0
    %v1666 = vadd.f32 %v1609, %v1661
    %v1667 = vld [vmem:[#allocation2 + $0x10] sm:$0x4]
    %v1668 = vld [vmem:[%s3 + $0x90] sm:$0xf]
    %v1669 = vld [vmem:[%s3 + $0x94] sm:$0xf]
    %v1671 = vunpack.c.l.b16 %v1667
    %v1672 = vpack.c.b16 %v1671, %v1671
    %v1673 = vrot.slane %v1672, 2
    %v1676 = vunpack.c.l.b16 %v1668
    %v1677 = vunpack.c.l.b16 %v1669
    %v1678 = vpack.c.b16 %v1677, %v1676
    %v1681 = vsel %vm678, %v1673, 0
    %1683 = vmatprep.subr.bf16.mxu0 0
    %1684 = vmatpush1.bf16.msra.mxu0 %v1678
    %1685 = vmatprep.subr.bf16.mxu0 0
    %1686 = vmatpush1.bf16.msra.mxu0 0
    %1687 = vmatprep.subr.bf16.mxu0 0
    %1688 = vmatpush1.bf16.msra.mxu0 0
    %1689 = vmatprep.subr.bf16.mxu0 0
    %1690 = vmatpush1.bf16.msra.mxu0 0
    %1691 = vmatprep.subr.bf16.mxu0 0
    %1692 = vmatpush1.bf16.msra.mxu0 0
    %1693 = vmatprep.subr.bf16.mxu0 0
    %1694 = vmatpush1.bf16.msra.mxu0 0
    %1695 = vmatprep.subr.bf16.mxu0 0
    %1696 = vmatpush1.bf16.msra.mxu0 0
    %1697 = vmatprep.subr.bf16.mxu0 0
    %1698 = vmatpush1.bf16.msra.mxu0 0
    %1699 = vmatprep.subr.bf16.mxu0 0
    %1700 = vmatpush1.bf16.msra.mxu0 0
    %1701 = vmatprep.subr.bf16.mxu0 0
    %1702 = vmatpush1.bf16.msra.mxu0 0
    %1703 = vmatprep.subr.bf16.mxu0 0
    %1704 = vmatpush1.bf16.msra.mxu0 0
    %1705 = vmatprep.subr.bf16.mxu0 0
    %1706 = vmatpush1.bf16.msra.mxu0 0
    %1707 = vmatprep.subr.bf16.mxu0 0
    %1708 = vmatpush1.bf16.msra.mxu0 0
    %1709 = vmatprep.subr.bf16.mxu0 0
    %1710 = vmatpush1.bf16.msra.mxu0 0
    %1711 = vmatprep.subr.bf16.mxu0 0
    %1712 = vmatpush1.bf16.msra.mxu0 0
    %1713 = vmatprep.subr.bf16.mxu0 0
    %1714 = vmatpush1.bf16.msra.mxu0 0
    %1715 = vmatprep.mubr.bf16.mxu0 0
    %1716 = vmatmul.mubr.bf16.gmra.mrb[0].mxu0 %v1681
    %v1717 = vpop.f32.mrb[0].mxu0
    %v1718 = vadd.f32 0.0, %v1717
    %v1719 = vpop.f32.mrb[0].mxu0
    %v1720 = vpop.f32.mrb[0].mxu0
    %v1721 = vpop.f32.mrb[0].mxu0
    %1722 = vdwg.mxu0
    %v1723 = vadd.f32 %v1666, %v1718
    %v1724 = vld [vmem:[#allocation2 + $0x10] sm:$0x8]
    %v1725 = vld [vmem:[%s3 + $0x98] sm:$0xf]
    %v1726 = vld [vmem:[%s3 + $0x9c] sm:$0xf]
    %v1728 = vunpack.c.l.b16 %v1724
    %v1729 = vpack.c.b16 %v1728, %v1728
    %v1730 = vrot.slane %v1729, 3
    %v1733 = vunpack.c.l.b16 %v1725
    %v1734 = vunpack.c.l.b16 %v1726
    %v1735 = vpack.c.b16 %v1734, %v1733
    %v1738 = vsel %vm678, %v1730, 0
    %1740 = vmatprep.subr.bf16.mxu0 0
    %1741 = vmatpush1.bf16.msra.mxu0 %v1735
    %1742 = vmatprep.subr.bf16.mxu0 0
    %1743 = vmatpush1.bf16.msra.mxu0 0
    %1744 = vmatprep.subr.bf16.mxu0 0
    %1745 = vmatpush1.bf16.msra.mxu0 0
    %1746 = vmatprep.subr.bf16.mxu0 0
    %1747 = vmatpush1.bf16.msra.mxu0 0
    %1748 = vmatprep.subr.bf16.mxu0 0
    %1749 = vmatpush1.bf16.msra.mxu0 0
    %1750 = vmatprep.subr.bf16.mxu0 0
    %1751 = vmatpush1.bf16.msra.mxu0 0
    %1752 = vmatprep.subr.bf16.mxu0 0
    %1753 = vmatpush1.bf16.msra.mxu0 0
    %1754 = vmatprep.subr.bf16.mxu0 0
    %1755 = vmatpush1.bf16.msra.mxu0 0
    %1756 = vmatprep.subr.bf16.mxu0 0
    %1757 = vmatpush1.bf16.msra.mxu0 0
    %1758 = vmatprep.subr.bf16.mxu0 0
    %1759 = vmatpush1.bf16.msra.mxu0 0
    %1760 = vmatprep.subr.bf16.mxu0 0
    %1761 = vmatpush1.bf16.msra.mxu0 0
    %1762 = vmatprep.subr.bf16.mxu0 0
    %1763 = vmatpush1.bf16.msra.mxu0 0
    %1764 = vmatprep.subr.bf16.mxu0 0
    %1765 = vmatpush1.bf16.msra.mxu0 0
    %1766 = vmatprep.subr.bf16.mxu0 0
    %1767 = vmatpush1.bf16.msra.mxu0 0
    %1768 = vmatprep.subr.bf16.mxu0 0
    %1769 = vmatpush1.bf16.msra.mxu0 0
    %1770 = vmatprep.subr.bf16.mxu0 0
    %1771 = vmatpush1.bf16.msra.mxu0 0
    %1772 = vmatprep.mubr.bf16.mxu0 0
    %1773 = vmatmul.mubr.bf16.gmra.mrb[0].mxu0 %v1738
    %v1774 = vpop.f32.mrb[0].mxu0
    %v1775 = vadd.f32 0.0, %v1774
    %v1776 = vpop.f32.mrb[0].mxu0
    %v1777 = vpop.f32.mrb[0].mxu0
    %v1778 = vpop.f32.mrb[0].mxu0
    %1779 = vdwg.mxu0
    %v1780 = vadd.f32 %v1723, %v1775
    %v1781 = vld [vmem:[#allocation2 + $0x14] sm:$0x1]
    %v1782 = vld [vmem:[%s3 + $0xa0] sm:$0xf]
    %v1783 = vld [vmem:[%s3 + $0xa4] sm:$0xf]
    %v1786 = vunpack.c.l.b16 %v1782
    %v1787 = vunpack.c.l.b16 %v1783
    %v1788 = vpack.c.b16 %v1787, %v1786
    %v1791 = vsel %vm678, %v1781, 0
    %1793 = vmatprep.subr.bf16.mxu0 0
    %1794 = vmatpush1.bf16.msra.mxu0 %v1788
    %1795 = vmatprep.subr.bf16.mxu0 0
    %1796 = vmatpush1.bf16.msra.mxu0 0
    %1797 = vmatprep.subr.bf16.mxu0 0
    %1798 = vmatpush1.bf16.msra.mxu0 0
    %1799 = vmatprep.subr.bf16.mxu0 0
    %1800 = vmatpush1.bf16.msra.mxu0 0
    %1801 = vmatprep.subr.bf16.mxu0 0
    %1802 = vmatpush1.bf16.msra.mxu0 0
    %1803 = vmatprep.subr.bf16.mxu0 0
    %1804 = vmatpush1.bf16.msra.mxu0 0
    %1805 = vmatprep.subr.bf16.mxu0 0
    %1806 = vmatpush1.bf16.msra.mxu0 0
    %1807 = vmatprep.subr.bf16.mxu0 0
    %1808 = vmatpush1.bf16.msra.mxu0 0
    %1809 = vmatprep.subr.bf16.mxu0 0
    %1810 = vmatpush1.bf16.msra.mxu0 0
    %1811 = vmatprep.subr.bf16.mxu0 0
    %1812 = vmatpush1.bf16.msra.mxu0 0
    %1813 = vmatprep.subr.bf16.mxu0 0
    %1814 = vmatpush1.bf16.msra.mxu0 0
    %1815 = vmatprep.subr.bf16.mxu0 0
    %1816 = vmatpush1.bf16.msra.mxu0 0
    %1817 = vmatprep.subr.bf16.mxu0 0
    %1818 = vmatpush1.bf16.msra.mxu0 0
    %1819 = vmatprep.subr.bf16.mxu0 0
    %1820 = vmatpush1.bf16.msra.mxu0 0
    %1821 = vmatprep.subr.bf16.mxu0 0
    %1822 = vmatpush1.bf16.msra.mxu0 0
    %1823 = vmatprep.subr.bf16.mxu0 0
    %1824 = vmatpush1.bf16.msra.mxu0 0
    %1825 = vmatprep.mubr.bf16.mxu0 0
    %1826 = vmatmul.mubr.bf16.gmra.mrb[0].mxu0 %v1791
    %v1827 = vpop.f32.mrb[0].mxu0
    %v1828 = vadd.f32 0.0, %v1827
    %v1829 = vpop.f32.mrb[0].mxu0
    %v1830 = vpop.f32.mrb[0].mxu0
    %v1831 = vpop.f32.mrb[0].mxu0
    %1832 = vdwg.mxu0
    %v1833 = vadd.f32 %v1780, %v1828
    %v1834 = vld [vmem:[#allocation2 + $0x14] sm:$0x2]
    %v1835 = vld [vmem:[%s3 + $0xa8] sm:$0xf]
    %v1836 = vld [vmem:[%s3 + $0xac] sm:$0xf]
    %v1838 = vunpack.c.l.b16 %v1834
    %v1839 = vpack.c.b16 %v1838, %v1838
    %v1840 = vrot.slane %v1839, 1
    %v1843 = vunpack.c.l.b16 %v1835
    %v1844 = vunpack.c.l.b16 %v1836
    %v1845 = vpack.c.b16 %v1844, %v1843
    %v1848 = vsel %vm678, %v1840, 0
    %1850 = vmatprep.subr.bf16.mxu0 0
    %1851 = vmatpush1.bf16.msra.mxu0 %v1845
    %1852 = vmatprep.subr.bf16.mxu0 0
    %1853 = vmatpush1.bf16.msra.mxu0 0
    %1854 = vmatprep.subr.bf16.mxu0 0
    %1855 = vmatpush1.bf16.msra.mxu0 0
    %1856 = vmatprep.subr.bf16.mxu0 0
    %1857 = vmatpush1.bf16.msra.mxu0 0
    %1858 = vmatprep.subr.bf16.mxu0 0
    %1859 = vmatpush1.bf16.msra.mxu0 0
    %1860 = vmatprep.subr.bf16.mxu0 0
    %1861 = vmatpush1.bf16.msra.mxu0 0
    %1862 = vmatprep.subr.bf16.mxu0 0
    %1863 = vmatpush1.bf16.msra.mxu0 0
    %1864 = vmatprep.subr.bf16.mxu0 0
    %1865 = vmatpush1.bf16.msra.mxu0 0
    %1866 = vmatprep.subr.bf16.mxu0 0
    %1867 = vmatpush1.bf16.msra.mxu0 0
    %1868 = vmatprep.subr.bf16.mxu0 0
    %1869 = vmatpush1.bf16.msra.mxu0 0
    %1870 = vmatprep.subr.bf16.mxu0 0
    %1871 = vmatpush1.bf16.msra.mxu0 0
    %1872 = vmatprep.subr.bf16.mxu0 0
    %1873 = vmatpush1.bf16.msra.mxu0 0
    %1874 = vmatprep.subr.bf16.mxu0 0
    %1875 = vmatpush1.bf16.msra.mxu0 0
    %1876 = vmatprep.subr.bf16.mxu0 0
    %1877 = vmatpush1.bf16.msra.mxu0 0
    %1878 = vmatprep.subr.bf16.mxu0 0
    %1879 = vmatpush1.bf16.msra.mxu0 0
    %1880 = vmatprep.subr.bf16.mxu0 0
    %1881 = vmatpush1.bf16.msra.mxu0 0
    %1882 = vmatprep.mubr.bf16.mxu0 0
    %1883 = vmatmul.mubr.bf16.gmra.mrb[0].mxu0 %v1848
    %v1884 = vpop.f32.mrb[0].mxu0
    %v1885 = vadd.f32 0.0, %v1884
    %v1886 = vpop.f32.mrb[0].mxu0
    %v1887 = vpop.f32.mrb[0].mxu0
    %v1888 = vpop.f32.mrb[0].mxu0
    %1889 = vdwg.mxu0
    %v1890 = vadd.f32 %v1833, %v1885
    %v1891 = vld [vmem:[#allocation2 + $0x14] sm:$0x4]
    %v1892 = vld [vmem:[%s3 + $0xb0] sm:$0xf]
    %v1893 = vld [vmem:[%s3 + $0xb4] sm:$0xf]
    %v1895 = vunpack.c.l.b16 %v1891
    %v1896 = vpack.c.b16 %v1895, %v1895
    %v1897 = vrot.slane %v1896, 2
    %v1900 = vunpack.c.l.b16 %v1892
    %v1901 = vunpack.c.l.b16 %v1893
    %v1902 = vpack.c.b16 %v1901, %v1900
    %v1905 = vsel %vm678, %v1897, 0
    %1907 = vmatprep.subr.bf16.mxu0 0
    %1908 = vmatpush1.bf16.msra.mxu0 %v1902
    %1909 = vmatprep.subr.bf16.mxu0 0
    %1910 = vmatpush1.bf16.msra.mxu0 0
    %1911 = vmatprep.subr.bf16.mxu0 0
    %1912 = vmatpush1.bf16.msra.mxu0 0
    %1913 = vmatprep.subr.bf16.mxu0 0
    %1914 = vmatpush1.bf16.msra.mxu0 0
    %1915 = vmatprep.subr.bf16.mxu0 0
    %1916 = vmatpush1.bf16.msra.mxu0 0
    %1917 = vmatprep.subr.bf16.mxu0 0
    %1918 = vmatpush1.bf16.msra.mxu0 0
    %1919 = vmatprep.subr.bf16.mxu0 0
    %1920 = vmatpush1.bf16.msra.mxu0 0
    %1921 = vmatprep.subr.bf16.mxu0 0
    %1922 = vmatpush1.bf16.msra.mxu0 0
    %1923 = vmatprep.subr.bf16.mxu0 0
    %1924 = vmatpush1.bf16.msra.mxu0 0
    %1925 = vmatprep.subr.bf16.mxu0 0
    %1926 = vmatpush1.bf16.msra.mxu0 0
    %1927 = vmatprep.subr.bf16.mxu0 0
    %1928 = vmatpush1.bf16.msra.mxu0 0
    %1929 = vmatprep.subr.bf16.mxu0 0
    %1930 = vmatpush1.bf16.msra.mxu0 0
    %1931 = vmatprep.subr.bf16.mxu0 0
    %1932 = vmatpush1.bf16.msra.mxu0 0
    %1933 = vmatprep.subr.bf16.mxu0 0
    %1934 = vmatpush1.bf16.msra.mxu0 0
    %1935 = vmatprep.subr.bf16.mxu0 0
    %1936 = vmatpush1.bf16.msra.mxu0 0
    %1937 = vmatprep.subr.bf16.mxu0 0
    %1938 = vmatpush1.bf16.msra.mxu0 0
    %1939 = vmatprep.mubr.bf16.mxu0 0
    %1940 = vmatmul.mubr.bf16.gmra.mrb[0].mxu0 %v1905
    %v1941 = vpop.f32.mrb[0].mxu0
    %v1942 = vadd.f32 0.0, %v1941
    %v1943 = vpop.f32.mrb[0].mxu0
    %v1944 = vpop.f32.mrb[0].mxu0
    %v1945 = vpop.f32.mrb[0].mxu0
    %1946 = vdwg.mxu0
    %v1947 = vadd.f32 %v1890, %v1942
    %v1948 = vld [vmem:[#allocation2 + $0x14] sm:$0x8]
    %v1949 = vld [vmem:[%s3 + $0xb8] sm:$0xf]
    %v1950 = vld [vmem:[%s3 + $0xbc] sm:$0xf]
    %v1952 = vunpack.c.l.b16 %v1948
    %v1953 = vpack.c.b16 %v1952, %v1952
    %v1954 = vrot.slane %v1953, 3
    %v1957 = vunpack.c.l.b16 %v1949
    %v1958 = vunpack.c.l.b16 %v1950
    %v1959 = vpack.c.b16 %v1958, %v1957
    %v1962 = vsel %vm678, %v1954, 0
    %1964 = vmatprep.subr.bf16.mxu0 0
    %1965 = vmatpush1.bf16.msra.mxu0 %v1959
    %1966 = vmatprep.subr.bf16.mxu0 0
    %1967 = vmatpush1.bf16.msra.mxu0 0
    %1968 = vmatprep.subr.bf16.mxu0 0
    %1969 = vmatpush1.bf16.msra.mxu0 0
    %1970 = vmatprep.subr.bf16.mxu0 0
    %1971 = vmatpush1.bf16.msra.mxu0 0
    %1972 = vmatprep.subr.bf16.mxu0 0
    %1973 = vmatpush1.bf16.msra.mxu0 0
    %1974 = vmatprep.subr.bf16.mxu0 0
    %1975 = vmatpush1.bf16.msra.mxu0 0
    %1976 = vmatprep.subr.bf16.mxu0 0
    %1977 = vmatpush1.bf16.msra.mxu0 0
    %1978 = vmatprep.subr.bf16.mxu0 0
    %1979 = vmatpush1.bf16.msra.mxu0 0
    %1980 = vmatprep.subr.bf16.mxu0 0
    %1981 = vmatpush1.bf16.msra.mxu0 0
    %1982 = vmatprep.subr.bf16.mxu0 0
    %1983 = vmatpush1.bf16.msra.mxu0 0
    %1984 = vmatprep.subr.bf16.mxu0 0
    %1985 = vmatpush1.bf16.msra.mxu0 0
    %1986 = vmatprep.subr.bf16.mxu0 0
    %1987 = vmatpush1.bf16.msra.mxu0 0
    %1988 = vmatprep.subr.bf16.mxu0 0
    %1989 = vmatpush1.bf16.msra.mxu0 0
    %1990 = vmatprep.subr.bf16.mxu0 0
    %1991 = vmatpush1.bf16.msra.mxu0 0
    %1992 = vmatprep.subr.bf16.mxu0 0
    %1993 = vmatpush1.bf16.msra.mxu0 0
    %1994 = vmatprep.subr.bf16.mxu0 0
    %1995 = vmatpush1.bf16.msra.mxu0 0
    %1996 = vmatprep.mubr.bf16.mxu0 0
    %1997 = vmatmul.mubr.bf16.gmra.mrb[0].mxu0 %v1962
    %v1998 = vpop.f32.mrb[0].mxu0
    %v1999 = vadd.f32 0.0, %v1998
    %v2000 = vpop.f32.mrb[0].mxu0
    %v2001 = vpop.f32.mrb[0].mxu0
    %v2002 = vpop.f32.mrb[0].mxu0
    %2003 = vdwg.mxu0
    %v2004 = vadd.f32 %v1947, %v1999
    %v2005 = vld [vmem:[#allocation2 + $0x18] sm:$0x1]
    %v2006 = vld [vmem:[%s3 + $0xc0] sm:$0xf]
    %v2007 = vld [vmem:[%s3 + $0xc4] sm:$0xf]
    %v2010 = vunpack.c.l.b16 %v2006
    %v2011 = vunpack.c.l.b16 %v2007
    %v2012 = vpack.c.b16 %v2011, %v2010
    %v2015 = vsel %vm678, %v2005, 0
    %2017 = vmatprep.subr.bf16.mxu0 0
    %2018 = vmatpush1.bf16.msra.mxu0 %v2012
    %2019 = vmatprep.subr.bf16.mxu0 0
    %2020 = vmatpush1.bf16.msra.mxu0 0
    %2021 = vmatprep.subr.bf16.mxu0 0
    %2022 = vmatpush1.bf16.msra.mxu0 0
    %2023 = vmatprep.subr.bf16.mxu0 0
    %2024 = vmatpush1.bf16.msra.mxu0 0
    %2025 = vmatprep.subr.bf16.mxu0 0
    %2026 = vmatpush1.bf16.msra.mxu0 0
    %2027 = vmatprep.subr.bf16.mxu0 0
    %2028 = vmatpush1.bf16.msra.mxu0 0
    %2029 = vmatprep.subr.bf16.mxu0 0
    %2030 = vmatpush1.bf16.msra.mxu0 0
    %2031 = vmatprep.subr.bf16.mxu0 0
    %2032 = vmatpush1.bf16.msra.mxu0 0
    %2033 = vmatprep.subr.bf16.mxu0 0
    %2034 = vmatpush1.bf16.msra.mxu0 0
    %2035 = vmatprep.subr.bf16.mxu0 0
    %2036 = vmatpush1.bf16.msra.mxu0 0
    %2037 = vmatprep.subr.bf16.mxu0 0
    %2038 = vmatpush1.bf16.msra.mxu0 0
    %2039 = vmatprep.subr.bf16.mxu0 0
    %2040 = vmatpush1.bf16.msra.mxu0 0
    %2041 = vmatprep.subr.bf16.mxu0 0
    %2042 = vmatpush1.bf16.msra.mxu0 0
    %2043 = vmatprep.subr.bf16.mxu0 0
    %2044 = vmatpush1.bf16.msra.mxu0 0
    %2045 = vmatprep.subr.bf16.mxu0 0
    %2046 = vmatpush1.bf16.msra.mxu0 0
    %2047 = vmatprep.subr.bf16.mxu0 0
    %2048 = vmatpush1.bf16.msra.mxu0 0
    %2049 = vmatprep.mubr.bf16.mxu0 0
    %2050 = vmatmul.mubr.bf16.gmra.mrb[0].mxu0 %v2015
    %v2051 = vpop.f32.mrb[0].mxu0
    %v2052 = vadd.f32 0.0, %v2051
    %v2053 = vpop.f32.mrb[0].mxu0
    %v2054 = vpop.f32.mrb[0].mxu0
    %v2055 = vpop.f32.mrb[0].mxu0
    %2056 = vdwg.mxu0
    %v2057 = vadd.f32 %v2004, %v2052
    %v2058 = vld [vmem:[%s4] sm:$0x1]
    %v2060 = vlaneseq
    %v2061 = vshrl.u32 %v2060, 7
    %v2062 = vsub.s32 0, %v2061
    %v2063 = vrot.slane %v2058, %v2062
    %v2065 = vadd.f32 %v2057, %v2063
    %v2066 = vmax.f32 %v2065, 0.0
    %v2067 = vpack.c.bf16 %v2066, %v2066
    %v2068 = vld [vmem:[%s5] sm:$0xf]
    %v2069 = vld [vmem:[%s5 + $0x4] sm:$0xf]
    %v2070 = vld [vmem:[%s5 + $0x8] sm:$0xf]
    %v2071 = vld [vmem:[%s5 + $0xc] sm:$0xf]
    %v2072 = vld [vmem:[%s5 + $0x10] sm:$0xf]
    %v2073 = vld [vmem:[%s5 + $0x14] sm:$0xf]
    %v2074 = vld [vmem:[%s5 + $0x18] sm:$0xf]
    %v2075 = vld [vmem:[%s5 + $0x1c] sm:$0xf]
    %v2076 = vld [vmem:[%s5 + $0x20] sm:$0xf]
    %v2077 = vld [vmem:[%s5 + $0x24] sm:$0xf]
    %v2078 = vld [vmem:[%s5 + $0x28] sm:$0xf]
    %v2079 = vld [vmem:[%s5 + $0x2c] sm:$0xf]
    %v2080 = vld [vmem:[%s5 + $0x30] sm:$0xf]
    %v2081 = vld [vmem:[%s5 + $0x34] sm:$0xf]
    %v2082 = vld [vmem:[%s5 + $0x38] sm:$0xf]
    %v2083 = vld [vmem:[%s6] sm:$0x1]
    %v2085 = vlaneseq
    %v2086 = vshrl.u32 %v2085, 7
    %v2087 = vsub.s32 0, %v2086
    %v2088 = vrot.slane %v2083, %v2087
    %v2105 = vunpack.c.l.b16 %v2068
    %v2106 = vunpack.c.l.b16 %v2069
    %v2107 = vunpack.c.l.b16 %v2070
    %v2108 = vunpack.c.l.b16 %v2071
    %v2109 = vunpack.c.l.b16 %v2072
    %v2110 = vunpack.c.l.b16 %v2073
    %v2111 = vunpack.c.l.b16 %v2074
    %v2112 = vunpack.c.l.b16 %v2075
    %v2113 = vunpack.c.l.b16 %v2076
    %v2114 = vunpack.c.l.b16 %v2077
    %v2115 = vunpack.c.l.b16 %v2078
    %v2116 = vunpack.c.l.b16 %v2079
    %v2117 = vunpack.c.l.b16 %v2080
    %v2118 = vunpack.c.l.b16 %v2081
    %v2119 = vunpack.c.l.b16 %v2082
    %v2120 = vpack.c.b16 %v2106, %v2105
    %v2121 = vpack.c.b16 %v2108, %v2107
    %v2122 = vpack.c.b16 %v2110, %v2109
    %v2123 = vpack.c.b16 %v2112, %v2111
    %v2124 = vpack.c.b16 %v2114, %v2113
    %v2125 = vpack.c.b16 %v2116, %v2115
    %v2126 = vpack.c.b16 %v2118, %v2117
    %v2127 = vpack.c.b16 %v2119, %v2119
    %vm2135 = vcmask 982016
    %v2137 = vsel %vm2135, %v2067, 0
    %vm2139 = vcmask 1043456
    %v2141 = vsel %vm2139, %v2127, 0
    %2143 = vmatprep.subr.bf16.mxu0 0
    %2144 = vmatpush1.bf16.msra.mxu0 %v2120
    %2145 = vmatprep.subr.bf16.mxu0 0
    %2146 = vmatpush1.bf16.msra.mxu0 %v2121
    %2147 = vmatprep.subr.bf16.mxu0 0
    %2148 = vmatpush1.bf16.msra.mxu0 %v2122
    %2149 = vmatprep.subr.bf16.mxu0 0
    %2150 = vmatpush1.bf16.msra.mxu0 %v2123
    %2151 = vmatprep.subr.bf16.mxu0 0
    %2152 = vmatpush1.bf16.msra.mxu0 %v2124
    %2153 = vmatprep.subr.bf16.mxu0 0
    %2154 = vmatpush1.bf16.msra.mxu0 %v2125
    %2155 = vmatprep.subr.bf16.mxu0 0
    %2156 = vmatpush1.bf16.msra.mxu0 %v2126
    %2157 = vmatprep.subr.bf16.mxu0 0
    %2158 = vmatpush1.bf16.msra.mxu0 %v2141
    %2159 = vmatprep.subr.bf16.mxu0 0
    %2160 = vmatpush1.bf16.msra.mxu0 0
    %2161 = vmatprep.subr.bf16.mxu0 0
    %2162 = vmatpush1.bf16.msra.mxu0 0
    %2163 = vmatprep.subr.bf16.mxu0 0
    %2164 = vmatpush1.bf16.msra.mxu0 0
    %2165 = vmatprep.subr.bf16.mxu0 0
    %2166 = vmatpush1.bf16.msra.mxu0 0
    %2167 = vmatprep.subr.bf16.mxu0 0
    %2168 = vmatpush1.bf16.msra.mxu0 0
    %2169 = vmatprep.subr.bf16.mxu0 0
    %2170 = vmatpush1.bf16.msra.mxu0 0
    %2171 = vmatprep.subr.bf16.mxu0 0
    %2172 = vmatpush1.bf16.msra.mxu0 0
    %2173 = vmatprep.subr.bf16.mxu0 0
    %2174 = vmatpush1.bf16.msra.mxu0 0
    %2175 = vmatprep.mubr.bf16.mxu0 0
    %2176 = vmatmul.mubr.bf16.gmra.mrb[0].mxu0 %v2137
    %v2177 = vpop.f32.mrb[0].mxu0
    %v2178 = vadd.f32 %v2088, %v2177
    %v2179 = vpop.f32.mrb[0].mxu0
    %v2180 = vpop.f32.mrb[0].mxu0
    %v2181 = vpop.f32.mrb[0].mxu0
    %2182 = vdwg.mxu0
    %v2183 = vmax.f32 %v2178, 0.0
    %v2184 = vpack.c.bf16 %v2183, %v2183
    %v2185 = vld [vmem:[%s7] sm:$0xf]
    %v2186 = vld [vmem:[%s7 + $0x4] sm:$0xf]
    %v2187 = vld [vmem:[%s7 + $0x8] sm:$0xf]
    %v2188 = vld [vmem:[%s7 + $0xc] sm:$0xf]
    %v2189 = vld [vmem:[%s7 + $0x10] sm:$0xf]
    %v2190 = vld [vmem:[%s7 + $0x14] sm:$0xf]
    %v2191 = vld [vmem:[%s7 + $0x18] sm:$0xf]
    %v2192 = vld [vmem:[%s7 + $0x1c] sm:$0xf]
    %v2193 = vld [vmem:[%s7 + $0x20] sm:$0xf]
    %v2194 = vld [vmem:[%s7 + $0x24] sm:$0xf]
    %v2195 = vld [vmem:[%s7 + $0x28] sm:$0x3]
    %v2196 = vld [vmem:[%s8] sm:$0x1]
    %v2198 = vlaneseq
    %v2199 = vshrl.u32 %v2198, 7
    %v2200 = vsub.s32 0, %v2199
    %v2201 = vrot.slane %v2196, %v2200
    %v2214 = vunpack.c.l.b16 %v2185
    %v2215 = vunpack.c.l.b16 %v2186
    %v2216 = vunpack.c.l.b16 %v2187
    %v2217 = vunpack.c.l.b16 %v2188
    %v2218 = vunpack.c.l.b16 %v2189
    %v2219 = vunpack.c.l.b16 %v2190
    %v2220 = vunpack.c.l.b16 %v2191
    %v2221 = vunpack.c.l.b16 %v2192
    %v2222 = vunpack.c.l.b16 %v2193
    %v2223 = vunpack.c.l.b16 %v2194
    %v2224 = vunpack.c.l.b16 %v2195
    %v2225 = vpack.c.b16 %v2215, %v2214
    %v2226 = vpack.c.b16 %v2217, %v2216
    %v2227 = vpack.c.b16 %v2219, %v2218
    %v2228 = vpack.c.b16 %v2221, %v2220
    %v2229 = vpack.c.b16 %v2223, %v2222
    %v2230 = vpack.c.b16 %v2224, %v2224
    %vm2236 = vcmask 687104
    %v2238 = vsel %vm2236, %v2184, 0
    %vm2240 = vcmask 1041408
    %v2242 = vsel %vm2240, %v2230, 0
    %2244 = vmatprep.subr.bf16.mxu0 0
    %2245 = vmatpush1.bf16.msra.mxu0 %v2225
    %2246 = vmatprep.subr.bf16.mxu0 0
    %2247 = vmatpush1.bf16.msra.mxu0 %v2226
    %2248 = vmatprep.subr.bf16.mxu0 0
    %2249 = vmatpush1.bf16.msra.mxu0 %v2227
    %2250 = vmatprep.subr.bf16.mxu0 0
    %2251 = vmatpush1.bf16.msra.mxu0 %v2228
    %2252 = vmatprep.subr.bf16.mxu0 0
    %2253 = vmatpush1.bf16.msra.mxu0 %v2229
    %2254 = vmatprep.subr.bf16.mxu0 0
    %2255 = vmatpush1.bf16.msra.mxu0 %v2242
    %2256 = vmatprep.subr.bf16.mxu0 0
    %2257 = vmatpush1.bf16.msra.mxu0 0
    %2258 = vmatprep.subr.bf16.mxu0 0
    %2259 = vmatpush1.bf16.msra.mxu0 0
    %2260 = vmatprep.subr.bf16.mxu0 0
    %2261 = vmatpush1.bf16.msra.mxu0 0
    %2262 = vmatprep.subr.bf16.mxu0 0
    %2263 = vmatpush1.bf16.msra.mxu0 0
    %2264 = vmatprep.subr.bf16.mxu0 0
    %2265 = vmatpush1.bf16.msra.mxu0 0
    %2266 = vmatprep.subr.bf16.mxu0 0
    %2267 = vmatpush1.bf16.msra.mxu0 0
    %2268 = vmatprep.subr.bf16.mxu0 0
    %2269 = vmatpush1.bf16.msra.mxu0 0
    %2270 = vmatprep.subr.bf16.mxu0 0
    %2271 = vmatpush1.bf16.msra.mxu0 0
    %2272 = vmatprep.subr.bf16.mxu0 0
    %2273 = vmatpush1.bf16.msra.mxu0 0
    %2274 = vmatprep.subr.bf16.mxu0 0
    %2275 = vmatpush1.bf16.msra.mxu0 0
    %2276 = vmatprep.mubr.bf16.mxu0 0
    %2277 = vmatmul.mubr.bf16.gmra.mrb[0].mxu0 %v2238
    %v2278 = vpop.f32.mrb[0].mxu0
    %v2279 = vadd.f32 %v2201, %v2278
    %v2280 = vpop.f32.mrb[0].mxu0
    %v2281 = vpop.f32.mrb[0].mxu0
    %v2282 = vpop.f32.mrb[0].mxu0
    %2283 = vdwg.mxu0
    %vm2284 = vcmask 74752
    %2285 = vst.msk [vmem:[#allocation3] sm:$0x3] %vm2284, %v2279
    // Predicated region
    $region38: #{net_forward.3} parent=1 // pred_check
      _
    $region39: #{net_forward.3} parent=1 // pred_check_branch
      %2287 = sbr.rel (0) target = $region41
    $region40: #{net_forward.3} parent=1 // pred_region
      %s2289 = ssub.s32 32, 32
      %2290 = vsyncadd [#allocation4], %s2289
      %s2292 = sshll.u32 [#allocation3], 4
      %s2293 = int_to_ptr.vmem [resolvable:$true] %s2292
      %2295 = dma.vmem_to_hbm [thread:$0]  %s2293, 32, %s9, [#allocation4]
    $region41: #{net_forward.3} parent=1 // pred_fallthru
      _
    // Predicated region
    $region42: #{net_forward.3} parent=1 // pred_check
      _
    $region43: #{net_forward.3} parent=1 // pred_check_branch
      %2297 = sbr.rel (0) target = $region45
    $region44: #{net_forward.3} parent=1 // pred_region
      %2298 = dma.done [#allocation4], 32
    $region45: #{net_forward.3} parent=1 // pred_fallthru
      _
    %2299 = vsyncpa [#allocation4], 1

</llo_original>
